<compile_context>
chip_gen: v6e
topology: v6e:2x2x1
jax: 0.10.0
libtpu: 0.0.40
codegen_flags: <defaults>
</compile_context>

<pallas_src>
import math
import functools

import jax
import jax.numpy as jnp
from jax.experimental import pallas as pl
from jax.experimental.pallas import tpu as pltpu


_INV_SQRT2 = 1.0 / math.sqrt(2.0)


def _gelu_exact(x):
    # nn.GELU() default is the exact erf-based formulation.
    return 0.5 * x * (1.0 + jax.lax.erf(x * _INV_SQRT2))


def attention_block_kernel(
    s_ref, t_ref,
    wt_ref, bt_ref,
    wq_ref, bq_ref,
    wk_ref, bk_ref,
    wv_ref, bv_ref,
    wo_ref, bo_ref,
    out_ref,
    *, batch, seq, hidden, num_heads,
):
    H = hidden
    NH = num_heads
    depth = (2 * H) // NH
    BH = batch * NH
    scale = depth ** (-0.5)

    s = s_ref[...]                       # (B, S, H)
    t = t_ref[...]                       # (B, H)

    # ---- t_dense(t)[:, None, :] broadcast-added over the sequence axis ----
    t_emb = jnp.dot(t, wt_ref[...], preferred_element_type=jnp.float32) + bt_ref[...]
    y = s + t_emb[:, None, :]            # (B, S, H)

    # ---- head-batched q/k/v projections -----------------------------------
    # y replicated per head along a new leading (major) axis, then merged to a
    # single batch axis BH = B*NH (major-dim-only reshape, no relayout).
    # Weights arrive pre-laid-out as (BH, H, depth), so each projection is a
    # single batched dot_general (batch dim 0, contract last/middle dims) --
    # no per-head lane slices, no concatenate, no explicit transposes.
    y_bh = jnp.broadcast_to(y[:, None, :, :], (batch, NH, seq, H)).reshape(BH, seq, H)

    q = jnp.einsum('bsh,bhd->bsd', y_bh, wq_ref[...],
                   preferred_element_type=jnp.float32) + bq_ref[...]
    k = jnp.einsum('bsh,bhd->bsd', y_bh, wk_ref[...],
                   preferred_element_type=jnp.float32) + bk_ref[...]
    v = jnp.einsum('bsh,bhd->bsd', y_bh, wv_ref[...],
                   preferred_element_type=jnp.float32) + bv_ref[...]

    # scale folded into q (once, before the QK matmul)
    q = q * scale

    # ---- attention: batched dot_general, no kh.T ---------------------------
    scores = jnp.einsum('bqd,bkd->bqk', q, k,
                        preferred_element_type=jnp.float32)     # (BH, S, S)
    scores = scores - jnp.max(scores, axis=-1, keepdims=True)
    p = jnp.exp(scores)
    p = p * pl.reciprocal(jnp.sum(p, axis=-1, keepdims=True), approx=True)
    att = jnp.einsum('bqk,bkd->bqd', p, v,
                     preferred_element_type=jnp.float32)        # (BH, S, depth)

    # ---- output projection: per-head partials summed over the head axis ----
    # wo arrives as (BH, depth, 2H); summing head partials over a major axis
    # replaces the lane-dim head concatenate of the naive formulation.
    partial = jnp.einsum('bsd,bdo->bso', att, wo_ref[...],
                         preferred_element_type=jnp.float32)    # (BH, S, 2H)
    pr = partial.reshape(batch, NH, seq, 2 * H)                 # major split only
    final = pr[:, 0]
    for n in range(1, NH):                                      # static unroll
        final = final + pr[:, n]
    final = final + bo_ref[...]                                 # (B, S, 2H)

    # ---- single GELU over the fused tensor; fused (B, S, 2H) output --------
    g = _gelu_exact(final)
    res = (s + g[:, :, :H]) * _INV_SQRT2
    out_ref[...] = jnp.concatenate([res, g[:, :, H:]], axis=-1)


def attention_block(s, t, params, *, num_heads):
    B, S, H = s.shape
    assert t.shape == (B, H)
    assert (2 * H) % num_heads == 0
    NH = num_heads
    depth = (2 * H) // NH
    BH = B * NH
    dt = jnp.float32

    # ---- pure layout plumbing: head-major weights, batched over B*NH -------
    def per_head_w(w):        # (H, 2H) -> (BH, H, depth)
        wh = w.reshape(H, NH, depth).transpose(1, 0, 2)
        return jnp.broadcast_to(wh[None], (B, NH, H, depth)).reshape(BH, H, depth)

    def per_head_b(b):        # (2H,) -> (BH, 1, depth)
        bh = b.reshape(NH, 1, depth)
        return jnp.broadcast_to(bh[None], (B, NH, 1, depth)).reshape(BH, 1, depth)

    wt = params["wt"]
    bt = params["bt"].reshape(1, H)
    wq, bq = per_head_w(params["wq"]), per_head_b(params["bq"])
    wk, bk = per_head_w(params["wk"]), per_head_b(params["bk"])
    wv, bv = per_head_w(params["wv"]), per_head_b(params["bv"])
    wo_h = params["wo"].reshape(NH, depth, 2 * H)
    wo = jnp.broadcast_to(wo_h[None], (B, NH, depth, 2 * H)).reshape(BH, depth, 2 * H)
    bo = params["bo"].reshape(1, 2 * H)

    kernel = functools.partial(
        attention_block_kernel, batch=B, seq=S, hidden=H, num_heads=NH,
    )

    def full_spec(a):
        n = a.ndim
        return pl.BlockSpec(a.shape, lambda i, n=n: (0,) * n)

    fused = pl.pallas_call(
        kernel,
        out_shape=jax.ShapeDtypeStruct((B, S, 2 * H), dt),
        grid=(1,),
        in_specs=[
            full_spec(s), full_spec(t),
            full_spec(wt), full_spec(bt),
            full_spec(wq), full_spec(bq),
            full_spec(wk), full_spec(bk),
            full_spec(wv), full_spec(bv),
            full_spec(wo), full_spec(bo),
        ],
        out_specs=pl.BlockSpec((B, S, 2 * H), lambda i: (0, 0, 0)),
        compiler_params=pltpu.CompilerParams(
            dimension_semantics=("arbitrary",),
        ),
    )(s, t, wt, bt, wq, bq, wk, bk, wv, bv, wo, bo)

    # Split the fused output (pure slicing in the wrapper).
    return fused[..., :H], fused[..., H:]


def attention_block_ref(s, t, params, *, num_heads):
    """Pure-JAX reference matching the PyTorch semantics exactly."""
    B, S, H = s.shape
    depth = (2 * H) // num_heads
    scale = depth ** (-0.5)

    t_emb = t @ params["wt"] + params["bt"]
    y = s + t_emb[:, None, :]

    q = y @ params["wq"] + params["bq"]
    k = y @ params["wk"] + params["bk"]
    v = y @ params["wv"] + params["bv"]

    def split_heads(x):
        return x.reshape(B, S, num_heads, depth).transpose(0, 2, 1, 3)

    qh, kh, vh = split_heads(q), split_heads(k), split_heads(v)
    scores = jnp.einsum("bhqd,bhkd->bhqk", qh, kh) * scale
    attn = jax.nn.softmax(scores, axis=-1)
    out = jnp.einsum("bhqk,bhkd->bhqd", attn, vh)
    out = out.transpose(0, 2, 1, 3).reshape(B, S, num_heads * depth)
    final = out @ params["wo"] + params["bo"]

    residual, skip = jnp.split(final, 2, axis=-1)
    residual = jax.nn.gelu(residual, approximate=False)
    skip = jax.nn.gelu(skip, approximate=False)
    return (s + residual) / math.sqrt(2.0), skip


def make_params(key, hidden_dim):
    H = hidden_dim
    ks = jax.random.split(key, 10)
    scl = 0.05
    return {
        "wt": scl * jax.random.normal(ks[0], (H, H), jnp.float32),
        "bt": scl * jax.random.normal(ks[1], (H,), jnp.float32),
        "wq": scl * jax.random.normal(ks[2], (H, 2 * H), jnp.float32),
        "bq": scl * jax.random.normal(ks[3], (2 * H,), jnp.float32),
        "wk": scl * jax.random.normal(ks[4], (H, 2 * H), jnp.float32),
        "bk": scl * jax.random.normal(ks[5], (2 * H,), jnp.float32),
        "wv": scl * jax.random.normal(ks[6], (H, 2 * H), jnp.float32),
        "bv": scl * jax.random.normal(ks[7], (2 * H,), jnp.float32),
        "wo": scl * jax.random.normal(ks[8], (2 * H, 2 * H), jnp.float32),
        "bo": scl * jax.random.normal(ks[9], (2 * H,), jnp.float32),
    }


if __name__ == "__main__":
    B, S, H = 2, 8, 32
    NUM_HEADS = 4

    key = jax.random.PRNGKey(0)
    ks, kt, kp = jax.random.split(key, 3)
    s = jax.random.normal(ks, (B, S, H), jnp.float32)
    t = jax.random.normal(kt, (B, H), jnp.float32)
    params = make_params(kp, H)

    out, skip = attention_block(s, t, params, num_heads=NUM_HEADS)
    out = jax.block_until_ready(out)
    skip = jax.block_until_ready(skip)

    out_ref, skip_ref = attention_block_ref(s, t, params, num_heads=NUM_HEADS)
    # Tolerance relaxed slightly (1e-3) because the softmax denominator uses
    # the EUP approximate reciprocal, per the performance review.
    assert jnp.allclose(out, out_ref, atol=1e-3, rtol=1e-3), "residual mismatch"
    assert jnp.allclose(skip, skip_ref, atol=1e-3, rtol=1e-3), "skip mismatch"

    print("KERNEL_OK")
</pallas_src>

<mosaic_0001>
module attributes {stable_mosaic.version = 11 : i64} {
  func.func @attention_block_kernel(%arg0: i32, %arg1: memref<2x8x32xf32, #tpu.memory_space<vmem>>, %arg2: memref<2x32xf32, #tpu.memory_space<vmem>>, %arg3: memref<32x32xf32, #tpu.memory_space<vmem>>, %arg4: memref<1x32xf32, #tpu.memory_space<vmem>>, %arg5: memref<8x32x16xf32, #tpu.memory_space<vmem>>, %arg6: memref<8x1x16xf32, #tpu.memory_space<vmem>>, %arg7: memref<8x32x16xf32, #tpu.memory_space<vmem>>, %arg8: memref<8x1x16xf32, #tpu.memory_space<vmem>>, %arg9: memref<8x32x16xf32, #tpu.memory_space<vmem>>, %arg10: memref<8x1x16xf32, #tpu.memory_space<vmem>>, %arg11: memref<8x16x64xf32, #tpu.memory_space<vmem>>, %arg12: memref<1x64xf32, #tpu.memory_space<vmem>>, %arg13: memref<2x8x64xf32, #tpu.memory_space<vmem>>) attributes {dimension_semantics = [#tpu.dimension_semantics<arbitrary>], iteration_bounds = array<i64: 1>, scalar_prefetch = 0 : i64, scratch_operands = 0 : i64, tpu.core_type = #tpu.core_type<tc>, window_params = [{pipeline_mode = #tpu.pipeline_mode<synchronous>, transform_indices = @transform_0, window_bounds = array<i64: 2, 8, 32>}, {pipeline_mode = #tpu.pipeline_mode<synchronous>, transform_indices = @transform_1, window_bounds = array<i64: 2, 32>}, {pipeline_mode = #tpu.pipeline_mode<synchronous>, transform_indices = @transform_2, window_bounds = array<i64: 32, 32>}, {pipeline_mode = #tpu.pipeline_mode<synchronous>, transform_indices = @transform_3, window_bounds = array<i64: 1, 32>}, {pipeline_mode = #tpu.pipeline_mode<synchronous>, transform_indices = @transform_4, window_bounds = array<i64: 8, 32, 16>}, {pipeline_mode = #tpu.pipeline_mode<synchronous>, transform_indices = @transform_5, window_bounds = array<i64: 8, 1, 16>}, {pipeline_mode = #tpu.pipeline_mode<synchronous>, transform_indices = @transform_6, window_bounds = array<i64: 8, 32, 16>}, {pipeline_mode = #tpu.pipeline_mode<synchronous>, transform_indices = @transform_7, window_bounds = array<i64: 8, 1, 16>}, {pipeline_mode = #tpu.pipeline_mode<synchronous>, transform_indices = @transform_8, window_bounds = array<i64: 8, 32, 16>}, {pipeline_mode = #tpu.pipeline_mode<synchronous>, transform_indices = @transform_9, window_bounds = array<i64: 8, 1, 16>}, {pipeline_mode = #tpu.pipeline_mode<synchronous>, transform_indices = @transform_10, window_bounds = array<i64: 8, 16, 64>}, {pipeline_mode = #tpu.pipeline_mode<synchronous>, transform_indices = @transform_11, window_bounds = array<i64: 1, 64>}, {pipeline_mode = #tpu.pipeline_mode<synchronous>, transform_indices = @transform_12, window_bounds = array<i64: 2, 8, 64>}]} {
    %c0 = arith.constant 0 : index
    %c0_0 = arith.constant 0 : index
    %c0_1 = arith.constant 0 : index
    %0 = vector.load %arg1[%c0, %c0_0, %c0_1] : memref<2x8x32xf32, #tpu.memory_space<vmem>>, vector<2x8x32xf32>
    %c0_2 = arith.constant 0 : index
    %c0_3 = arith.constant 0 : index
    %1 = vector.load %arg2[%c0_2, %c0_3] : memref<2x32xf32, #tpu.memory_space<vmem>>, vector<2x32xf32>
    %c0_4 = arith.constant 0 : index
    %c0_5 = arith.constant 0 : index
    %2 = vector.load %arg3[%c0_4, %c0_5] : memref<32x32xf32, #tpu.memory_space<vmem>>, vector<32x32xf32>
    %cst = arith.constant dense<0.000000e+00> : vector<2x32xf32>
    %3 = tpu.matmul %1, %2, %cst {dimension_numbers = #tpu.dot_dimension_numbers<[1], [0], [0], [1], [0, 0, 1, 1], [], []>} : vector<2x32xf32>, vector<32x32xf32>, vector<2x32xf32> -> vector<2x32xf32>
    %c0_6 = arith.constant 0 : index
    %c0_7 = arith.constant 0 : index
    %4 = vector.load %arg4[%c0_6, %c0_7] : memref<1x32xf32, #tpu.memory_space<vmem>>, vector<1x32xf32>
    %5 = vector.broadcast %4 : vector<1x32xf32> to vector<2x32xf32>
    %6 = arith.addf %3, %5 : vector<2x32xf32>
    %7 = vector.shape_cast %6 : vector<2x32xf32> to vector<2x1x32xf32>
    %8 = vector.broadcast %7 : vector<2x1x32xf32> to vector<2x8x32xf32>
    %9 = arith.addf %0, %8 : vector<2x8x32xf32>
    %10 = vector.shape_cast %9 : vector<2x8x32xf32> to vector<2x1x8x32xf32>
    %11 = vector.shape_cast %10 : vector<2x1x8x32xf32> to vector<2x1x8x32xf32>
    %12 = vector.broadcast %11 : vector<2x1x8x32xf32> to vector<2x4x8x32xf32>
    %13 = vector.shape_cast %12 : vector<2x4x8x32xf32> to vector<8x8x32xf32>
    %c0_8 = arith.constant 0 : index
    %c0_9 = arith.constant 0 : index
    %c0_10 = arith.constant 0 : index
    %14 = vector.load %arg5[%c0_8, %c0_9, %c0_10] : memref<8x32x16xf32, #tpu.memory_space<vmem>>, vector<8x32x16xf32>
    "tpu.trace_start"() <{level = 10 : i32, message = "bsh,bhd->bsd"}> : () -> ()
    %cst_11 = arith.constant dense<0.000000e+00> : vector<8x8x16xf32>
    %15 = tpu.matmul %13, %14, %cst_11 {dimension_numbers = #tpu.dot_dimension_numbers<[2], [1], [1], [2], [0, 0, 0, 1, 1, 2], [0], [0]>} : vector<8x8x32xf32>, vector<8x32x16xf32>, vector<8x8x16xf32> -> vector<8x8x16xf32>
    "tpu.trace_stop"() : () -> ()
    %c0_12 = arith.constant 0 : index
    %c0_13 = arith.constant 0 : index
    %c0_14 = arith.constant 0 : index
    %16 = vector.load %arg6[%c0_12, %c0_13, %c0_14] : memref<8x1x16xf32, #tpu.memory_space<vmem>>, vector<8x1x16xf32>
    %17 = vector.broadcast %16 : vector<8x1x16xf32> to vector<8x8x16xf32>
    %18 = arith.addf %15, %17 : vector<8x8x16xf32>
    %c0_15 = arith.constant 0 : index
    %c0_16 = arith.constant 0 : index
    %c0_17 = arith.constant 0 : index
    %19 = vector.load %arg7[%c0_15, %c0_16, %c0_17] : memref<8x32x16xf32, #tpu.memory_space<vmem>>, vector<8x32x16xf32>
    "tpu.trace_start"() <{level = 10 : i32, message = "bsh,bhd->bsd"}> : () -> ()
    %cst_18 = arith.constant dense<0.000000e+00> : vector<8x8x16xf32>
    %20 = tpu.matmul %13, %19, %cst_18 {dimension_numbers = #tpu.dot_dimension_numbers<[2], [1], [1], [2], [0, 0, 0, 1, 1, 2], [0], [0]>} : vector<8x8x32xf32>, vector<8x32x16xf32>, vector<8x8x16xf32> -> vector<8x8x16xf32>
    "tpu.trace_stop"() : () -> ()
    %c0_19 = arith.constant 0 : index
    %c0_20 = arith.constant 0 : index
    %c0_21 = arith.constant 0 : index
    %21 = vector.load %arg8[%c0_19, %c0_20, %c0_21] : memref<8x1x16xf32, #tpu.memory_space<vmem>>, vector<8x1x16xf32>
    %22 = vector.broadcast %21 : vector<8x1x16xf32> to vector<8x8x16xf32>
    %23 = arith.addf %20, %22 : vector<8x8x16xf32>
    %c0_22 = arith.constant 0 : index
    %c0_23 = arith.constant 0 : index
    %c0_24 = arith.constant 0 : index
    %24 = vector.load %arg9[%c0_22, %c0_23, %c0_24] : memref<8x32x16xf32, #tpu.memory_space<vmem>>, vector<8x32x16xf32>
    "tpu.trace_start"() <{level = 10 : i32, message = "bsh,bhd->bsd"}> : () -> ()
    %cst_25 = arith.constant dense<0.000000e+00> : vector<8x8x16xf32>
    %25 = tpu.matmul %13, %24, %cst_25 {dimension_numbers = #tpu.dot_dimension_numbers<[2], [1], [1], [2], [0, 0, 0, 1, 1, 2], [0], [0]>} : vector<8x8x32xf32>, vector<8x32x16xf32>, vector<8x8x16xf32> -> vector<8x8x16xf32>
    "tpu.trace_stop"() : () -> ()
    %c0_26 = arith.constant 0 : index
    %c0_27 = arith.constant 0 : index
    %c0_28 = arith.constant 0 : index
    %26 = vector.load %arg10[%c0_26, %c0_27, %c0_28] : memref<8x1x16xf32, #tpu.memory_space<vmem>>, vector<8x1x16xf32>
    %27 = vector.broadcast %26 : vector<8x1x16xf32> to vector<8x8x16xf32>
    %28 = arith.addf %25, %27 : vector<8x8x16xf32>
    %cst_29 = arith.constant 2.500000e-01 : f32
    %29 = vector.broadcast %cst_29 : f32 to vector<8x8x16xf32>
    %30 = arith.mulf %18, %29 : vector<8x8x16xf32>
    "tpu.trace_start"() <{level = 10 : i32, message = "bqd,bkd->bqk"}> : () -> ()
    %cst_30 = arith.constant dense<0.000000e+00> : vector<8x8x8xf32>
    %31 = tpu.matmul %30, %23, %cst_30 {dimension_numbers = #tpu.dot_dimension_numbers<[2], [2], [1], [1], [0, 0, 0, 1, 1, 1], [0], [0]>} : vector<8x8x16xf32>, vector<8x8x16xf32>, vector<8x8x8xf32> -> vector<8x8x8xf32>
    "tpu.trace_stop"() : () -> ()
    %cst_31 = arith.constant dense<0xFF800000> : vector<8x8xf32>
    %32 = vector.multi_reduction <maximumf>, %31, %cst_31 [2] : vector<8x8x8xf32> to vector<8x8xf32>
    %33 = vector.shape_cast %32 : vector<8x8xf32> to vector<8x8x1xf32>
    %34 = vector.broadcast %33 : vector<8x8x1xf32> to vector<8x8x8xf32>
    %35 = arith.subf %31, %34 : vector<8x8x8xf32>
    %36 = math.exp %35 : vector<8x8x8xf32>
    %cst_32 = arith.constant dense<0.000000e+00> : vector<8x8xf32>
    %37 = vector.multi_reduction <add>, %36, %cst_32 [2] : vector<8x8x8xf32> to vector<8x8xf32>
    %38 = vector.shape_cast %37 : vector<8x8xf32> to vector<8x8x1xf32>
    %39 = tpu.reciprocal %38 {approx = true} : vector<8x8x1xf32> -> vector<8x8x1xf32>
    %40 = vector.broadcast %39 : vector<8x8x1xf32> to vector<8x8x8xf32>
    %41 = arith.mulf %36, %40 : vector<8x8x8xf32>
    "tpu.trace_start"() <{level = 10 : i32, message = "bqk,bkd->bqd"}> : () -> ()
    %cst_33 = arith.constant dense<0.000000e+00> : vector<8x8x16xf32>
    %42 = tpu.matmul %41, %28, %cst_33 {dimension_numbers = #tpu.dot_dimension_numbers<[2], [1], [1], [2], [0, 0, 0, 1, 1, 2], [0], [0]>} : vector<8x8x8xf32>, vector<8x8x16xf32>, vector<8x8x16xf32> -> vector<8x8x16xf32>
    "tpu.trace_stop"() : () -> ()
    %c0_34 = arith.constant 0 : index
    %c0_35 = arith.constant 0 : index
    %c0_36 = arith.constant 0 : index
    %43 = vector.load %arg11[%c0_34, %c0_35, %c0_36] : memref<8x16x64xf32, #tpu.memory_space<vmem>>, vector<8x16x64xf32>
    "tpu.trace_start"() <{level = 10 : i32, message = "bsd,bdo->bso"}> : () -> ()
    %cst_37 = arith.constant dense<0.000000e+00> : vector<8x8x64xf32>
    %44 = tpu.matmul %42, %43, %cst_37 {dimension_numbers = #tpu.dot_dimension_numbers<[2], [1], [1], [2], [0, 0, 0, 1, 1, 2], [0], [0]>} : vector<8x8x16xf32>, vector<8x16x64xf32>, vector<8x8x64xf32> -> vector<8x8x64xf32>
    "tpu.trace_stop"() : () -> ()
    %45 = vector.shape_cast %44 : vector<8x8x64xf32> to vector<2x4x8x64xf32>
    %46 = vector.extract_strided_slice %45 {offsets = [0, 0, 0, 0], sizes = [2, 1, 8, 64], strides = [1, 1, 1, 1]} : vector<2x4x8x64xf32> to vector<2x1x8x64xf32>
    %47 = vector.shape_cast %46 : vector<2x1x8x64xf32> to vector<2x8x64xf32>
    %48 = vector.extract_strided_slice %45 {offsets = [0, 1, 0, 0], sizes = [2, 1, 8, 64], strides = [1, 1, 1, 1]} : vector<2x4x8x64xf32> to vector<2x1x8x64xf32>
    %49 = vector.shape_cast %48 : vector<2x1x8x64xf32> to vector<2x8x64xf32>
    %50 = arith.addf %47, %49 : vector<2x8x64xf32>
    %51 = vector.extract_strided_slice %45 {offsets = [0, 2, 0, 0], sizes = [2, 1, 8, 64], strides = [1, 1, 1, 1]} : vector<2x4x8x64xf32> to vector<2x1x8x64xf32>
    %52 = vector.shape_cast %51 : vector<2x1x8x64xf32> to vector<2x8x64xf32>
    %53 = arith.addf %50, %52 : vector<2x8x64xf32>
    %54 = vector.extract_strided_slice %45 {offsets = [0, 3, 0, 0], sizes = [2, 1, 8, 64], strides = [1, 1, 1, 1]} : vector<2x4x8x64xf32> to vector<2x1x8x64xf32>
    %55 = vector.shape_cast %54 : vector<2x1x8x64xf32> to vector<2x8x64xf32>
    %56 = arith.addf %53, %55 : vector<2x8x64xf32>
    %c0_38 = arith.constant 0 : index
    %c0_39 = arith.constant 0 : index
    %57 = vector.load %arg12[%c0_38, %c0_39] : memref<1x64xf32, #tpu.memory_space<vmem>>, vector<1x64xf32>
    %58 = vector.shape_cast %57 : vector<1x64xf32> to vector<1x1x64xf32>
    %59 = vector.broadcast %58 : vector<1x1x64xf32> to vector<2x8x64xf32>
    %60 = arith.addf %56, %59 : vector<2x8x64xf32>
    %cst_40 = arith.constant 5.000000e-01 : f32
    %61 = vector.broadcast %cst_40 : f32 to vector<2x8x64xf32>
    %62 = arith.mulf %61, %60 : vector<2x8x64xf32>
    %cst_41 = arith.constant 0.707106769 : f32
    %63 = vector.broadcast %cst_41 : f32 to vector<2x8x64xf32>
    %64 = arith.mulf %60, %63 : vector<2x8x64xf32>
    %65 = math.erf %64 : vector<2x8x64xf32>
    %cst_42 = arith.constant 1.000000e+00 : f32
    %66 = vector.broadcast %cst_42 : f32 to vector<2x8x64xf32>
    %67 = arith.addf %66, %65 : vector<2x8x64xf32>
    %68 = arith.mulf %62, %67 : vector<2x8x64xf32>
    %69 = vector.extract_strided_slice %68 {offsets = [0, 0, 0], sizes = [2, 8, 32], strides = [1, 1, 1]} : vector<2x8x64xf32> to vector<2x8x32xf32>
    %70 = arith.addf %0, %69 : vector<2x8x32xf32>
    %cst_43 = arith.constant 0.707106769 : f32
    %71 = vector.broadcast %cst_43 : f32 to vector<2x8x32xf32>
    %72 = arith.mulf %70, %71 : vector<2x8x32xf32>
    %73 = vector.extract_strided_slice %68 {offsets = [0, 0, 32], sizes = [2, 8, 32], strides = [1, 1, 1]} : vector<2x8x64xf32> to vector<2x8x32xf32>
    %74 = tpu.concatenate %72, %73 in 2 : vector<2x8x32xf32>, vector<2x8x32xf32> -> vector<2x8x64xf32>
    %c0_44 = arith.constant 0 : index
    %c0_45 = arith.constant 0 : index
    %c0_46 = arith.constant 0 : index
    %75 = vector.load %arg13[%c0_44, %c0_45, %c0_46] : memref<2x8x64xf32, #tpu.memory_space<vmem>>, vector<2x8x64xf32>
    tpu.vector_store %arg13[%c0_44, %c0_45, %c0_46], %74 {strides = array<i32>} : memref<2x8x64xf32, #tpu.memory_space<vmem>>, vector<2x8x64xf32>,
    return
  }
  func.func @transform_0(%arg0: i32) -> (i32, i32, i32) {
    %c0_i32 = arith.constant 0 : i32
    %c0_i32_0 = arith.constant 0 : i32
    %c0_i32_1 = arith.constant 0 : i32
    %c0_i32_2 = arith.constant 0 : i32
    return %c0_i32, %c0_i32_0, %c0_i32_1 : i32, i32, i32
  }
  func.func @transform_1(%arg0: i32) -> (i32, i32) {
    %c0_i32 = arith.constant 0 : i32
    %c0_i32_0 = arith.constant 0 : i32
    %c0_i32_1 = arith.constant 0 : i32
    return %c0_i32, %c0_i32_0 : i32, i32
  }
  func.func @transform_2(%arg0: i32) -> (i32, i32) {
    %c0_i32 = arith.constant 0 : i32
    %c0_i32_0 = arith.constant 0 : i32
    %c0_i32_1 = arith.constant 0 : i32
    return %c0_i32, %c0_i32_0 : i32, i32
  }
  func.func @transform_3(%arg0: i32) -> (i32, i32) {
    %c0_i32 = arith.constant 0 : i32
    %c0_i32_0 = arith.constant 0 : i32
    %c0_i32_1 = arith.constant 0 : i32
    return %c0_i32, %c0_i32_0 : i32, i32
  }
  func.func @transform_4(%arg0: i32) -> (i32, i32, i32) {
    %c0_i32 = arith.constant 0 : i32
    %c0_i32_0 = arith.constant 0 : i32
    %c0_i32_1 = arith.constant 0 : i32
    %c0_i32_2 = arith.constant 0 : i32
    return %c0_i32, %c0_i32_0, %c0_i32_1 : i32, i32, i32
  }
  func.func @transform_5(%arg0: i32) -> (i32, i32, i32) {
    %c0_i32 = arith.constant 0 : i32
    %c0_i32_0 = arith.constant 0 : i32
    %c0_i32_1 = arith.constant 0 : i32
    %c0_i32_2 = arith.constant 0 : i32
    return %c0_i32, %c0_i32_0, %c0_i32_1 : i32, i32, i32
  }
  func.func @transform_6(%arg0: i32) -> (i32, i32, i32) {
    %c0_i32 = arith.constant 0 : i32
    %c0_i32_0 = arith.constant 0 : i32
    %c0_i32_1 = arith.constant 0 : i32
    %c0_i32_2 = arith.constant 0 : i32
    return %c0_i32, %c0_i32_0, %c0_i32_1 : i32, i32, i32
  }
  func.func @transform_7(%arg0: i32) -> (i32, i32, i32) {
    %c0_i32 = arith.constant 0 : i32
    %c0_i32_0 = arith.constant 0 : i32
    %c0_i32_1 = arith.constant 0 : i32
    %c0_i32_2 = arith.constant 0 : i32
    return %c0_i32, %c0_i32_0, %c0_i32_1 : i32, i32, i32
  }
  func.func @transform_8(%arg0: i32) -> (i32, i32, i32) {
    %c0_i32 = arith.constant 0 : i32
    %c0_i32_0 = arith.constant 0 : i32
    %c0_i32_1 = arith.constant 0 : i32
    %c0_i32_2 = arith.constant 0 : i32
    return %c0_i32, %c0_i32_0, %c0_i32_1 : i32, i32, i32
  }
  func.func @transform_9(%arg0: i32) -> (i32, i32, i32) {
    %c0_i32 = arith.constant 0 : i32
    %c0_i32_0 = arith.constant 0 : i32
    %c0_i32_1 = arith.constant 0 : i32
    %c0_i32_2 = arith.constant 0 : i32
    return %c0_i32, %c0_i32_0, %c0_i32_1 : i32, i32, i32
  }
  func.func @transform_10(%arg0: i32) -> (i32, i32, i32) {
    %c0_i32 = arith.constant 0 : i32
    %c0_i32_0 = arith.constant 0 : i32
    %c0_i32_1 = arith.constant 0 : i32
    %c0_i32_2 = arith.constant 0 : i32
    return %c0_i32, %c0_i32_0, %c0_i32_1 : i32, i32, i32
  }
  func.func @transform_11(%arg0: i32) -> (i32, i32) {
    %c0_i32 = arith.constant 0 : i32
    %c0_i32_0 = arith.constant 0 : i32
    %c0_i32_1 = arith.constant 0 : i32
    return %c0_i32, %c0_i32_0 : i32, i32
  }
  func.func @transform_12(%arg0: i32) -> (i32, i32, i32) {
    %c0_i32 = arith.constant 0 : i32
    %c0_i32_0 = arith.constant 0 : i32
    %c0_i32_1 = arith.constant 0 : i32
    %c0_i32_2 = arith.constant 0 : i32
    return %c0_i32, %c0_i32_0, %c0_i32_1 : i32, i32, i32
  }
}

</mosaic_0001>

<llo_original>
// kernel: tpu_custom_call.1
$region0: #{tpu_custom_call.1}
  #allocation0 [shape = 'u32[]', space=smem, size = 0x4, offset = 0x4, fixed_abs, tag = 'smem constant byte address 0x4 - core index']
  #allocation1 [shape = 'u32[144,128]{1,0:T(1,128)}', space=vmem, size = 0x12000, scoped, tag = 'internal scratch']
  %s0 = inlined_call_operand.vmem [shape: f32[2,8,32], index: 0, kind: input, shape index: {}]
  %s1 = inlined_call_operand.vmem [shape: f32[2,32], index: 1, kind: input, shape index: {}]
  %s2 = inlined_call_operand.vmem [shape: f32[32,32], index: 2, kind: input, shape index: {}]
  %s3 = inlined_call_operand.vmem [shape: f32[1,32], index: 3, kind: input, shape index: {}]
  %s4 = inlined_call_operand.vmem [shape: f32[8,32,16], index: 4, kind: input, shape index: {}]
  %s5 = inlined_call_operand.vmem [shape: f32[8,1,16], index: 5, kind: input, shape index: {}]
  %s6 = inlined_call_operand.vmem [shape: f32[8,32,16], index: 6, kind: input, shape index: {}]
  %s7 = inlined_call_operand.vmem [shape: f32[8,1,16], index: 7, kind: input, shape index: {}]
  %s8 = inlined_call_operand.vmem [shape: f32[8,32,16], index: 8, kind: input, shape index: {}]
  %s9 = inlined_call_operand.vmem [shape: f32[8,1,16], index: 9, kind: input, shape index: {}]
  %s10 = inlined_call_operand.vmem [shape: f32[8,16,64], index: 10, kind: input, shape index: {}]
  %s11 = inlined_call_operand.vmem [shape: f32[1,64], index: 11, kind: input, shape index: {}]
  %s12 = inlined_call_operand.hbm [shape: f32[2,8,64], index: 12, kind: output, shape index: {}]
  %s13 = sld [smem:[#allocation0]]
  $region58: #{tpu_custom_call.1} parent=0
    _
  %s15 = ssub.s32 1, %s13
  %s16 = scalar_select 0, %s15, %s13
  $region1: #{tpu_custom_call.1} parent=0
    #allocation2 [shape = 'u8[8192]{0}', space=vmem, size = 0x2000, scoped, tag = 'output window, operand 0, single buffered']
    #allocation3 [shape = 's32[1]{0}', space=sflag, size = 0x4, scoped, tag = 'scoped memory for tpu_custom_call.1']
    %17 = vsyncpa [#allocation3], 0
    // Predicated region
    $region2: #{tpu_custom_call.1} parent=1 // pred_check
      _
    $region3: #{tpu_custom_call.1} parent=1 // pred_check_branch
      %19 = sbr.rel (0) target = $region5
    $region4: #{tpu_custom_call.1} parent=1 // pred_region
      _
    $region5: #{tpu_custom_call.1} parent=1 // pred_fallthru
      _
    // Predicated region
    $region6: #{tpu_custom_call.1} parent=1 // pred_check
      _
    $region7: #{tpu_custom_call.1} parent=1 // pred_check_branch
      %21 = sbr.rel (0) target = $region9
    $region8: #{tpu_custom_call.1} parent=1 // pred_region
      _
    $region9: #{tpu_custom_call.1} parent=1 // pred_fallthru
      _
    // Predicated region
    $region10: #{tpu_custom_call.1} parent=1 // pred_check
      _
    $region11: #{tpu_custom_call.1} parent=1 // pred_check_branch
      %23 = sbr.rel (0) target = $region13
    $region12: #{tpu_custom_call.1} parent=1 // pred_region
      _
    $region13: #{tpu_custom_call.1} parent=1 // pred_fallthru
      _
    // Predicated region
    $region14: #{tpu_custom_call.1} parent=1 // pred_check
      _
    $region15: #{tpu_custom_call.1} parent=1 // pred_check_branch
      %25 = sbr.rel (0) target = $region17
    $region16: #{tpu_custom_call.1} parent=1 // pred_region
      _
    $region17: #{tpu_custom_call.1} parent=1 // pred_fallthru
      _
    // Predicated region
    $region18: #{tpu_custom_call.1} parent=1 // pred_check
      _
    $region19: #{tpu_custom_call.1} parent=1 // pred_check_branch
      %27 = sbr.rel (0) target = $region21
    $region20: #{tpu_custom_call.1} parent=1 // pred_region
      _
    $region21: #{tpu_custom_call.1} parent=1 // pred_fallthru
      _
    // Predicated region
    $region22: #{tpu_custom_call.1} parent=1 // pred_check
      _
    $region23: #{tpu_custom_call.1} parent=1 // pred_check_branch
      %29 = sbr.rel (0) target = $region25
    $region24: #{tpu_custom_call.1} parent=1 // pred_region
      _
    $region25: #{tpu_custom_call.1} parent=1 // pred_fallthru
      _
    // Predicated region
    $region26: #{tpu_custom_call.1} parent=1 // pred_check
      _
    $region27: #{tpu_custom_call.1} parent=1 // pred_check_branch
      %31 = sbr.rel (0) target = $region29
    $region28: #{tpu_custom_call.1} parent=1 // pred_region
      _
    $region29: #{tpu_custom_call.1} parent=1 // pred_fallthru
      _
    // Predicated region
    $region30: #{tpu_custom_call.1} parent=1 // pred_check
      _
    $region31: #{tpu_custom_call.1} parent=1 // pred_check_branch
      %33 = sbr.rel (0) target = $region33
    $region32: #{tpu_custom_call.1} parent=1 // pred_region
      _
    $region33: #{tpu_custom_call.1} parent=1 // pred_fallthru
      _
    // Predicated region
    $region34: #{tpu_custom_call.1} parent=1 // pred_check
      _
    $region35: #{tpu_custom_call.1} parent=1 // pred_check_branch
      %35 = sbr.rel (0) target = $region37
    $region36: #{tpu_custom_call.1} parent=1 // pred_region
      _
    $region37: #{tpu_custom_call.1} parent=1 // pred_fallthru
      _
    // Predicated region
    $region38: #{tpu_custom_call.1} parent=1 // pred_check
      _
    $region39: #{tpu_custom_call.1} parent=1 // pred_check_branch
      %37 = sbr.rel (0) target = $region41
    $region40: #{tpu_custom_call.1} parent=1 // pred_region
      _
    $region41: #{tpu_custom_call.1} parent=1 // pred_fallthru
      _
    // Predicated region
    $region42: #{tpu_custom_call.1} parent=1 // pred_check
      _
    $region43: #{tpu_custom_call.1} parent=1 // pred_check_branch
      %39 = sbr.rel (0) target = $region45
    $region44: #{tpu_custom_call.1} parent=1 // pred_region
      _
    $region45: #{tpu_custom_call.1} parent=1 // pred_fallthru
      _
    // Predicated region
    $region46: #{tpu_custom_call.1} parent=1 // pred_check
      _
    $region47: #{tpu_custom_call.1} parent=1 // pred_check_branch
      %41 = sbr.rel (0) target = $region49
    $region48: #{tpu_custom_call.1} parent=1 // pred_region
      _
    $region49: #{tpu_custom_call.1} parent=1 // pred_fallthru
      _
    %v42 = vld [vmem:[%s0] sm:$0xff]
    %v43 = vld [vmem:[%s0 + $0x8] sm:$0xff]
    %v44 = vld [vmem:[%s1] sm:$0x3]
    %v45 = vld [vmem:[%s2] sm:$0xff]
    %v46 = vld [vmem:[%s2 + $0x8] sm:$0xff]
    %v47 = vld [vmem:[%s2 + $0x10] sm:$0xff]
    %v48 = vld [vmem:[%s2 + $0x18] sm:$0xff]
    %v49 = vld [vmem:[%s3] sm:$0x1]
    %v51 = vlaneseq
    %v52 = vshrl.u32 %v51, 7
    %v53 = vsub.s32 0, %v52
    %v54 = vrot.slane %v49, %v53
    %vm56 = vcmask 261120
    %v58 = vsel %vm56, %v44, 0
    %60 = vmatprep.subr.mxu0 0.0
    %61 = vmatpush1.msra.mxu0 0.0
    %62 = vmatprep.subr.mxu0 0.0
    %63 = vmatpush1.msra.mxu0 0.0
    %64 = vmatprep.subr.mxu0 0.0
    %65 = vmatpush1.msra.mxu0 0.0
    %66 = vmatprep.subr.mxu0 0.0
    %67 = vmatpush1.msra.mxu0 0.0
    %68 = vmatprep.subr.mxu0 0.0
    %69 = vmatpush1.msra.mxu0 0.0
    %70 = vmatprep.subr.mxu0 0.0
    %71 = vmatpush1.msra.mxu0 0.0
    %72 = vmatprep.subr.mxu0 0.0
    %73 = vmatpush1.msra.mxu0 0.0
    %74 = vmatprep.subr.mxu0 0.0
    %75 = vmatpush1.msra.mxu0 0.0
    %76 = vmatprep.subr.mxu0 0.0
    %77 = vmatpush1.msra.mxu0 0.0
    %78 = vmatprep.subr.mxu0 0.0
    %79 = vmatpush1.msra.mxu0 0.0
    %80 = vmatprep.subr.mxu0 0.0
    %81 = vmatpush1.msra.mxu0 0.0
    %82 = vmatprep.subr.mxu0 0.0
    %83 = vmatpush1.msra.mxu0 0.0
    %84 = vmatprep.subr.mxu0 0.0
    %85 = vmatpush1.msra.mxu0 %v48
    %86 = vmatprep.subr.mxu0 0.0
    %87 = vmatpush1.msra.mxu0 %v47
    %88 = vmatprep.subr.mxu0 0.0
    %89 = vmatpush1.msra.mxu0 %v46
    %90 = vmatprep.subr.mxu0 0.0
    %91 = vmatpush1.msra.mxu0 %v45
    %92 = vmatprep.subr.mxu0 0.0
    %93 = vmatpush2.msra.mxu0 0.0
    %94 = vmatprep.subr.mxu0 0.0
    %95 = vmatpush2.msra.mxu0 0.0
    %96 = vmatprep.subr.mxu0 0.0
    %97 = vmatpush2.msra.mxu0 0.0
    %98 = vmatprep.subr.mxu0 0.0
    %99 = vmatpush2.msra.mxu0 0.0
    %100 = vmatprep.subr.mxu0 0.0
    %101 = vmatpush2.msra.mxu0 0.0
    %102 = vmatprep.subr.mxu0 0.0
    %103 = vmatpush2.msra.mxu0 0.0
    %104 = vmatprep.subr.mxu0 0.0
    %105 = vmatpush2.msra.mxu0 0.0
    %106 = vmatprep.subr.mxu0 0.0
    %107 = vmatpush2.msra.mxu0 0.0
    %108 = vmatprep.subr.mxu0 0.0
    %109 = vmatpush2.msra.mxu0 0.0
    %110 = vmatprep.subr.mxu0 0.0
    %111 = vmatpush2.msra.mxu0 0.0
    %112 = vmatprep.subr.mxu0 0.0
    %113 = vmatpush2.msra.mxu0 0.0
    %114 = vmatprep.subr.mxu0 0.0
    %115 = vmatpush2.msra.mxu0 0.0
    %116 = vmatprep.subr.mxu0 0.0
    %117 = vmatpush2.msra.mxu0 0.0
    %118 = vmatprep.subr.mxu0 0.0
    %119 = vmatpush2.msra.mxu0 0.0
    %120 = vmatprep.subr.mxu0 0.0
    %121 = vmatpush2.msra.mxu0 0.0
    %122 = vmatprep.subr.mxu0 0.0
    %123 = vmatpush2.msra.mxu0 0.0
    %124 = vmatprep.mubr.f32.mxu0 0.0
    %125 = vmatmul.mubr.f32.gmra.mxu0 %v58
    %v126 = vpop.f32.mrf.mxu0
    %v127 = vadd.f32 %v54, %v126
    %v128 = vpop.f32.mrf.mxu0
    %129 = vdwg.mxu0
    %v132 = vunpack.c.l.s4 1966171168
    %v133 = vunpack.c.0.s8 %v132
    %v134 = vlaneseq
    %v135 = vshrl.u32 %v134, 7
    %v136 = vsub.s32 %v133, %v135
    %v137 = vrot.slane %v127, %v136
    %v138 = vcombine.high %v137, %v137
    %v140 = vunpack.c.l.s4 1966171168
    %v141 = vunpack.c.0.s8 %v140
    %v142 = vlaneseq
    %v143 = vshrl.u32 %v142, 7
    %v144 = vsub.s32 %v141, %v143
    %v145 = vrot.slane %v137, %v144
    %v147 = vunpack.c.l.s4 1966171168
    %v148 = vunpack.c.0.s8 %v147
    %v149 = vlaneseq
    %v150 = vshrl.u32 %v149, 7
    %v151 = vsub.s32 %v148, %v150
    %v152 = vrot.slane %v138, %v151
    %v153 = vlaneseq
    %v154 = vshrl.u32 %v153, 7
    %v155 = vsub.s32 0, %v154
    %v156 = vrot.slane %v145, %v155
    %v157 = vlaneseq
    %v158 = vshrl.u32 %v157, 7
    %v159 = vsub.s32 0, %v158
    %v160 = vrot.slane %v152, %v159
    %v163 = vadd.f32 %v42, %v156
    %v164 = vadd.f32 %v43, %v160
    %v165 = vld [vmem:[%s4] sm:$0xff]
    %v166 = vld [vmem:[%s4 + $0x8] sm:$0xff]
    %v167 = vld [vmem:[%s4 + $0x10] sm:$0xff]
    %v168 = vld [vmem:[%s4 + $0x18] sm:$0xff]
    %v169 = vld [vmem:[%s4 + $0x20] sm:$0xff]
    %v170 = vld [vmem:[%s4 + $0x28] sm:$0xff]
    %v171 = vld [vmem:[%s4 + $0x30] sm:$0xff]
    %v172 = vld [vmem:[%s4 + $0x38] sm:$0xff]
    %v173 = vld [vmem:[%s4 + $0x40] sm:$0xff]
    %v174 = vld [vmem:[%s4 + $0x48] sm:$0xff]
    %v175 = vld [vmem:[%s4 + $0x50] sm:$0xff]
    %v176 = vld [vmem:[%s4 + $0x58] sm:$0xff]
    %v177 = vld [vmem:[%s4 + $0x60] sm:$0xff]
    %v178 = vld [vmem:[%s4 + $0x68] sm:$0xff]
    %v179 = vld [vmem:[%s4 + $0x70] sm:$0xff]
    %v180 = vld [vmem:[%s4 + $0x78] sm:$0xff]
    %v181 = vld [vmem:[%s4 + $0x80] sm:$0xff]
    %v182 = vld [vmem:[%s4 + $0x88] sm:$0xff]
    %v183 = vld [vmem:[%s4 + $0x90] sm:$0xff]
    %v184 = vld [vmem:[%s4 + $0x98] sm:$0xff]
    %v185 = vld [vmem:[%s4 + $0xa0] sm:$0xff]
    %v186 = vld [vmem:[%s4 + $0xa8] sm:$0xff]
    %v187 = vld [vmem:[%s4 + $0xb0] sm:$0xff]
    %v188 = vld [vmem:[%s4 + $0xb8] sm:$0xff]
    %v189 = vld [vmem:[%s4 + $0xc0] sm:$0xff]
    %v190 = vld [vmem:[%s4 + $0xc8] sm:$0xff]
    %v191 = vld [vmem:[%s4 + $0xd0] sm:$0xff]
    %v192 = vld [vmem:[%s4 + $0xd8] sm:$0xff]
    %v193 = vld [vmem:[%s4 + $0xe0] sm:$0xff]
    %v194 = vld [vmem:[%s4 + $0xe8] sm:$0xff]
    %v195 = vld [vmem:[%s4 + $0xf0] sm:$0xff]
    %v196 = vld [vmem:[%s4 + $0xf8] sm:$0xff]
    %v197 = vld [vmem:[%s5] sm:$0x1]
    %v198 = vld [vmem:[%s5 + $0x1] sm:$0x1]
    %v199 = vld [vmem:[%s5 + $0x2] sm:$0x1]
    %v200 = vld [vmem:[%s5 + $0x3] sm:$0x1]
    %v201 = vld [vmem:[%s5 + $0x4] sm:$0x1]
    %v202 = vld [vmem:[%s5 + $0x5] sm:$0x1]
    %v203 = vld [vmem:[%s5 + $0x6] sm:$0x1]
    %v204 = vld [vmem:[%s5 + $0x7] sm:$0x1]
    %v213 = vlaneseq
    %v214 = vshrl.u32 %v213, 7
    %v215 = vsub.s32 0, %v214
    %v216 = vrot.slane %v197, %v215
    %v217 = vlaneseq
    %v218 = vshrl.u32 %v217, 7
    %v219 = vsub.s32 0, %v218
    %v220 = vrot.slane %v198, %v219
    %v221 = vlaneseq
    %v222 = vshrl.u32 %v221, 7
    %v223 = vsub.s32 0, %v222
    %v224 = vrot.slane %v199, %v223
    %v225 = vlaneseq
    %v226 = vshrl.u32 %v225, 7
    %v227 = vsub.s32 0, %v226
    %v228 = vrot.slane %v200, %v227
    %v229 = vlaneseq
    %v230 = vshrl.u32 %v229, 7
    %v231 = vsub.s32 0, %v230
    %v232 = vrot.slane %v201, %v231
    %v233 = vlaneseq
    %v234 = vshrl.u32 %v233, 7
    %v235 = vsub.s32 0, %v234
    %v236 = vrot.slane %v202, %v235
    %v237 = vlaneseq
    %v238 = vshrl.u32 %v237, 7
    %v239 = vsub.s32 0, %v238
    %v240 = vrot.slane %v203, %v239
    %v241 = vlaneseq
    %v242 = vshrl.u32 %v241, 7
    %v243 = vsub.s32 0, %v242
    %v244 = vrot.slane %v204, %v243
    %v254 = vsel %vm56, %v163, 0
    %256 = vmatprep.subr.mxu0 0.0
    %257 = vmatpush1.msra.mxu0 0.0
    %258 = vmatprep.subr.mxu0 0.0
    %259 = vmatpush1.msra.mxu0 0.0
    %260 = vmatprep.subr.mxu0 0.0
    %261 = vmatpush1.msra.mxu0 0.0
    %262 = vmatprep.subr.mxu0 0.0
    %263 = vmatpush1.msra.mxu0 0.0
    %264 = vmatprep.subr.mxu0 0.0
    %265 = vmatpush1.msra.mxu0 0.0
    %266 = vmatprep.subr.mxu0 0.0
    %267 = vmatpush1.msra.mxu0 0.0
    %268 = vmatprep.subr.mxu0 0.0
    %269 = vmatpush1.msra.mxu0 0.0
    %270 = vmatprep.subr.mxu0 0.0
    %271 = vmatpush1.msra.mxu0 0.0
    %272 = vmatprep.subr.mxu0 0.0
    %273 = vmatpush1.msra.mxu0 0.0
    %274 = vmatprep.subr.mxu0 0.0
    %275 = vmatpush1.msra.mxu0 0.0
    %276 = vmatprep.subr.mxu0 0.0
    %277 = vmatpush1.msra.mxu0 0.0
    %278 = vmatprep.subr.mxu0 0.0
    %279 = vmatpush1.msra.mxu0 0.0
    %280 = vmatprep.subr.mxu0 0.0
    %281 = vmatpush1.msra.mxu0 %v168
    %282 = vmatprep.subr.mxu0 0.0
    %283 = vmatpush1.msra.mxu0 %v167
    %284 = vmatprep.subr.mxu0 0.0
    %285 = vmatpush1.msra.mxu0 %v166
    %286 = vmatprep.subr.mxu0 0.0
    %287 = vmatpush1.msra.mxu0 %v165
    %288 = vmatprep.subr.mxu0 0.0
    %289 = vmatpush2.msra.mxu0 0.0
    %290 = vmatprep.subr.mxu0 0.0
    %291 = vmatpush2.msra.mxu0 0.0
    %292 = vmatprep.subr.mxu0 0.0
    %293 = vmatpush2.msra.mxu0 0.0
    %294 = vmatprep.subr.mxu0 0.0
    %295 = vmatpush2.msra.mxu0 0.0
    %296 = vmatprep.subr.mxu0 0.0
    %297 = vmatpush2.msra.mxu0 0.0
    %298 = vmatprep.subr.mxu0 0.0
    %299 = vmatpush2.msra.mxu0 0.0
    %300 = vmatprep.subr.mxu0 0.0
    %301 = vmatpush2.msra.mxu0 0.0
    %302 = vmatprep.subr.mxu0 0.0
    %303 = vmatpush2.msra.mxu0 0.0
    %304 = vmatprep.subr.mxu0 0.0
    %305 = vmatpush2.msra.mxu0 0.0
    %306 = vmatprep.subr.mxu0 0.0
    %307 = vmatpush2.msra.mxu0 0.0
    %308 = vmatprep.subr.mxu0 0.0
    %309 = vmatpush2.msra.mxu0 0.0
    %310 = vmatprep.subr.mxu0 0.0
    %311 = vmatpush2.msra.mxu0 0.0
    %312 = vmatprep.subr.mxu0 0.0
    %313 = vmatpush2.msra.mxu0 0.0
    %314 = vmatprep.subr.mxu0 0.0
    %315 = vmatpush2.msra.mxu0 0.0
    %316 = vmatprep.subr.mxu0 0.0
    %317 = vmatpush2.msra.mxu0 0.0
    %318 = vmatprep.subr.mxu0 0.0
    %319 = vmatpush2.msra.mxu0 0.0
    %320 = vmatprep.mubr.f32.mxu0 0.0
    %321 = vmatmul.mubr.f32.gmra.mxu0 %v254
    %v322 = vpop.f32.mrf.mxu0
    %v323 = vadd.f32 %v216, %v322
    %v324 = vpop.f32.mrf.mxu0
    %325 = vdwg.mxu0
    %326 = vmatprep.subr.mxu0 0.0
    %327 = vmatpush1.msra.mxu0 0.0
    %328 = vmatprep.subr.mxu0 0.0
    %329 = vmatpush1.msra.mxu0 0.0
    %330 = vmatprep.subr.mxu0 0.0
    %331 = vmatpush1.msra.mxu0 0.0
    %332 = vmatprep.subr.mxu0 0.0
    %333 = vmatpush1.msra.mxu0 0.0
    %334 = vmatprep.subr.mxu0 0.0
    %335 = vmatpush1.msra.mxu0 0.0
    %336 = vmatprep.subr.mxu0 0.0
    %337 = vmatpush1.msra.mxu0 0.0
    %338 = vmatprep.subr.mxu0 0.0
    %339 = vmatpush1.msra.mxu0 0.0
    %340 = vmatprep.subr.mxu0 0.0
    %341 = vmatpush1.msra.mxu0 0.0
    %342 = vmatprep.subr.mxu0 0.0
    %343 = vmatpush1.msra.mxu0 0.0
    %344 = vmatprep.subr.mxu0 0.0
    %345 = vmatpush1.msra.mxu0 0.0
    %346 = vmatprep.subr.mxu0 0.0
    %347 = vmatpush1.msra.mxu0 0.0
    %348 = vmatprep.subr.mxu0 0.0
    %349 = vmatpush1.msra.mxu0 0.0
    %350 = vmatprep.subr.mxu0 0.0
    %351 = vmatpush1.msra.mxu0 %v172
    %352 = vmatprep.subr.mxu0 0.0
    %353 = vmatpush1.msra.mxu0 %v171
    %354 = vmatprep.subr.mxu0 0.0
    %355 = vmatpush1.msra.mxu0 %v170
    %356 = vmatprep.subr.mxu0 0.0
    %357 = vmatpush1.msra.mxu0 %v169
    %358 = vmatprep.subr.mxu0 0.0
    %359 = vmatpush2.msra.mxu0 0.0
    %360 = vmatprep.subr.mxu0 0.0
    %361 = vmatpush2.msra.mxu0 0.0
    %362 = vmatprep.subr.mxu0 0.0
    %363 = vmatpush2.msra.mxu0 0.0
    %364 = vmatprep.subr.mxu0 0.0
    %365 = vmatpush2.msra.mxu0 0.0
    %366 = vmatprep.subr.mxu0 0.0
    %367 = vmatpush2.msra.mxu0 0.0
    %368 = vmatprep.subr.mxu0 0.0
    %369 = vmatpush2.msra.mxu0 0.0
    %370 = vmatprep.subr.mxu0 0.0
    %371 = vmatpush2.msra.mxu0 0.0
    %372 = vmatprep.subr.mxu0 0.0
    %373 = vmatpush2.msra.mxu0 0.0
    %374 = vmatprep.subr.mxu0 0.0
    %375 = vmatpush2.msra.mxu0 0.0
    %376 = vmatprep.subr.mxu0 0.0
    %377 = vmatpush2.msra.mxu0 0.0
    %378 = vmatprep.subr.mxu0 0.0
    %379 = vmatpush2.msra.mxu0 0.0
    %380 = vmatprep.subr.mxu0 0.0
    %381 = vmatpush2.msra.mxu0 0.0
    %382 = vmatprep.subr.mxu0 0.0
    %383 = vmatpush2.msra.mxu0 0.0
    %384 = vmatprep.subr.mxu0 0.0
    %385 = vmatpush2.msra.mxu0 0.0
    %386 = vmatprep.subr.mxu0 0.0
    %387 = vmatpush2.msra.mxu0 0.0
    %388 = vmatprep.subr.mxu0 0.0
    %389 = vmatpush2.msra.mxu0 0.0
    %390 = vmatprep.mubr.f32.mxu0 0.0
    %391 = vmatmul.mubr.f32.gmra.mxu0 %v254
    %v392 = vpop.f32.mrf.mxu0
    %v393 = vadd.f32 %v220, %v392
    %v394 = vpop.f32.mrf.mxu0
    %395 = vdwg.mxu0
    %396 = vmatprep.subr.mxu0 0.0
    %397 = vmatpush1.msra.mxu0 0.0
    %398 = vmatprep.subr.mxu0 0.0
    %399 = vmatpush1.msra.mxu0 0.0
    %400 = vmatprep.subr.mxu0 0.0
    %401 = vmatpush1.msra.mxu0 0.0
    %402 = vmatprep.subr.mxu0 0.0
    %403 = vmatpush1.msra.mxu0 0.0
    %404 = vmatprep.subr.mxu0 0.0
    %405 = vmatpush1.msra.mxu0 0.0
    %406 = vmatprep.subr.mxu0 0.0
    %407 = vmatpush1.msra.mxu0 0.0
    %408 = vmatprep.subr.mxu0 0.0
    %409 = vmatpush1.msra.mxu0 0.0
    %410 = vmatprep.subr.mxu0 0.0
    %411 = vmatpush1.msra.mxu0 0.0
    %412 = vmatprep.subr.mxu0 0.0
    %413 = vmatpush1.msra.mxu0 0.0
    %414 = vmatprep.subr.mxu0 0.0
    %415 = vmatpush1.msra.mxu0 0.0
    %416 = vmatprep.subr.mxu0 0.0
    %417 = vmatpush1.msra.mxu0 0.0
    %418 = vmatprep.subr.mxu0 0.0
    %419 = vmatpush1.msra.mxu0 0.0
    %420 = vmatprep.subr.mxu0 0.0
    %421 = vmatpush1.msra.mxu0 %v176
    %422 = vmatprep.subr.mxu0 0.0
    %423 = vmatpush1.msra.mxu0 %v175
    %424 = vmatprep.subr.mxu0 0.0
    %425 = vmatpush1.msra.mxu0 %v174
    %426 = vmatprep.subr.mxu0 0.0
    %427 = vmatpush1.msra.mxu0 %v173
    %428 = vmatprep.subr.mxu0 0.0
    %429 = vmatpush2.msra.mxu0 0.0
    %430 = vmatprep.subr.mxu0 0.0
    %431 = vmatpush2.msra.mxu0 0.0
    %432 = vmatprep.subr.mxu0 0.0
    %433 = vmatpush2.msra.mxu0 0.0
    %434 = vmatprep.subr.mxu0 0.0
    %435 = vmatpush2.msra.mxu0 0.0
    %436 = vmatprep.subr.mxu0 0.0
    %437 = vmatpush2.msra.mxu0 0.0
    %438 = vmatprep.subr.mxu0 0.0
    %439 = vmatpush2.msra.mxu0 0.0
    %440 = vmatprep.subr.mxu0 0.0
    %441 = vmatpush2.msra.mxu0 0.0
    %442 = vmatprep.subr.mxu0 0.0
    %443 = vmatpush2.msra.mxu0 0.0
    %444 = vmatprep.subr.mxu0 0.0
    %445 = vmatpush2.msra.mxu0 0.0
    %446 = vmatprep.subr.mxu0 0.0
    %447 = vmatpush2.msra.mxu0 0.0
    %448 = vmatprep.subr.mxu0 0.0
    %449 = vmatpush2.msra.mxu0 0.0
    %450 = vmatprep.subr.mxu0 0.0
    %451 = vmatpush2.msra.mxu0 0.0
    %452 = vmatprep.subr.mxu0 0.0
    %453 = vmatpush2.msra.mxu0 0.0
    %454 = vmatprep.subr.mxu0 0.0
    %455 = vmatpush2.msra.mxu0 0.0
    %456 = vmatprep.subr.mxu0 0.0
    %457 = vmatpush2.msra.mxu0 0.0
    %458 = vmatprep.subr.mxu0 0.0
    %459 = vmatpush2.msra.mxu0 0.0
    %460 = vmatprep.mubr.f32.mxu0 0.0
    %461 = vmatmul.mubr.f32.gmra.mxu0 %v254
    %v462 = vpop.f32.mrf.mxu0
    %v463 = vadd.f32 %v224, %v462
    %v464 = vpop.f32.mrf.mxu0
    %465 = vdwg.mxu0
    %466 = vmatprep.subr.mxu0 0.0
    %467 = vmatpush1.msra.mxu0 0.0
    %468 = vmatprep.subr.mxu0 0.0
    %469 = vmatpush1.msra.mxu0 0.0
    %470 = vmatprep.subr.mxu0 0.0
    %471 = vmatpush1.msra.mxu0 0.0
    %472 = vmatprep.subr.mxu0 0.0
    %473 = vmatpush1.msra.mxu0 0.0
    %474 = vmatprep.subr.mxu0 0.0
    %475 = vmatpush1.msra.mxu0 0.0
    %476 = vmatprep.subr.mxu0 0.0
    %477 = vmatpush1.msra.mxu0 0.0
    %478 = vmatprep.subr.mxu0 0.0
    %479 = vmatpush1.msra.mxu0 0.0
    %480 = vmatprep.subr.mxu0 0.0
    %481 = vmatpush1.msra.mxu0 0.0
    %482 = vmatprep.subr.mxu0 0.0
    %483 = vmatpush1.msra.mxu0 0.0
    %484 = vmatprep.subr.mxu0 0.0
    %485 = vmatpush1.msra.mxu0 0.0
    %486 = vmatprep.subr.mxu0 0.0
    %487 = vmatpush1.msra.mxu0 0.0
    %488 = vmatprep.subr.mxu0 0.0
    %489 = vmatpush1.msra.mxu0 0.0
    %490 = vmatprep.subr.mxu0 0.0
    %491 = vmatpush1.msra.mxu0 %v180
    %492 = vmatprep.subr.mxu0 0.0
    %493 = vmatpush1.msra.mxu0 %v179
    %494 = vmatprep.subr.mxu0 0.0
    %495 = vmatpush1.msra.mxu0 %v178
    %496 = vmatprep.subr.mxu0 0.0
    %497 = vmatpush1.msra.mxu0 %v177
    %498 = vmatprep.subr.mxu0 0.0
    %499 = vmatpush2.msra.mxu0 0.0
    %500 = vmatprep.subr.mxu0 0.0
    %501 = vmatpush2.msra.mxu0 0.0
    %502 = vmatprep.subr.mxu0 0.0
    %503 = vmatpush2.msra.mxu0 0.0
    %504 = vmatprep.subr.mxu0 0.0
    %505 = vmatpush2.msra.mxu0 0.0
    %506 = vmatprep.subr.mxu0 0.0
    %507 = vmatpush2.msra.mxu0 0.0
    %508 = vmatprep.subr.mxu0 0.0
    %509 = vmatpush2.msra.mxu0 0.0
    %510 = vmatprep.subr.mxu0 0.0
    %511 = vmatpush2.msra.mxu0 0.0
    %512 = vmatprep.subr.mxu0 0.0
    %513 = vmatpush2.msra.mxu0 0.0
    %514 = vmatprep.subr.mxu0 0.0
    %515 = vmatpush2.msra.mxu0 0.0
    %516 = vmatprep.subr.mxu0 0.0
    %517 = vmatpush2.msra.mxu0 0.0
    %518 = vmatprep.subr.mxu0 0.0
    %519 = vmatpush2.msra.mxu0 0.0
    %520 = vmatprep.subr.mxu0 0.0
    %521 = vmatpush2.msra.mxu0 0.0
    %522 = vmatprep.subr.mxu0 0.0
    %523 = vmatpush2.msra.mxu0 0.0
    %524 = vmatprep.subr.mxu0 0.0
    %525 = vmatpush2.msra.mxu0 0.0
    %526 = vmatprep.subr.mxu0 0.0
    %527 = vmatpush2.msra.mxu0 0.0
    %528 = vmatprep.subr.mxu0 0.0
    %529 = vmatpush2.msra.mxu0 0.0
    %530 = vmatprep.mubr.f32.mxu0 0.0
    %531 = vmatmul.mubr.f32.gmra.mxu0 %v254
    %v532 = vpop.f32.mrf.mxu0
    %v533 = vadd.f32 %v228, %v532
    %v534 = vpop.f32.mrf.mxu0
    %535 = vdwg.mxu0
    %v537 = vsel %vm56, %v164, 0
    %539 = vmatprep.subr.mxu0 0.0
    %540 = vmatpush1.msra.mxu0 0.0
    %541 = vmatprep.subr.mxu0 0.0
    %542 = vmatpush1.msra.mxu0 0.0
    %543 = vmatprep.subr.mxu0 0.0
    %544 = vmatpush1.msra.mxu0 0.0
    %545 = vmatprep.subr.mxu0 0.0
    %546 = vmatpush1.msra.mxu0 0.0
    %547 = vmatprep.subr.mxu0 0.0
    %548 = vmatpush1.msra.mxu0 0.0
    %549 = vmatprep.subr.mxu0 0.0
    %550 = vmatpush1.msra.mxu0 0.0
    %551 = vmatprep.subr.mxu0 0.0
    %552 = vmatpush1.msra.mxu0 0.0
    %553 = vmatprep.subr.mxu0 0.0
    %554 = vmatpush1.msra.mxu0 0.0
    %555 = vmatprep.subr.mxu0 0.0
    %556 = vmatpush1.msra.mxu0 0.0
    %557 = vmatprep.subr.mxu0 0.0
    %558 = vmatpush1.msra.mxu0 0.0
    %559 = vmatprep.subr.mxu0 0.0
    %560 = vmatpush1.msra.mxu0 0.0
    %561 = vmatprep.subr.mxu0 0.0
    %562 = vmatpush1.msra.mxu0 0.0
    %563 = vmatprep.subr.mxu0 0.0
    %564 = vmatpush1.msra.mxu0 %v184
    %565 = vmatprep.subr.mxu0 0.0
    %566 = vmatpush1.msra.mxu0 %v183
    %567 = vmatprep.subr.mxu0 0.0
    %568 = vmatpush1.msra.mxu0 %v182
    %569 = vmatprep.subr.mxu0 0.0
    %570 = vmatpush1.msra.mxu0 %v181
    %571 = vmatprep.subr.mxu0 0.0
    %572 = vmatpush2.msra.mxu0 0.0
    %573 = vmatprep.subr.mxu0 0.0
    %574 = vmatpush2.msra.mxu0 0.0
    %575 = vmatprep.subr.mxu0 0.0
    %576 = vmatpush2.msra.mxu0 0.0
    %577 = vmatprep.subr.mxu0 0.0
    %578 = vmatpush2.msra.mxu0 0.0
    %579 = vmatprep.subr.mxu0 0.0
    %580 = vmatpush2.msra.mxu0 0.0
    %581 = vmatprep.subr.mxu0 0.0
    %582 = vmatpush2.msra.mxu0 0.0
    %583 = vmatprep.subr.mxu0 0.0
    %584 = vmatpush2.msra.mxu0 0.0
    %585 = vmatprep.subr.mxu0 0.0
    %586 = vmatpush2.msra.mxu0 0.0
    %587 = vmatprep.subr.mxu0 0.0
    %588 = vmatpush2.msra.mxu0 0.0
    %589 = vmatprep.subr.mxu0 0.0
    %590 = vmatpush2.msra.mxu0 0.0
    %591 = vmatprep.subr.mxu0 0.0
    %592 = vmatpush2.msra.mxu0 0.0
    %593 = vmatprep.subr.mxu0 0.0
    %594 = vmatpush2.msra.mxu0 0.0
    %595 = vmatprep.subr.mxu0 0.0
    %596 = vmatpush2.msra.mxu0 0.0
    %597 = vmatprep.subr.mxu0 0.0
    %598 = vmatpush2.msra.mxu0 0.0
    %599 = vmatprep.subr.mxu0 0.0
    %600 = vmatpush2.msra.mxu0 0.0
    %601 = vmatprep.subr.mxu0 0.0
    %602 = vmatpush2.msra.mxu0 0.0
    %603 = vmatprep.mubr.f32.mxu0 0.0
    %604 = vmatmul.mubr.f32.gmra.mxu0 %v537
    %v605 = vpop.f32.mrf.mxu0
    %v606 = vadd.f32 %v232, %v605
    %v607 = vpop.f32.mrf.mxu0
    %608 = vdwg.mxu0
    %609 = vmatprep.subr.mxu0 0.0
    %610 = vmatpush1.msra.mxu0 0.0
    %611 = vmatprep.subr.mxu0 0.0
    %612 = vmatpush1.msra.mxu0 0.0
    %613 = vmatprep.subr.mxu0 0.0
    %614 = vmatpush1.msra.mxu0 0.0
    %615 = vmatprep.subr.mxu0 0.0
    %616 = vmatpush1.msra.mxu0 0.0
    %617 = vmatprep.subr.mxu0 0.0
    %618 = vmatpush1.msra.mxu0 0.0
    %619 = vmatprep.subr.mxu0 0.0
    %620 = vmatpush1.msra.mxu0 0.0
    %621 = vmatprep.subr.mxu0 0.0
    %622 = vmatpush1.msra.mxu0 0.0
    %623 = vmatprep.subr.mxu0 0.0
    %624 = vmatpush1.msra.mxu0 0.0
    %625 = vmatprep.subr.mxu0 0.0
    %626 = vmatpush1.msra.mxu0 0.0
    %627 = vmatprep.subr.mxu0 0.0
    %628 = vmatpush1.msra.mxu0 0.0
    %629 = vmatprep.subr.mxu0 0.0
    %630 = vmatpush1.msra.mxu0 0.0
    %631 = vmatprep.subr.mxu0 0.0
    %632 = vmatpush1.msra.mxu0 0.0
    %633 = vmatprep.subr.mxu0 0.0
    %634 = vmatpush1.msra.mxu0 %v188
    %635 = vmatprep.subr.mxu0 0.0
    %636 = vmatpush1.msra.mxu0 %v187
    %637 = vmatprep.subr.mxu0 0.0
    %638 = vmatpush1.msra.mxu0 %v186
    %639 = vmatprep.subr.mxu0 0.0
    %640 = vmatpush1.msra.mxu0 %v185
    %641 = vmatprep.subr.mxu0 0.0
    %642 = vmatpush2.msra.mxu0 0.0
    %643 = vmatprep.subr.mxu0 0.0
    %644 = vmatpush2.msra.mxu0 0.0
    %645 = vmatprep.subr.mxu0 0.0
    %646 = vmatpush2.msra.mxu0 0.0
    %647 = vmatprep.subr.mxu0 0.0
    %648 = vmatpush2.msra.mxu0 0.0
    %649 = vmatprep.subr.mxu0 0.0
    %650 = vmatpush2.msra.mxu0 0.0
    %651 = vmatprep.subr.mxu0 0.0
    %652 = vmatpush2.msra.mxu0 0.0
    %653 = vmatprep.subr.mxu0 0.0
    %654 = vmatpush2.msra.mxu0 0.0
    %655 = vmatprep.subr.mxu0 0.0
    %656 = vmatpush2.msra.mxu0 0.0
    %657 = vmatprep.subr.mxu0 0.0
    %658 = vmatpush2.msra.mxu0 0.0
    %659 = vmatprep.subr.mxu0 0.0
    %660 = vmatpush2.msra.mxu0 0.0
    %661 = vmatprep.subr.mxu0 0.0
    %662 = vmatpush2.msra.mxu0 0.0
    %663 = vmatprep.subr.mxu0 0.0
    %664 = vmatpush2.msra.mxu0 0.0
    %665 = vmatprep.subr.mxu0 0.0
    %666 = vmatpush2.msra.mxu0 0.0
    %667 = vmatprep.subr.mxu0 0.0
    %668 = vmatpush2.msra.mxu0 0.0
    %669 = vmatprep.subr.mxu0 0.0
    %670 = vmatpush2.msra.mxu0 0.0
    %671 = vmatprep.subr.mxu0 0.0
    %672 = vmatpush2.msra.mxu0 0.0
    %673 = vmatprep.mubr.f32.mxu0 0.0
    %674 = vmatmul.mubr.f32.gmra.mxu0 %v537
    %v675 = vpop.f32.mrf.mxu0
    %v676 = vadd.f32 %v236, %v675
    %v677 = vpop.f32.mrf.mxu0
    %678 = vdwg.mxu0
    %679 = vmatprep.subr.mxu0 0.0
    %680 = vmatpush1.msra.mxu0 0.0
    %681 = vmatprep.subr.mxu0 0.0
    %682 = vmatpush1.msra.mxu0 0.0
    %683 = vmatprep.subr.mxu0 0.0
    %684 = vmatpush1.msra.mxu0 0.0
    %685 = vmatprep.subr.mxu0 0.0
    %686 = vmatpush1.msra.mxu0 0.0
    %687 = vmatprep.subr.mxu0 0.0
    %688 = vmatpush1.msra.mxu0 0.0
    %689 = vmatprep.subr.mxu0 0.0
    %690 = vmatpush1.msra.mxu0 0.0
    %691 = vmatprep.subr.mxu0 0.0
    %692 = vmatpush1.msra.mxu0 0.0
    %693 = vmatprep.subr.mxu0 0.0
    %694 = vmatpush1.msra.mxu0 0.0
    %695 = vmatprep.subr.mxu0 0.0
    %696 = vmatpush1.msra.mxu0 0.0
    %697 = vmatprep.subr.mxu0 0.0
    %698 = vmatpush1.msra.mxu0 0.0
    %699 = vmatprep.subr.mxu0 0.0
    %700 = vmatpush1.msra.mxu0 0.0
    %701 = vmatprep.subr.mxu0 0.0
    %702 = vmatpush1.msra.mxu0 0.0
    %703 = vmatprep.subr.mxu0 0.0
    %704 = vmatpush1.msra.mxu0 %v192
    %705 = vmatprep.subr.mxu0 0.0
    %706 = vmatpush1.msra.mxu0 %v191
    %707 = vmatprep.subr.mxu0 0.0
    %708 = vmatpush1.msra.mxu0 %v190
    %709 = vmatprep.subr.mxu0 0.0
    %710 = vmatpush1.msra.mxu0 %v189
    %711 = vmatprep.subr.mxu0 0.0
    %712 = vmatpush2.msra.mxu0 0.0
    %713 = vmatprep.subr.mxu0 0.0
    %714 = vmatpush2.msra.mxu0 0.0
    %715 = vmatprep.subr.mxu0 0.0
    %716 = vmatpush2.msra.mxu0 0.0
    %717 = vmatprep.subr.mxu0 0.0
    %718 = vmatpush2.msra.mxu0 0.0
    %719 = vmatprep.subr.mxu0 0.0
    %720 = vmatpush2.msra.mxu0 0.0
    %721 = vmatprep.subr.mxu0 0.0
    %722 = vmatpush2.msra.mxu0 0.0
    %723 = vmatprep.subr.mxu0 0.0
    %724 = vmatpush2.msra.mxu0 0.0
    %725 = vmatprep.subr.mxu0 0.0
    %726 = vmatpush2.msra.mxu0 0.0
    %727 = vmatprep.subr.mxu0 0.0
    %728 = vmatpush2.msra.mxu0 0.0
    %729 = vmatprep.subr.mxu0 0.0
    %730 = vmatpush2.msra.mxu0 0.0
    %731 = vmatprep.subr.mxu0 0.0
    %732 = vmatpush2.msra.mxu0 0.0
    %733 = vmatprep.subr.mxu0 0.0
    %734 = vmatpush2.msra.mxu0 0.0
    %735 = vmatprep.subr.mxu0 0.0
    %736 = vmatpush2.msra.mxu0 0.0
    %737 = vmatprep.subr.mxu0 0.0
    %738 = vmatpush2.msra.mxu0 0.0
    %739 = vmatprep.subr.mxu0 0.0
    %740 = vmatpush2.msra.mxu0 0.0
    %741 = vmatprep.subr.mxu0 0.0
    %742 = vmatpush2.msra.mxu0 0.0
    %743 = vmatprep.mubr.f32.mxu0 0.0
    %744 = vmatmul.mubr.f32.gmra.mxu0 %v537
    %v745 = vpop.f32.mrf.mxu0
    %v746 = vadd.f32 %v240, %v745
    %v747 = vpop.f32.mrf.mxu0
    %748 = vdwg.mxu0
    %749 = vmatprep.subr.mxu0 0.0
    %750 = vmatpush1.msra.mxu0 0.0
    %751 = vmatprep.subr.mxu0 0.0
    %752 = vmatpush1.msra.mxu0 0.0
    %753 = vmatprep.subr.mxu0 0.0
    %754 = vmatpush1.msra.mxu0 0.0
    %755 = vmatprep.subr.mxu0 0.0
    %756 = vmatpush1.msra.mxu0 0.0
    %757 = vmatprep.subr.mxu0 0.0
    %758 = vmatpush1.msra.mxu0 0.0
    %759 = vmatprep.subr.mxu0 0.0
    %760 = vmatpush1.msra.mxu0 0.0
    %761 = vmatprep.subr.mxu0 0.0
    %762 = vmatpush1.msra.mxu0 0.0
    %763 = vmatprep.subr.mxu0 0.0
    %764 = vmatpush1.msra.mxu0 0.0
    %765 = vmatprep.subr.mxu0 0.0
    %766 = vmatpush1.msra.mxu0 0.0
    %767 = vmatprep.subr.mxu0 0.0
    %768 = vmatpush1.msra.mxu0 0.0
    %769 = vmatprep.subr.mxu0 0.0
    %770 = vmatpush1.msra.mxu0 0.0
    %771 = vmatprep.subr.mxu0 0.0
    %772 = vmatpush1.msra.mxu0 0.0
    %773 = vmatprep.subr.mxu0 0.0
    %774 = vmatpush1.msra.mxu0 %v196
    %775 = vmatprep.subr.mxu0 0.0
    %776 = vmatpush1.msra.mxu0 %v195
    %777 = vmatprep.subr.mxu0 0.0
    %778 = vmatpush1.msra.mxu0 %v194
    %779 = vmatprep.subr.mxu0 0.0
    %780 = vmatpush1.msra.mxu0 %v193
    %781 = vmatprep.subr.mxu0 0.0
    %782 = vmatpush2.msra.mxu0 0.0
    %783 = vmatprep.subr.mxu0 0.0
    %784 = vmatpush2.msra.mxu0 0.0
    %785 = vmatprep.subr.mxu0 0.0
    %786 = vmatpush2.msra.mxu0 0.0
    %787 = vmatprep.subr.mxu0 0.0
    %788 = vmatpush2.msra.mxu0 0.0
    %789 = vmatprep.subr.mxu0 0.0
    %790 = vmatpush2.msra.mxu0 0.0
    %791 = vmatprep.subr.mxu0 0.0
    %792 = vmatpush2.msra.mxu0 0.0
    %793 = vmatprep.subr.mxu0 0.0
    %794 = vmatpush2.msra.mxu0 0.0
    %795 = vmatprep.subr.mxu0 0.0
    %796 = vmatpush2.msra.mxu0 0.0
    %797 = vmatprep.subr.mxu0 0.0
    %798 = vmatpush2.msra.mxu0 0.0
    %799 = vmatprep.subr.mxu0 0.0
    %800 = vmatpush2.msra.mxu0 0.0
    %801 = vmatprep.subr.mxu0 0.0
    %802 = vmatpush2.msra.mxu0 0.0
    %803 = vmatprep.subr.mxu0 0.0
    %804 = vmatpush2.msra.mxu0 0.0
    %805 = vmatprep.subr.mxu0 0.0
    %806 = vmatpush2.msra.mxu0 0.0
    %807 = vmatprep.subr.mxu0 0.0
    %808 = vmatpush2.msra.mxu0 0.0
    %809 = vmatprep.subr.mxu0 0.0
    %810 = vmatpush2.msra.mxu0 0.0
    %811 = vmatprep.subr.mxu0 0.0
    %812 = vmatpush2.msra.mxu0 0.0
    %813 = vmatprep.mubr.f32.mxu0 0.0
    %814 = vmatmul.mubr.f32.gmra.mxu0 %v537
    %v815 = vpop.f32.mrf.mxu0
    %v816 = vadd.f32 %v244, %v815
    %v817 = vpop.f32.mrf.mxu0
    %818 = vdwg.mxu0
    %v819 = vld [vmem:[%s6] sm:$0xff]
    %v820 = vld [vmem:[%s6 + $0x8] sm:$0xff]
    %v821 = vld [vmem:[%s6 + $0x10] sm:$0xff]
    %v822 = vld [vmem:[%s6 + $0x18] sm:$0xff]
    %v823 = vld [vmem:[%s6 + $0x20] sm:$0xff]
    %v824 = vld [vmem:[%s6 + $0x28] sm:$0xff]
    %v825 = vld [vmem:[%s6 + $0x30] sm:$0xff]
    %v826 = vld [vmem:[%s6 + $0x38] sm:$0xff]
    %v827 = vld [vmem:[%s6 + $0x40] sm:$0xff]
    %v828 = vld [vmem:[%s6 + $0x48] sm:$0xff]
    %v829 = vld [vmem:[%s6 + $0x50] sm:$0xff]
    %v830 = vld [vmem:[%s6 + $0x58] sm:$0xff]
    %v831 = vld [vmem:[%s6 + $0x60] sm:$0xff]
    %v832 = vld [vmem:[%s6 + $0x68] sm:$0xff]
    %v833 = vld [vmem:[%s6 + $0x70] sm:$0xff]
    %v834 = vld [vmem:[%s6 + $0x78] sm:$0xff]
    %v835 = vld [vmem:[%s6 + $0x80] sm:$0xff]
    %v836 = vld [vmem:[%s6 + $0x88] sm:$0xff]
    %v837 = vld [vmem:[%s6 + $0x90] sm:$0xff]
    %v838 = vld [vmem:[%s6 + $0x98] sm:$0xff]
    %v839 = vld [vmem:[%s6 + $0xa0] sm:$0xff]
    %v840 = vld [vmem:[%s6 + $0xa8] sm:$0xff]
    %v841 = vld [vmem:[%s6 + $0xb0] sm:$0xff]
    %v842 = vld [vmem:[%s6 + $0xb8] sm:$0xff]
    %v843 = vld [vmem:[%s6 + $0xc0] sm:$0xff]
    %v844 = vld [vmem:[%s6 + $0xc8] sm:$0xff]
    %v845 = vld [vmem:[%s6 + $0xd0] sm:$0xff]
    %v846 = vld [vmem:[%s6 + $0xd8] sm:$0xff]
    %v847 = vld [vmem:[%s6 + $0xe0] sm:$0xff]
    %v848 = vld [vmem:[%s6 + $0xe8] sm:$0xff]
    %v849 = vld [vmem:[%s6 + $0xf0] sm:$0xff]
    %v850 = vld [vmem:[%s6 + $0xf8] sm:$0xff]
    %v851 = vld [vmem:[%s7] sm:$0x1]
    %v852 = vld [vmem:[%s7 + $0x1] sm:$0x1]
    %v853 = vld [vmem:[%s7 + $0x2] sm:$0x1]
    %v854 = vld [vmem:[%s7 + $0x3] sm:$0x1]
    %v855 = vld [vmem:[%s7 + $0x4] sm:$0x1]
    %v856 = vld [vmem:[%s7 + $0x5] sm:$0x1]
    %v857 = vld [vmem:[%s7 + $0x6] sm:$0x1]
    %v858 = vld [vmem:[%s7 + $0x7] sm:$0x1]
    %v867 = vlaneseq
    %v868 = vshrl.u32 %v867, 7
    %v869 = vsub.s32 0, %v868
    %v870 = vrot.slane %v851, %v869
    %v871 = vlaneseq
    %v872 = vshrl.u32 %v871, 7
    %v873 = vsub.s32 0, %v872
    %v874 = vrot.slane %v852, %v873
    %v875 = vlaneseq
    %v876 = vshrl.u32 %v875, 7
    %v877 = vsub.s32 0, %v876
    %v878 = vrot.slane %v853, %v877
    %v879 = vlaneseq
    %v880 = vshrl.u32 %v879, 7
    %v881 = vsub.s32 0, %v880
    %v882 = vrot.slane %v854, %v881
    %v883 = vlaneseq
    %v884 = vshrl.u32 %v883, 7
    %v885 = vsub.s32 0, %v884
    %v886 = vrot.slane %v855, %v885
    %v887 = vlaneseq
    %v888 = vshrl.u32 %v887, 7
    %v889 = vsub.s32 0, %v888
    %v890 = vrot.slane %v856, %v889
    %v891 = vlaneseq
    %v892 = vshrl.u32 %v891, 7
    %v893 = vsub.s32 0, %v892
    %v894 = vrot.slane %v857, %v893
    %v895 = vlaneseq
    %v896 = vshrl.u32 %v895, 7
    %v897 = vsub.s32 0, %v896
    %v898 = vrot.slane %v858, %v897
    %907 = vmatprep.subr.mxu0 0.0
    %908 = vmatpush1.msra.mxu0 0.0
    %909 = vmatprep.subr.mxu0 0.0
    %910 = vmatpush1.msra.mxu0 0.0
    %911 = vmatprep.subr.mxu0 0.0
    %912 = vmatpush1.msra.mxu0 0.0
    %913 = vmatprep.subr.mxu0 0.0
    %914 = vmatpush1.msra.mxu0 0.0
    %915 = vmatprep.subr.mxu0 0.0
    %916 = vmatpush1.msra.mxu0 0.0
    %917 = vmatprep.subr.mxu0 0.0
    %918 = vmatpush1.msra.mxu0 0.0
    %919 = vmatprep.subr.mxu0 0.0
    %920 = vmatpush1.msra.mxu0 0.0
    %921 = vmatprep.subr.mxu0 0.0
    %922 = vmatpush1.msra.mxu0 0.0
    %923 = vmatprep.subr.mxu0 0.0
    %924 = vmatpush1.msra.mxu0 0.0
    %925 = vmatprep.subr.mxu0 0.0
    %926 = vmatpush1.msra.mxu0 0.0
    %927 = vmatprep.subr.mxu0 0.0
    %928 = vmatpush1.msra.mxu0 0.0
    %929 = vmatprep.subr.mxu0 0.0
    %930 = vmatpush1.msra.mxu0 0.0
    %931 = vmatprep.subr.mxu0 0.0
    %932 = vmatpush1.msra.mxu0 %v822
    %933 = vmatprep.subr.mxu0 0.0
    %934 = vmatpush1.msra.mxu0 %v821
    %935 = vmatprep.subr.mxu0 0.0
    %936 = vmatpush1.msra.mxu0 %v820
    %937 = vmatprep.subr.mxu0 0.0
    %938 = vmatpush1.msra.mxu0 %v819
    %939 = vmatprep.subr.mxu0 0.0
    %940 = vmatpush2.msra.mxu0 0.0
    %941 = vmatprep.subr.mxu0 0.0
    %942 = vmatpush2.msra.mxu0 0.0
    %943 = vmatprep.subr.mxu0 0.0
    %944 = vmatpush2.msra.mxu0 0.0
    %945 = vmatprep.subr.mxu0 0.0
    %946 = vmatpush2.msra.mxu0 0.0
    %947 = vmatprep.subr.mxu0 0.0
    %948 = vmatpush2.msra.mxu0 0.0
    %949 = vmatprep.subr.mxu0 0.0
    %950 = vmatpush2.msra.mxu0 0.0
    %951 = vmatprep.subr.mxu0 0.0
    %952 = vmatpush2.msra.mxu0 0.0
    %953 = vmatprep.subr.mxu0 0.0
    %954 = vmatpush2.msra.mxu0 0.0
    %955 = vmatprep.subr.mxu0 0.0
    %956 = vmatpush2.msra.mxu0 0.0
    %957 = vmatprep.subr.mxu0 0.0
    %958 = vmatpush2.msra.mxu0 0.0
    %959 = vmatprep.subr.mxu0 0.0
    %960 = vmatpush2.msra.mxu0 0.0
    %961 = vmatprep.subr.mxu0 0.0
    %962 = vmatpush2.msra.mxu0 0.0
    %963 = vmatprep.subr.mxu0 0.0
    %964 = vmatpush2.msra.mxu0 0.0
    %965 = vmatprep.subr.mxu0 0.0
    %966 = vmatpush2.msra.mxu0 0.0
    %967 = vmatprep.subr.mxu0 0.0
    %968 = vmatpush2.msra.mxu0 0.0
    %969 = vmatprep.subr.mxu0 0.0
    %970 = vmatpush2.msra.mxu0 0.0
    %971 = vmatprep.mubr.f32.mxu0 0.0
    %972 = vmatmul.mubr.f32.gmra.mxu0 %v254
    %v973 = vpop.f32.mrf.mxu0
    %v974 = vadd.f32 %v870, %v973
    %v975 = vpop.f32.mrf.mxu0
    %976 = vdwg.mxu0
    %977 = vmatprep.subr.mxu0 0.0
    %978 = vmatpush1.msra.mxu0 0.0
    %979 = vmatprep.subr.mxu0 0.0
    %980 = vmatpush1.msra.mxu0 0.0
    %981 = vmatprep.subr.mxu0 0.0
    %982 = vmatpush1.msra.mxu0 0.0
    %983 = vmatprep.subr.mxu0 0.0
    %984 = vmatpush1.msra.mxu0 0.0
    %985 = vmatprep.subr.mxu0 0.0
    %986 = vmatpush1.msra.mxu0 0.0
    %987 = vmatprep.subr.mxu0 0.0
    %988 = vmatpush1.msra.mxu0 0.0
    %989 = vmatprep.subr.mxu0 0.0
    %990 = vmatpush1.msra.mxu0 0.0
    %991 = vmatprep.subr.mxu0 0.0
    %992 = vmatpush1.msra.mxu0 0.0
    %993 = vmatprep.subr.mxu0 0.0
    %994 = vmatpush1.msra.mxu0 0.0
    %995 = vmatprep.subr.mxu0 0.0
    %996 = vmatpush1.msra.mxu0 0.0
    %997 = vmatprep.subr.mxu0 0.0
    %998 = vmatpush1.msra.mxu0 0.0
    %999 = vmatprep.subr.mxu0 0.0
    %1000 = vmatpush1.msra.mxu0 0.0
    %1001 = vmatprep.subr.mxu0 0.0
    %1002 = vmatpush1.msra.mxu0 %v826
    %1003 = vmatprep.subr.mxu0 0.0
    %1004 = vmatpush1.msra.mxu0 %v825
    %1005 = vmatprep.subr.mxu0 0.0
    %1006 = vmatpush1.msra.mxu0 %v824
    %1007 = vmatprep.subr.mxu0 0.0
    %1008 = vmatpush1.msra.mxu0 %v823
    %1009 = vmatprep.subr.mxu0 0.0
    %1010 = vmatpush2.msra.mxu0 0.0
    %1011 = vmatprep.subr.mxu0 0.0
    %1012 = vmatpush2.msra.mxu0 0.0
    %1013 = vmatprep.subr.mxu0 0.0
    %1014 = vmatpush2.msra.mxu0 0.0
    %1015 = vmatprep.subr.mxu0 0.0
    %1016 = vmatpush2.msra.mxu0 0.0
    %1017 = vmatprep.subr.mxu0 0.0
    %1018 = vmatpush2.msra.mxu0 0.0
    %1019 = vmatprep.subr.mxu0 0.0
    %1020 = vmatpush2.msra.mxu0 0.0
    %1021 = vmatprep.subr.mxu0 0.0
    %1022 = vmatpush2.msra.mxu0 0.0
    %1023 = vmatprep.subr.mxu0 0.0
    %1024 = vmatpush2.msra.mxu0 0.0
    %1025 = vmatprep.subr.mxu0 0.0
    %1026 = vmatpush2.msra.mxu0 0.0
    %1027 = vmatprep.subr.mxu0 0.0
    %1028 = vmatpush2.msra.mxu0 0.0
    %1029 = vmatprep.subr.mxu0 0.0
    %1030 = vmatpush2.msra.mxu0 0.0
    %1031 = vmatprep.subr.mxu0 0.0
    %1032 = vmatpush2.msra.mxu0 0.0
    %1033 = vmatprep.subr.mxu0 0.0
    %1034 = vmatpush2.msra.mxu0 0.0
    %1035 = vmatprep.subr.mxu0 0.0
    %1036 = vmatpush2.msra.mxu0 0.0
    %1037 = vmatprep.subr.mxu0 0.0
    %1038 = vmatpush2.msra.mxu0 0.0
    %1039 = vmatprep.subr.mxu0 0.0
    %1040 = vmatpush2.msra.mxu0 0.0
    %1041 = vmatprep.mubr.f32.mxu0 0.0
    %1042 = vmatmul.mubr.f32.gmra.mxu0 %v254
    %v1043 = vpop.f32.mrf.mxu0
    %v1044 = vadd.f32 %v874, %v1043
    %v1045 = vpop.f32.mrf.mxu0
    %1046 = vdwg.mxu0
    %1047 = vmatprep.subr.mxu0 0.0
    %1048 = vmatpush1.msra.mxu0 0.0
    %1049 = vmatprep.subr.mxu0 0.0
    %1050 = vmatpush1.msra.mxu0 0.0
    %1051 = vmatprep.subr.mxu0 0.0
    %1052 = vmatpush1.msra.mxu0 0.0
    %1053 = vmatprep.subr.mxu0 0.0
    %1054 = vmatpush1.msra.mxu0 0.0
    %1055 = vmatprep.subr.mxu0 0.0
    %1056 = vmatpush1.msra.mxu0 0.0
    %1057 = vmatprep.subr.mxu0 0.0
    %1058 = vmatpush1.msra.mxu0 0.0
    %1059 = vmatprep.subr.mxu0 0.0
    %1060 = vmatpush1.msra.mxu0 0.0
    %1061 = vmatprep.subr.mxu0 0.0
    %1062 = vmatpush1.msra.mxu0 0.0
    %1063 = vmatprep.subr.mxu0 0.0
    %1064 = vmatpush1.msra.mxu0 0.0
    %1065 = vmatprep.subr.mxu0 0.0
    %1066 = vmatpush1.msra.mxu0 0.0
    %1067 = vmatprep.subr.mxu0 0.0
    %1068 = vmatpush1.msra.mxu0 0.0
    %1069 = vmatprep.subr.mxu0 0.0
    %1070 = vmatpush1.msra.mxu0 0.0
    %1071 = vmatprep.subr.mxu0 0.0
    %1072 = vmatpush1.msra.mxu0 %v830
    %1073 = vmatprep.subr.mxu0 0.0
    %1074 = vmatpush1.msra.mxu0 %v829
    %1075 = vmatprep.subr.mxu0 0.0
    %1076 = vmatpush1.msra.mxu0 %v828
    %1077 = vmatprep.subr.mxu0 0.0
    %1078 = vmatpush1.msra.mxu0 %v827
    %1079 = vmatprep.subr.mxu0 0.0
    %1080 = vmatpush2.msra.mxu0 0.0
    %1081 = vmatprep.subr.mxu0 0.0
    %1082 = vmatpush2.msra.mxu0 0.0
    %1083 = vmatprep.subr.mxu0 0.0
    %1084 = vmatpush2.msra.mxu0 0.0
    %1085 = vmatprep.subr.mxu0 0.0
    %1086 = vmatpush2.msra.mxu0 0.0
    %1087 = vmatprep.subr.mxu0 0.0
    %1088 = vmatpush2.msra.mxu0 0.0
    %1089 = vmatprep.subr.mxu0 0.0
    %1090 = vmatpush2.msra.mxu0 0.0
    %1091 = vmatprep.subr.mxu0 0.0
    %1092 = vmatpush2.msra.mxu0 0.0
    %1093 = vmatprep.subr.mxu0 0.0
    %1094 = vmatpush2.msra.mxu0 0.0
    %1095 = vmatprep.subr.mxu0 0.0
    %1096 = vmatpush2.msra.mxu0 0.0
    %1097 = vmatprep.subr.mxu0 0.0
    %1098 = vmatpush2.msra.mxu0 0.0
    %1099 = vmatprep.subr.mxu0 0.0
    %1100 = vmatpush2.msra.mxu0 0.0
    %1101 = vmatprep.subr.mxu0 0.0
    %1102 = vmatpush2.msra.mxu0 0.0
    %1103 = vmatprep.subr.mxu0 0.0
    %1104 = vmatpush2.msra.mxu0 0.0
    %1105 = vmatprep.subr.mxu0 0.0
    %1106 = vmatpush2.msra.mxu0 0.0
    %1107 = vmatprep.subr.mxu0 0.0
    %1108 = vmatpush2.msra.mxu0 0.0
    %1109 = vmatprep.subr.mxu0 0.0
    %1110 = vmatpush2.msra.mxu0 0.0
    %1111 = vmatprep.mubr.f32.mxu0 0.0
    %1112 = vmatmul.mubr.f32.gmra.mxu0 %v254
    %v1113 = vpop.f32.mrf.mxu0
    %v1114 = vadd.f32 %v878, %v1113
    %v1115 = vpop.f32.mrf.mxu0
    %1116 = vdwg.mxu0
    %1117 = vmatprep.subr.mxu0 0.0
    %1118 = vmatpush1.msra.mxu0 0.0
    %1119 = vmatprep.subr.mxu0 0.0
    %1120 = vmatpush1.msra.mxu0 0.0
    %1121 = vmatprep.subr.mxu0 0.0
    %1122 = vmatpush1.msra.mxu0 0.0
    %1123 = vmatprep.subr.mxu0 0.0
    %1124 = vmatpush1.msra.mxu0 0.0
    %1125 = vmatprep.subr.mxu0 0.0
    %1126 = vmatpush1.msra.mxu0 0.0
    %1127 = vmatprep.subr.mxu0 0.0
    %1128 = vmatpush1.msra.mxu0 0.0
    %1129 = vmatprep.subr.mxu0 0.0
    %1130 = vmatpush1.msra.mxu0 0.0
    %1131 = vmatprep.subr.mxu0 0.0
    %1132 = vmatpush1.msra.mxu0 0.0
    %1133 = vmatprep.subr.mxu0 0.0
    %1134 = vmatpush1.msra.mxu0 0.0
    %1135 = vmatprep.subr.mxu0 0.0
    %1136 = vmatpush1.msra.mxu0 0.0
    %1137 = vmatprep.subr.mxu0 0.0
    %1138 = vmatpush1.msra.mxu0 0.0
    %1139 = vmatprep.subr.mxu0 0.0
    %1140 = vmatpush1.msra.mxu0 0.0
    %1141 = vmatprep.subr.mxu0 0.0
    %1142 = vmatpush1.msra.mxu0 %v834
    %1143 = vmatprep.subr.mxu0 0.0
    %1144 = vmatpush1.msra.mxu0 %v833
    %1145 = vmatprep.subr.mxu0 0.0
    %1146 = vmatpush1.msra.mxu0 %v832
    %1147 = vmatprep.subr.mxu0 0.0
    %1148 = vmatpush1.msra.mxu0 %v831
    %1149 = vmatprep.subr.mxu0 0.0
    %1150 = vmatpush2.msra.mxu0 0.0
    %1151 = vmatprep.subr.mxu0 0.0
    %1152 = vmatpush2.msra.mxu0 0.0
    %1153 = vmatprep.subr.mxu0 0.0
    %1154 = vmatpush2.msra.mxu0 0.0
    %1155 = vmatprep.subr.mxu0 0.0
    %1156 = vmatpush2.msra.mxu0 0.0
    %1157 = vmatprep.subr.mxu0 0.0
    %1158 = vmatpush2.msra.mxu0 0.0
    %1159 = vmatprep.subr.mxu0 0.0
    %1160 = vmatpush2.msra.mxu0 0.0
    %1161 = vmatprep.subr.mxu0 0.0
    %1162 = vmatpush2.msra.mxu0 0.0
    %1163 = vmatprep.subr.mxu0 0.0
    %1164 = vmatpush2.msra.mxu0 0.0
    %1165 = vmatprep.subr.mxu0 0.0
    %1166 = vmatpush2.msra.mxu0 0.0
    %1167 = vmatprep.subr.mxu0 0.0
    %1168 = vmatpush2.msra.mxu0 0.0
    %1169 = vmatprep.subr.mxu0 0.0
    %1170 = vmatpush2.msra.mxu0 0.0
    %1171 = vmatprep.subr.mxu0 0.0
    %1172 = vmatpush2.msra.mxu0 0.0
    %1173 = vmatprep.subr.mxu0 0.0
    %1174 = vmatpush2.msra.mxu0 0.0
    %1175 = vmatprep.subr.mxu0 0.0
    %1176 = vmatpush2.msra.mxu0 0.0
    %1177 = vmatprep.subr.mxu0 0.0
    %1178 = vmatpush2.msra.mxu0 0.0
    %1179 = vmatprep.subr.mxu0 0.0
    %1180 = vmatpush2.msra.mxu0 0.0
    %1181 = vmatprep.mubr.f32.mxu0 0.0
    %1182 = vmatmul.mubr.f32.gmra.mxu0 %v254
    %v1183 = vpop.f32.mrf.mxu0
    %v1184 = vadd.f32 %v882, %v1183
    %v1185 = vpop.f32.mrf.mxu0
    %1186 = vdwg.mxu0
    %1187 = vmatprep.subr.mxu0 0.0
    %1188 = vmatpush1.msra.mxu0 0.0
    %1189 = vmatprep.subr.mxu0 0.0
    %1190 = vmatpush1.msra.mxu0 0.0
    %1191 = vmatprep.subr.mxu0 0.0
    %1192 = vmatpush1.msra.mxu0 0.0
    %1193 = vmatprep.subr.mxu0 0.0
    %1194 = vmatpush1.msra.mxu0 0.0
    %1195 = vmatprep.subr.mxu0 0.0
    %1196 = vmatpush1.msra.mxu0 0.0
    %1197 = vmatprep.subr.mxu0 0.0
    %1198 = vmatpush1.msra.mxu0 0.0
    %1199 = vmatprep.subr.mxu0 0.0
    %1200 = vmatpush1.msra.mxu0 0.0
    %1201 = vmatprep.subr.mxu0 0.0
    %1202 = vmatpush1.msra.mxu0 0.0
    %1203 = vmatprep.subr.mxu0 0.0
    %1204 = vmatpush1.msra.mxu0 0.0
    %1205 = vmatprep.subr.mxu0 0.0
    %1206 = vmatpush1.msra.mxu0 0.0
    %1207 = vmatprep.subr.mxu0 0.0
    %1208 = vmatpush1.msra.mxu0 0.0
    %1209 = vmatprep.subr.mxu0 0.0
    %1210 = vmatpush1.msra.mxu0 0.0
    %1211 = vmatprep.subr.mxu0 0.0
    %1212 = vmatpush1.msra.mxu0 %v838
    %1213 = vmatprep.subr.mxu0 0.0
    %1214 = vmatpush1.msra.mxu0 %v837
    %1215 = vmatprep.subr.mxu0 0.0
    %1216 = vmatpush1.msra.mxu0 %v836
    %1217 = vmatprep.subr.mxu0 0.0
    %1218 = vmatpush1.msra.mxu0 %v835
    %1219 = vmatprep.subr.mxu0 0.0
    %1220 = vmatpush2.msra.mxu0 0.0
    %1221 = vmatprep.subr.mxu0 0.0
    %1222 = vmatpush2.msra.mxu0 0.0
    %1223 = vmatprep.subr.mxu0 0.0
    %1224 = vmatpush2.msra.mxu0 0.0
    %1225 = vmatprep.subr.mxu0 0.0
    %1226 = vmatpush2.msra.mxu0 0.0
    %1227 = vmatprep.subr.mxu0 0.0
    %1228 = vmatpush2.msra.mxu0 0.0
    %1229 = vmatprep.subr.mxu0 0.0
    %1230 = vmatpush2.msra.mxu0 0.0
    %1231 = vmatprep.subr.mxu0 0.0
    %1232 = vmatpush2.msra.mxu0 0.0
    %1233 = vmatprep.subr.mxu0 0.0
    %1234 = vmatpush2.msra.mxu0 0.0
    %1235 = vmatprep.subr.mxu0 0.0
    %1236 = vmatpush2.msra.mxu0 0.0
    %1237 = vmatprep.subr.mxu0 0.0
    %1238 = vmatpush2.msra.mxu0 0.0
    %1239 = vmatprep.subr.mxu0 0.0
    %1240 = vmatpush2.msra.mxu0 0.0
    %1241 = vmatprep.subr.mxu0 0.0
    %1242 = vmatpush2.msra.mxu0 0.0
    %1243 = vmatprep.subr.mxu0 0.0
    %1244 = vmatpush2.msra.mxu0 0.0
    %1245 = vmatprep.subr.mxu0 0.0
    %1246 = vmatpush2.msra.mxu0 0.0
    %1247 = vmatprep.subr.mxu0 0.0
    %1248 = vmatpush2.msra.mxu0 0.0
    %1249 = vmatprep.subr.mxu0 0.0
    %1250 = vmatpush2.msra.mxu0 0.0
    %1251 = vmatprep.mubr.f32.mxu0 0.0
    %1252 = vmatmul.mubr.f32.gmra.mxu0 %v537
    %v1253 = vpop.f32.mrf.mxu0
    %v1254 = vadd.f32 %v886, %v1253
    %v1255 = vpop.f32.mrf.mxu0
    %1256 = vdwg.mxu0
    %1257 = vmatprep.subr.mxu0 0.0
    %1258 = vmatpush1.msra.mxu0 0.0
    %1259 = vmatprep.subr.mxu0 0.0
    %1260 = vmatpush1.msra.mxu0 0.0
    %1261 = vmatprep.subr.mxu0 0.0
    %1262 = vmatpush1.msra.mxu0 0.0
    %1263 = vmatprep.subr.mxu0 0.0
    %1264 = vmatpush1.msra.mxu0 0.0
    %1265 = vmatprep.subr.mxu0 0.0
    %1266 = vmatpush1.msra.mxu0 0.0
    %1267 = vmatprep.subr.mxu0 0.0
    %1268 = vmatpush1.msra.mxu0 0.0
    %1269 = vmatprep.subr.mxu0 0.0
    %1270 = vmatpush1.msra.mxu0 0.0
    %1271 = vmatprep.subr.mxu0 0.0
    %1272 = vmatpush1.msra.mxu0 0.0
    %1273 = vmatprep.subr.mxu0 0.0
    %1274 = vmatpush1.msra.mxu0 0.0
    %1275 = vmatprep.subr.mxu0 0.0
    %1276 = vmatpush1.msra.mxu0 0.0
    %1277 = vmatprep.subr.mxu0 0.0
    %1278 = vmatpush1.msra.mxu0 0.0
    %1279 = vmatprep.subr.mxu0 0.0
    %1280 = vmatpush1.msra.mxu0 0.0
    %1281 = vmatprep.subr.mxu0 0.0
    %1282 = vmatpush1.msra.mxu0 %v842
    %1283 = vmatprep.subr.mxu0 0.0
    %1284 = vmatpush1.msra.mxu0 %v841
    %1285 = vmatprep.subr.mxu0 0.0
    %1286 = vmatpush1.msra.mxu0 %v840
    %1287 = vmatprep.subr.mxu0 0.0
    %1288 = vmatpush1.msra.mxu0 %v839
    %1289 = vmatprep.subr.mxu0 0.0
    %1290 = vmatpush2.msra.mxu0 0.0
    %1291 = vmatprep.subr.mxu0 0.0
    %1292 = vmatpush2.msra.mxu0 0.0
    %1293 = vmatprep.subr.mxu0 0.0
    %1294 = vmatpush2.msra.mxu0 0.0
    %1295 = vmatprep.subr.mxu0 0.0
    %1296 = vmatpush2.msra.mxu0 0.0
    %1297 = vmatprep.subr.mxu0 0.0
    %1298 = vmatpush2.msra.mxu0 0.0
    %1299 = vmatprep.subr.mxu0 0.0
    %1300 = vmatpush2.msra.mxu0 0.0
    %1301 = vmatprep.subr.mxu0 0.0
    %1302 = vmatpush2.msra.mxu0 0.0
    %1303 = vmatprep.subr.mxu0 0.0
    %1304 = vmatpush2.msra.mxu0 0.0
    %1305 = vmatprep.subr.mxu0 0.0
    %1306 = vmatpush2.msra.mxu0 0.0
    %1307 = vmatprep.subr.mxu0 0.0
    %1308 = vmatpush2.msra.mxu0 0.0
    %1309 = vmatprep.subr.mxu0 0.0
    %1310 = vmatpush2.msra.mxu0 0.0
    %1311 = vmatprep.subr.mxu0 0.0
    %1312 = vmatpush2.msra.mxu0 0.0
    %1313 = vmatprep.subr.mxu0 0.0
    %1314 = vmatpush2.msra.mxu0 0.0
    %1315 = vmatprep.subr.mxu0 0.0
    %1316 = vmatpush2.msra.mxu0 0.0
    %1317 = vmatprep.subr.mxu0 0.0
    %1318 = vmatpush2.msra.mxu0 0.0
    %1319 = vmatprep.subr.mxu0 0.0
    %1320 = vmatpush2.msra.mxu0 0.0
    %1321 = vmatprep.mubr.f32.mxu0 0.0
    %1322 = vmatmul.mubr.f32.gmra.mxu0 %v537
    %v1323 = vpop.f32.mrf.mxu0
    %v1324 = vadd.f32 %v890, %v1323
    %v1325 = vpop.f32.mrf.mxu0
    %1326 = vdwg.mxu0
    %1327 = vmatprep.subr.mxu0 0.0
    %1328 = vmatpush1.msra.mxu0 0.0
    %1329 = vmatprep.subr.mxu0 0.0
    %1330 = vmatpush1.msra.mxu0 0.0
    %1331 = vmatprep.subr.mxu0 0.0
    %1332 = vmatpush1.msra.mxu0 0.0
    %1333 = vmatprep.subr.mxu0 0.0
    %1334 = vmatpush1.msra.mxu0 0.0
    %1335 = vmatprep.subr.mxu0 0.0
    %1336 = vmatpush1.msra.mxu0 0.0
    %1337 = vmatprep.subr.mxu0 0.0
    %1338 = vmatpush1.msra.mxu0 0.0
    %1339 = vmatprep.subr.mxu0 0.0
    %1340 = vmatpush1.msra.mxu0 0.0
    %1341 = vmatprep.subr.mxu0 0.0
    %1342 = vmatpush1.msra.mxu0 0.0
    %1343 = vmatprep.subr.mxu0 0.0
    %1344 = vmatpush1.msra.mxu0 0.0
    %1345 = vmatprep.subr.mxu0 0.0
    %1346 = vmatpush1.msra.mxu0 0.0
    %1347 = vmatprep.subr.mxu0 0.0
    %1348 = vmatpush1.msra.mxu0 0.0
    %1349 = vmatprep.subr.mxu0 0.0
    %1350 = vmatpush1.msra.mxu0 0.0
    %1351 = vmatprep.subr.mxu0 0.0
    %1352 = vmatpush1.msra.mxu0 %v846
    %1353 = vmatprep.subr.mxu0 0.0
    %1354 = vmatpush1.msra.mxu0 %v845
    %1355 = vmatprep.subr.mxu0 0.0
    %1356 = vmatpush1.msra.mxu0 %v844
    %1357 = vmatprep.subr.mxu0 0.0
    %1358 = vmatpush1.msra.mxu0 %v843
    %1359 = vmatprep.subr.mxu0 0.0
    %1360 = vmatpush2.msra.mxu0 0.0
    %1361 = vmatprep.subr.mxu0 0.0
    %1362 = vmatpush2.msra.mxu0 0.0
    %1363 = vmatprep.subr.mxu0 0.0
    %1364 = vmatpush2.msra.mxu0 0.0
    %1365 = vmatprep.subr.mxu0 0.0
    %1366 = vmatpush2.msra.mxu0 0.0
    %1367 = vmatprep.subr.mxu0 0.0
    %1368 = vmatpush2.msra.mxu0 0.0
    %1369 = vmatprep.subr.mxu0 0.0
    %1370 = vmatpush2.msra.mxu0 0.0
    %1371 = vmatprep.subr.mxu0 0.0
    %1372 = vmatpush2.msra.mxu0 0.0
    %1373 = vmatprep.subr.mxu0 0.0
    %1374 = vmatpush2.msra.mxu0 0.0
    %1375 = vmatprep.subr.mxu0 0.0
    %1376 = vmatpush2.msra.mxu0 0.0
    %1377 = vmatprep.subr.mxu0 0.0
    %1378 = vmatpush2.msra.mxu0 0.0
    %1379 = vmatprep.subr.mxu0 0.0
    %1380 = vmatpush2.msra.mxu0 0.0
    %1381 = vmatprep.subr.mxu0 0.0
    %1382 = vmatpush2.msra.mxu0 0.0
    %1383 = vmatprep.subr.mxu0 0.0
    %1384 = vmatpush2.msra.mxu0 0.0
    %1385 = vmatprep.subr.mxu0 0.0
    %1386 = vmatpush2.msra.mxu0 0.0
    %1387 = vmatprep.subr.mxu0 0.0
    %1388 = vmatpush2.msra.mxu0 0.0
    %1389 = vmatprep.subr.mxu0 0.0
    %1390 = vmatpush2.msra.mxu0 0.0
    %1391 = vmatprep.mubr.f32.mxu0 0.0
    %1392 = vmatmul.mubr.f32.gmra.mxu0 %v537
    %v1393 = vpop.f32.mrf.mxu0
    %v1394 = vadd.f32 %v894, %v1393
    %v1395 = vpop.f32.mrf.mxu0
    %1396 = vdwg.mxu0
    %1397 = vmatprep.subr.mxu0 0.0
    %1398 = vmatpush1.msra.mxu0 0.0
    %1399 = vmatprep.subr.mxu0 0.0
    %1400 = vmatpush1.msra.mxu0 0.0
    %1401 = vmatprep.subr.mxu0 0.0
    %1402 = vmatpush1.msra.mxu0 0.0
    %1403 = vmatprep.subr.mxu0 0.0
    %1404 = vmatpush1.msra.mxu0 0.0
    %1405 = vmatprep.subr.mxu0 0.0
    %1406 = vmatpush1.msra.mxu0 0.0
    %1407 = vmatprep.subr.mxu0 0.0
    %1408 = vmatpush1.msra.mxu0 0.0
    %1409 = vmatprep.subr.mxu0 0.0
    %1410 = vmatpush1.msra.mxu0 0.0
    %1411 = vmatprep.subr.mxu0 0.0
    %1412 = vmatpush1.msra.mxu0 0.0
    %1413 = vmatprep.subr.mxu0 0.0
    %1414 = vmatpush1.msra.mxu0 0.0
    %1415 = vmatprep.subr.mxu0 0.0
    %1416 = vmatpush1.msra.mxu0 0.0
    %1417 = vmatprep.subr.mxu0 0.0
    %1418 = vmatpush1.msra.mxu0 0.0
    %1419 = vmatprep.subr.mxu0 0.0
    %1420 = vmatpush1.msra.mxu0 0.0
    %1421 = vmatprep.subr.mxu0 0.0
    %1422 = vmatpush1.msra.mxu0 %v850
    %1423 = vmatprep.subr.mxu0 0.0
    %1424 = vmatpush1.msra.mxu0 %v849
    %1425 = vmatprep.subr.mxu0 0.0
    %1426 = vmatpush1.msra.mxu0 %v848
    %1427 = vmatprep.subr.mxu0 0.0
    %1428 = vmatpush1.msra.mxu0 %v847
    %1429 = vmatprep.subr.mxu0 0.0
    %1430 = vmatpush2.msra.mxu0 0.0
    %1431 = vmatprep.subr.mxu0 0.0
    %1432 = vmatpush2.msra.mxu0 0.0
    %1433 = vmatprep.subr.mxu0 0.0
    %1434 = vmatpush2.msra.mxu0 0.0
    %1435 = vmatprep.subr.mxu0 0.0
    %1436 = vmatpush2.msra.mxu0 0.0
    %1437 = vmatprep.subr.mxu0 0.0
    %1438 = vmatpush2.msra.mxu0 0.0
    %1439 = vmatprep.subr.mxu0 0.0
    %1440 = vmatpush2.msra.mxu0 0.0
    %1441 = vmatprep.subr.mxu0 0.0
    %1442 = vmatpush2.msra.mxu0 0.0
    %1443 = vmatprep.subr.mxu0 0.0
    %1444 = vmatpush2.msra.mxu0 0.0
    %1445 = vmatprep.subr.mxu0 0.0
    %1446 = vmatpush2.msra.mxu0 0.0
    %1447 = vmatprep.subr.mxu0 0.0
    %1448 = vmatpush2.msra.mxu0 0.0
    %1449 = vmatprep.subr.mxu0 0.0
    %1450 = vmatpush2.msra.mxu0 0.0
    %1451 = vmatprep.subr.mxu0 0.0
    %1452 = vmatpush2.msra.mxu0 0.0
    %1453 = vmatprep.subr.mxu0 0.0
    %1454 = vmatpush2.msra.mxu0 0.0
    %1455 = vmatprep.subr.mxu0 0.0
    %1456 = vmatpush2.msra.mxu0 0.0
    %1457 = vmatprep.subr.mxu0 0.0
    %1458 = vmatpush2.msra.mxu0 0.0
    %1459 = vmatprep.subr.mxu0 0.0
    %1460 = vmatpush2.msra.mxu0 0.0
    %1461 = vmatprep.mubr.f32.mxu0 0.0
    %1462 = vmatmul.mubr.f32.gmra.mxu0 %v537
    %v1463 = vpop.f32.mrf.mxu0
    %v1464 = vadd.f32 %v898, %v1463
    %v1465 = vpop.f32.mrf.mxu0
    %1466 = vdwg.mxu0
    %v1467 = vld [vmem:[%s8] sm:$0xff]
    %v1468 = vld [vmem:[%s8 + $0x8] sm:$0xff]
    %v1469 = vld [vmem:[%s8 + $0x10] sm:$0xff]
    %v1470 = vld [vmem:[%s8 + $0x18] sm:$0xff]
    %v1471 = vld [vmem:[%s8 + $0x20] sm:$0xff]
    %v1472 = vld [vmem:[%s8 + $0x28] sm:$0xff]
    %v1473 = vld [vmem:[%s8 + $0x30] sm:$0xff]
    %v1474 = vld [vmem:[%s8 + $0x38] sm:$0xff]
    %v1475 = vld [vmem:[%s8 + $0x40] sm:$0xff]
    %v1476 = vld [vmem:[%s8 + $0x48] sm:$0xff]
    %v1477 = vld [vmem:[%s8 + $0x50] sm:$0xff]
    %v1478 = vld [vmem:[%s8 + $0x58] sm:$0xff]
    %v1479 = vld [vmem:[%s8 + $0x60] sm:$0xff]
    %v1480 = vld [vmem:[%s8 + $0x68] sm:$0xff]
    %v1481 = vld [vmem:[%s8 + $0x70] sm:$0xff]
    %v1482 = vld [vmem:[%s8 + $0x78] sm:$0xff]
    %v1483 = vld [vmem:[%s8 + $0x80] sm:$0xff]
    %v1484 = vld [vmem:[%s8 + $0x88] sm:$0xff]
    %v1485 = vld [vmem:[%s8 + $0x90] sm:$0xff]
    %v1486 = vld [vmem:[%s8 + $0x98] sm:$0xff]
    %v1487 = vld [vmem:[%s8 + $0xa0] sm:$0xff]
    %v1488 = vld [vmem:[%s8 + $0xa8] sm:$0xff]
    %v1489 = vld [vmem:[%s8 + $0xb0] sm:$0xff]
    %v1490 = vld [vmem:[%s8 + $0xb8] sm:$0xff]
    %v1491 = vld [vmem:[%s8 + $0xc0] sm:$0xff]
    %v1492 = vld [vmem:[%s8 + $0xc8] sm:$0xff]
    %v1493 = vld [vmem:[%s8 + $0xd0] sm:$0xff]
    %v1494 = vld [vmem:[%s8 + $0xd8] sm:$0xff]
    %v1495 = vld [vmem:[%s8 + $0xe0] sm:$0xff]
    %v1496 = vld [vmem:[%s8 + $0xe8] sm:$0xff]
    %v1497 = vld [vmem:[%s8 + $0xf0] sm:$0xff]
    %v1498 = vld [vmem:[%s8 + $0xf8] sm:$0xff]
    %v1499 = vld [vmem:[%s9] sm:$0x1]
    %v1500 = vld [vmem:[%s9 + $0x1] sm:$0x1]
    %v1501 = vld [vmem:[%s9 + $0x2] sm:$0x1]
    %v1502 = vld [vmem:[%s9 + $0x3] sm:$0x1]
    %v1503 = vld [vmem:[%s9 + $0x4] sm:$0x1]
    %v1504 = vld [vmem:[%s9 + $0x5] sm:$0x1]
    %v1505 = vld [vmem:[%s9 + $0x6] sm:$0x1]
    %v1506 = vld [vmem:[%s9 + $0x7] sm:$0x1]
    %v1515 = vlaneseq
    %v1516 = vshrl.u32 %v1515, 7
    %v1517 = vsub.s32 0, %v1516
    %v1518 = vrot.slane %v1499, %v1517
    %v1519 = vlaneseq
    %v1520 = vshrl.u32 %v1519, 7
    %v1521 = vsub.s32 0, %v1520
    %v1522 = vrot.slane %v1500, %v1521
    %v1523 = vlaneseq
    %v1524 = vshrl.u32 %v1523, 7
    %v1525 = vsub.s32 0, %v1524
    %v1526 = vrot.slane %v1501, %v1525
    %v1527 = vlaneseq
    %v1528 = vshrl.u32 %v1527, 7
    %v1529 = vsub.s32 0, %v1528
    %v1530 = vrot.slane %v1502, %v1529
    %v1531 = vlaneseq
    %v1532 = vshrl.u32 %v1531, 7
    %v1533 = vsub.s32 0, %v1532
    %v1534 = vrot.slane %v1503, %v1533
    %v1535 = vlaneseq
    %v1536 = vshrl.u32 %v1535, 7
    %v1537 = vsub.s32 0, %v1536
    %v1538 = vrot.slane %v1504, %v1537
    %v1539 = vlaneseq
    %v1540 = vshrl.u32 %v1539, 7
    %v1541 = vsub.s32 0, %v1540
    %v1542 = vrot.slane %v1505, %v1541
    %v1543 = vlaneseq
    %v1544 = vshrl.u32 %v1543, 7
    %v1545 = vsub.s32 0, %v1544
    %v1546 = vrot.slane %v1506, %v1545
    %1555 = vmatprep.subr.mxu0 0.0
    %1556 = vmatpush1.msra.mxu0 0.0
    %1557 = vmatprep.subr.mxu0 0.0
    %1558 = vmatpush1.msra.mxu0 0.0
    %1559 = vmatprep.subr.mxu0 0.0
    %1560 = vmatpush1.msra.mxu0 0.0
    %1561 = vmatprep.subr.mxu0 0.0
    %1562 = vmatpush1.msra.mxu0 0.0
    %1563 = vmatprep.subr.mxu0 0.0
    %1564 = vmatpush1.msra.mxu0 0.0
    %1565 = vmatprep.subr.mxu0 0.0
    %1566 = vmatpush1.msra.mxu0 0.0
    %1567 = vmatprep.subr.mxu0 0.0
    %1568 = vmatpush1.msra.mxu0 0.0
    %1569 = vmatprep.subr.mxu0 0.0
    %1570 = vmatpush1.msra.mxu0 0.0
    %1571 = vmatprep.subr.mxu0 0.0
    %1572 = vmatpush1.msra.mxu0 0.0
    %1573 = vmatprep.subr.mxu0 0.0
    %1574 = vmatpush1.msra.mxu0 0.0
    %1575 = vmatprep.subr.mxu0 0.0
    %1576 = vmatpush1.msra.mxu0 0.0
    %1577 = vmatprep.subr.mxu0 0.0
    %1578 = vmatpush1.msra.mxu0 0.0
    %1579 = vmatprep.subr.mxu0 0.0
    %1580 = vmatpush1.msra.mxu0 %v1470
    %1581 = vmatprep.subr.mxu0 0.0
    %1582 = vmatpush1.msra.mxu0 %v1469
    %1583 = vmatprep.subr.mxu0 0.0
    %1584 = vmatpush1.msra.mxu0 %v1468
    %1585 = vmatprep.subr.mxu0 0.0
    %1586 = vmatpush1.msra.mxu0 %v1467
    %1587 = vmatprep.subr.mxu0 0.0
    %1588 = vmatpush2.msra.mxu0 0.0
    %1589 = vmatprep.subr.mxu0 0.0
    %1590 = vmatpush2.msra.mxu0 0.0
    %1591 = vmatprep.subr.mxu0 0.0
    %1592 = vmatpush2.msra.mxu0 0.0
    %1593 = vmatprep.subr.mxu0 0.0
    %1594 = vmatpush2.msra.mxu0 0.0
    %1595 = vmatprep.subr.mxu0 0.0
    %1596 = vmatpush2.msra.mxu0 0.0
    %1597 = vmatprep.subr.mxu0 0.0
    %1598 = vmatpush2.msra.mxu0 0.0
    %1599 = vmatprep.subr.mxu0 0.0
    %1600 = vmatpush2.msra.mxu0 0.0
    %1601 = vmatprep.subr.mxu0 0.0
    %1602 = vmatpush2.msra.mxu0 0.0
    %1603 = vmatprep.subr.mxu0 0.0
    %1604 = vmatpush2.msra.mxu0 0.0
    %1605 = vmatprep.subr.mxu0 0.0
    %1606 = vmatpush2.msra.mxu0 0.0
    %1607 = vmatprep.subr.mxu0 0.0
    %1608 = vmatpush2.msra.mxu0 0.0
    %1609 = vmatprep.subr.mxu0 0.0
    %1610 = vmatpush2.msra.mxu0 0.0
    %1611 = vmatprep.subr.mxu0 0.0
    %1612 = vmatpush2.msra.mxu0 0.0
    %1613 = vmatprep.subr.mxu0 0.0
    %1614 = vmatpush2.msra.mxu0 0.0
    %1615 = vmatprep.subr.mxu0 0.0
    %1616 = vmatpush2.msra.mxu0 0.0
    %1617 = vmatprep.subr.mxu0 0.0
    %1618 = vmatpush2.msra.mxu0 0.0
    %1619 = vmatprep.mubr.f32.mxu0 0.0
    %1620 = vmatmul.mubr.f32.gmra.mxu0 %v254
    %v1621 = vpop.f32.mrf.mxu0
    %v1622 = vadd.f32 %v1518, %v1621
    %v1623 = vpop.f32.mrf.mxu0
    %1624 = vdwg.mxu0
    %1625 = vmatprep.subr.mxu0 0.0
    %1626 = vmatpush1.msra.mxu0 0.0
    %1627 = vmatprep.subr.mxu0 0.0
    %1628 = vmatpush1.msra.mxu0 0.0
    %1629 = vmatprep.subr.mxu0 0.0
    %1630 = vmatpush1.msra.mxu0 0.0
    %1631 = vmatprep.subr.mxu0 0.0
    %1632 = vmatpush1.msra.mxu0 0.0
    %1633 = vmatprep.subr.mxu0 0.0
    %1634 = vmatpush1.msra.mxu0 0.0
    %1635 = vmatprep.subr.mxu0 0.0
    %1636 = vmatpush1.msra.mxu0 0.0
    %1637 = vmatprep.subr.mxu0 0.0
    %1638 = vmatpush1.msra.mxu0 0.0
    %1639 = vmatprep.subr.mxu0 0.0
    %1640 = vmatpush1.msra.mxu0 0.0
    %1641 = vmatprep.subr.mxu0 0.0
    %1642 = vmatpush1.msra.mxu0 0.0
    %1643 = vmatprep.subr.mxu0 0.0
    %1644 = vmatpush1.msra.mxu0 0.0
    %1645 = vmatprep.subr.mxu0 0.0
    %1646 = vmatpush1.msra.mxu0 0.0
    %1647 = vmatprep.subr.mxu0 0.0
    %1648 = vmatpush1.msra.mxu0 0.0
    %1649 = vmatprep.subr.mxu0 0.0
    %1650 = vmatpush1.msra.mxu0 %v1474
    %1651 = vmatprep.subr.mxu0 0.0
    %1652 = vmatpush1.msra.mxu0 %v1473
    %1653 = vmatprep.subr.mxu0 0.0
    %1654 = vmatpush1.msra.mxu0 %v1472
    %1655 = vmatprep.subr.mxu0 0.0
    %1656 = vmatpush1.msra.mxu0 %v1471
    %1657 = vmatprep.subr.mxu0 0.0
    %1658 = vmatpush2.msra.mxu0 0.0
    %1659 = vmatprep.subr.mxu0 0.0
    %1660 = vmatpush2.msra.mxu0 0.0
    %1661 = vmatprep.subr.mxu0 0.0
    %1662 = vmatpush2.msra.mxu0 0.0
    %1663 = vmatprep.subr.mxu0 0.0
    %1664 = vmatpush2.msra.mxu0 0.0
    %1665 = vmatprep.subr.mxu0 0.0
    %1666 = vmatpush2.msra.mxu0 0.0
    %1667 = vmatprep.subr.mxu0 0.0
    %1668 = vmatpush2.msra.mxu0 0.0
    %1669 = vmatprep.subr.mxu0 0.0
    %1670 = vmatpush2.msra.mxu0 0.0
    %1671 = vmatprep.subr.mxu0 0.0
    %1672 = vmatpush2.msra.mxu0 0.0
    %1673 = vmatprep.subr.mxu0 0.0
    %1674 = vmatpush2.msra.mxu0 0.0
    %1675 = vmatprep.subr.mxu0 0.0
    %1676 = vmatpush2.msra.mxu0 0.0
    %1677 = vmatprep.subr.mxu0 0.0
    %1678 = vmatpush2.msra.mxu0 0.0
    %1679 = vmatprep.subr.mxu0 0.0
    %1680 = vmatpush2.msra.mxu0 0.0
    %1681 = vmatprep.subr.mxu0 0.0
    %1682 = vmatpush2.msra.mxu0 0.0
    %1683 = vmatprep.subr.mxu0 0.0
    %1684 = vmatpush2.msra.mxu0 0.0
    %1685 = vmatprep.subr.mxu0 0.0
    %1686 = vmatpush2.msra.mxu0 0.0
    %1687 = vmatprep.subr.mxu0 0.0
    %1688 = vmatpush2.msra.mxu0 0.0
    %1689 = vmatprep.mubr.f32.mxu0 0.0
    %1690 = vmatmul.mubr.f32.gmra.mxu0 %v254
    %v1691 = vpop.f32.mrf.mxu0
    %v1692 = vadd.f32 %v1522, %v1691
    %v1693 = vpop.f32.mrf.mxu0
    %1694 = vdwg.mxu0
    %1695 = vmatprep.subr.mxu0 0.0
    %1696 = vmatpush1.msra.mxu0 0.0
    %1697 = vmatprep.subr.mxu0 0.0
    %1698 = vmatpush1.msra.mxu0 0.0
    %1699 = vmatprep.subr.mxu0 0.0
    %1700 = vmatpush1.msra.mxu0 0.0
    %1701 = vmatprep.subr.mxu0 0.0
    %1702 = vmatpush1.msra.mxu0 0.0
    %1703 = vmatprep.subr.mxu0 0.0
    %1704 = vmatpush1.msra.mxu0 0.0
    %1705 = vmatprep.subr.mxu0 0.0
    %1706 = vmatpush1.msra.mxu0 0.0
    %1707 = vmatprep.subr.mxu0 0.0
    %1708 = vmatpush1.msra.mxu0 0.0
    %1709 = vmatprep.subr.mxu0 0.0
    %1710 = vmatpush1.msra.mxu0 0.0
    %1711 = vmatprep.subr.mxu0 0.0
    %1712 = vmatpush1.msra.mxu0 0.0
    %1713 = vmatprep.subr.mxu0 0.0
    %1714 = vmatpush1.msra.mxu0 0.0
    %1715 = vmatprep.subr.mxu0 0.0
    %1716 = vmatpush1.msra.mxu0 0.0
    %1717 = vmatprep.subr.mxu0 0.0
    %1718 = vmatpush1.msra.mxu0 0.0
    %1719 = vmatprep.subr.mxu0 0.0
    %1720 = vmatpush1.msra.mxu0 %v1478
    %1721 = vmatprep.subr.mxu0 0.0
    %1722 = vmatpush1.msra.mxu0 %v1477
    %1723 = vmatprep.subr.mxu0 0.0
    %1724 = vmatpush1.msra.mxu0 %v1476
    %1725 = vmatprep.subr.mxu0 0.0
    %1726 = vmatpush1.msra.mxu0 %v1475
    %1727 = vmatprep.subr.mxu0 0.0
    %1728 = vmatpush2.msra.mxu0 0.0
    %1729 = vmatprep.subr.mxu0 0.0
    %1730 = vmatpush2.msra.mxu0 0.0
    %1731 = vmatprep.subr.mxu0 0.0
    %1732 = vmatpush2.msra.mxu0 0.0
    %1733 = vmatprep.subr.mxu0 0.0
    %1734 = vmatpush2.msra.mxu0 0.0
    %1735 = vmatprep.subr.mxu0 0.0
    %1736 = vmatpush2.msra.mxu0 0.0
    %1737 = vmatprep.subr.mxu0 0.0
    %1738 = vmatpush2.msra.mxu0 0.0
    %1739 = vmatprep.subr.mxu0 0.0
    %1740 = vmatpush2.msra.mxu0 0.0
    %1741 = vmatprep.subr.mxu0 0.0
    %1742 = vmatpush2.msra.mxu0 0.0
    %1743 = vmatprep.subr.mxu0 0.0
    %1744 = vmatpush2.msra.mxu0 0.0
    %1745 = vmatprep.subr.mxu0 0.0
    %1746 = vmatpush2.msra.mxu0 0.0
    %1747 = vmatprep.subr.mxu0 0.0
    %1748 = vmatpush2.msra.mxu0 0.0
    %1749 = vmatprep.subr.mxu0 0.0
    %1750 = vmatpush2.msra.mxu0 0.0
    %1751 = vmatprep.subr.mxu0 0.0
    %1752 = vmatpush2.msra.mxu0 0.0
    %1753 = vmatprep.subr.mxu0 0.0
    %1754 = vmatpush2.msra.mxu0 0.0
    %1755 = vmatprep.subr.mxu0 0.0
    %1756 = vmatpush2.msra.mxu0 0.0
    %1757 = vmatprep.subr.mxu0 0.0
    %1758 = vmatpush2.msra.mxu0 0.0
    %1759 = vmatprep.mubr.f32.mxu0 0.0
    %1760 = vmatmul.mubr.f32.gmra.mxu0 %v254
    %v1761 = vpop.f32.mrf.mxu0
    %v1762 = vadd.f32 %v1526, %v1761
    %v1763 = vpop.f32.mrf.mxu0
    %1764 = vdwg.mxu0
    %1765 = vmatprep.subr.mxu0 0.0
    %1766 = vmatpush1.msra.mxu0 0.0
    %1767 = vmatprep.subr.mxu0 0.0
    %1768 = vmatpush1.msra.mxu0 0.0
    %1769 = vmatprep.subr.mxu0 0.0
    %1770 = vmatpush1.msra.mxu0 0.0
    %1771 = vmatprep.subr.mxu0 0.0
    %1772 = vmatpush1.msra.mxu0 0.0
    %1773 = vmatprep.subr.mxu0 0.0
    %1774 = vmatpush1.msra.mxu0 0.0
    %1775 = vmatprep.subr.mxu0 0.0
    %1776 = vmatpush1.msra.mxu0 0.0
    %1777 = vmatprep.subr.mxu0 0.0
    %1778 = vmatpush1.msra.mxu0 0.0
    %1779 = vmatprep.subr.mxu0 0.0
    %1780 = vmatpush1.msra.mxu0 0.0
    %1781 = vmatprep.subr.mxu0 0.0
    %1782 = vmatpush1.msra.mxu0 0.0
    %1783 = vmatprep.subr.mxu0 0.0
    %1784 = vmatpush1.msra.mxu0 0.0
    %1785 = vmatprep.subr.mxu0 0.0
    %1786 = vmatpush1.msra.mxu0 0.0
    %1787 = vmatprep.subr.mxu0 0.0
    %1788 = vmatpush1.msra.mxu0 0.0
    %1789 = vmatprep.subr.mxu0 0.0
    %1790 = vmatpush1.msra.mxu0 %v1482
    %1791 = vmatprep.subr.mxu0 0.0
    %1792 = vmatpush1.msra.mxu0 %v1481
    %1793 = vmatprep.subr.mxu0 0.0
    %1794 = vmatpush1.msra.mxu0 %v1480
    %1795 = vmatprep.subr.mxu0 0.0
    %1796 = vmatpush1.msra.mxu0 %v1479
    %1797 = vmatprep.subr.mxu0 0.0
    %1798 = vmatpush2.msra.mxu0 0.0
    %1799 = vmatprep.subr.mxu0 0.0
    %1800 = vmatpush2.msra.mxu0 0.0
    %1801 = vmatprep.subr.mxu0 0.0
    %1802 = vmatpush2.msra.mxu0 0.0
    %1803 = vmatprep.subr.mxu0 0.0
    %1804 = vmatpush2.msra.mxu0 0.0
    %1805 = vmatprep.subr.mxu0 0.0
    %1806 = vmatpush2.msra.mxu0 0.0
    %1807 = vmatprep.subr.mxu0 0.0
    %1808 = vmatpush2.msra.mxu0 0.0
    %1809 = vmatprep.subr.mxu0 0.0
    %1810 = vmatpush2.msra.mxu0 0.0
    %1811 = vmatprep.subr.mxu0 0.0
    %1812 = vmatpush2.msra.mxu0 0.0
    %1813 = vmatprep.subr.mxu0 0.0
    %1814 = vmatpush2.msra.mxu0 0.0
    %1815 = vmatprep.subr.mxu0 0.0
    %1816 = vmatpush2.msra.mxu0 0.0
    %1817 = vmatprep.subr.mxu0 0.0
    %1818 = vmatpush2.msra.mxu0 0.0
    %1819 = vmatprep.subr.mxu0 0.0
    %1820 = vmatpush2.msra.mxu0 0.0
    %1821 = vmatprep.subr.mxu0 0.0
    %1822 = vmatpush2.msra.mxu0 0.0
    %1823 = vmatprep.subr.mxu0 0.0
    %1824 = vmatpush2.msra.mxu0 0.0
    %1825 = vmatprep.subr.mxu0 0.0
    %1826 = vmatpush2.msra.mxu0 0.0
    %1827 = vmatprep.subr.mxu0 0.0
    %1828 = vmatpush2.msra.mxu0 0.0
    %1829 = vmatprep.mubr.f32.mxu0 0.0
    %1830 = vmatmul.mubr.f32.gmra.mxu0 %v254
    %v1831 = vpop.f32.mrf.mxu0
    %v1832 = vadd.f32 %v1530, %v1831
    %v1833 = vpop.f32.mrf.mxu0
    %1834 = vdwg.mxu0
    %1835 = vmatprep.subr.mxu0 0.0
    %1836 = vmatpush1.msra.mxu0 0.0
    %1837 = vmatprep.subr.mxu0 0.0
    %1838 = vmatpush1.msra.mxu0 0.0
    %1839 = vmatprep.subr.mxu0 0.0
    %1840 = vmatpush1.msra.mxu0 0.0
    %1841 = vmatprep.subr.mxu0 0.0
    %1842 = vmatpush1.msra.mxu0 0.0
    %1843 = vmatprep.subr.mxu0 0.0
    %1844 = vmatpush1.msra.mxu0 0.0
    %1845 = vmatprep.subr.mxu0 0.0
    %1846 = vmatpush1.msra.mxu0 0.0
    %1847 = vmatprep.subr.mxu0 0.0
    %1848 = vmatpush1.msra.mxu0 0.0
    %1849 = vmatprep.subr.mxu0 0.0
    %1850 = vmatpush1.msra.mxu0 0.0
    %1851 = vmatprep.subr.mxu0 0.0
    %1852 = vmatpush1.msra.mxu0 0.0
    %1853 = vmatprep.subr.mxu0 0.0
    %1854 = vmatpush1.msra.mxu0 0.0
    %1855 = vmatprep.subr.mxu0 0.0
    %1856 = vmatpush1.msra.mxu0 0.0
    %1857 = vmatprep.subr.mxu0 0.0
    %1858 = vmatpush1.msra.mxu0 0.0
    %1859 = vmatprep.subr.mxu0 0.0
    %1860 = vmatpush1.msra.mxu0 %v1486
    %1861 = vmatprep.subr.mxu0 0.0
    %1862 = vmatpush1.msra.mxu0 %v1485
    %1863 = vmatprep.subr.mxu0 0.0
    %1864 = vmatpush1.msra.mxu0 %v1484
    %1865 = vmatprep.subr.mxu0 0.0
    %1866 = vmatpush1.msra.mxu0 %v1483
    %1867 = vmatprep.subr.mxu0 0.0
    %1868 = vmatpush2.msra.mxu0 0.0
    %1869 = vmatprep.subr.mxu0 0.0
    %1870 = vmatpush2.msra.mxu0 0.0
    %1871 = vmatprep.subr.mxu0 0.0
    %1872 = vmatpush2.msra.mxu0 0.0
    %1873 = vmatprep.subr.mxu0 0.0
    %1874 = vmatpush2.msra.mxu0 0.0
    %1875 = vmatprep.subr.mxu0 0.0
    %1876 = vmatpush2.msra.mxu0 0.0
    %1877 = vmatprep.subr.mxu0 0.0
    %1878 = vmatpush2.msra.mxu0 0.0
    %1879 = vmatprep.subr.mxu0 0.0
    %1880 = vmatpush2.msra.mxu0 0.0
    %1881 = vmatprep.subr.mxu0 0.0
    %1882 = vmatpush2.msra.mxu0 0.0
    %1883 = vmatprep.subr.mxu0 0.0
    %1884 = vmatpush2.msra.mxu0 0.0
    %1885 = vmatprep.subr.mxu0 0.0
    %1886 = vmatpush2.msra.mxu0 0.0
    %1887 = vmatprep.subr.mxu0 0.0
    %1888 = vmatpush2.msra.mxu0 0.0
    %1889 = vmatprep.subr.mxu0 0.0
    %1890 = vmatpush2.msra.mxu0 0.0
    %1891 = vmatprep.subr.mxu0 0.0
    %1892 = vmatpush2.msra.mxu0 0.0
    %1893 = vmatprep.subr.mxu0 0.0
    %1894 = vmatpush2.msra.mxu0 0.0
    %1895 = vmatprep.subr.mxu0 0.0
    %1896 = vmatpush2.msra.mxu0 0.0
    %1897 = vmatprep.subr.mxu0 0.0
    %1898 = vmatpush2.msra.mxu0 0.0
    %1899 = vmatprep.mubr.f32.mxu0 0.0
    %1900 = vmatmul.mubr.f32.gmra.mxu0 %v537
    %v1901 = vpop.f32.mrf.mxu0
    %v1902 = vadd.f32 %v1534, %v1901
    %v1903 = vpop.f32.mrf.mxu0
    %1904 = vdwg.mxu0
    %1905 = vmatprep.subr.mxu0 0.0
    %1906 = vmatpush1.msra.mxu0 0.0
    %1907 = vmatprep.subr.mxu0 0.0
    %1908 = vmatpush1.msra.mxu0 0.0
    %1909 = vmatprep.subr.mxu0 0.0
    %1910 = vmatpush1.msra.mxu0 0.0
    %1911 = vmatprep.subr.mxu0 0.0
    %1912 = vmatpush1.msra.mxu0 0.0
    %1913 = vmatprep.subr.mxu0 0.0
    %1914 = vmatpush1.msra.mxu0 0.0
    %1915 = vmatprep.subr.mxu0 0.0
    %1916 = vmatpush1.msra.mxu0 0.0
    %1917 = vmatprep.subr.mxu0 0.0
    %1918 = vmatpush1.msra.mxu0 0.0
    %1919 = vmatprep.subr.mxu0 0.0
    %1920 = vmatpush1.msra.mxu0 0.0
    %1921 = vmatprep.subr.mxu0 0.0
    %1922 = vmatpush1.msra.mxu0 0.0
    %1923 = vmatprep.subr.mxu0 0.0
    %1924 = vmatpush1.msra.mxu0 0.0
    %1925 = vmatprep.subr.mxu0 0.0
    %1926 = vmatpush1.msra.mxu0 0.0
    %1927 = vmatprep.subr.mxu0 0.0
    %1928 = vmatpush1.msra.mxu0 0.0
    %1929 = vmatprep.subr.mxu0 0.0
    %1930 = vmatpush1.msra.mxu0 %v1490
    %1931 = vmatprep.subr.mxu0 0.0
    %1932 = vmatpush1.msra.mxu0 %v1489
    %1933 = vmatprep.subr.mxu0 0.0
    %1934 = vmatpush1.msra.mxu0 %v1488
    %1935 = vmatprep.subr.mxu0 0.0
    %1936 = vmatpush1.msra.mxu0 %v1487
    %1937 = vmatprep.subr.mxu0 0.0
    %1938 = vmatpush2.msra.mxu0 0.0
    %1939 = vmatprep.subr.mxu0 0.0
    %1940 = vmatpush2.msra.mxu0 0.0
    %1941 = vmatprep.subr.mxu0 0.0
    %1942 = vmatpush2.msra.mxu0 0.0
    %1943 = vmatprep.subr.mxu0 0.0
    %1944 = vmatpush2.msra.mxu0 0.0
    %1945 = vmatprep.subr.mxu0 0.0
    %1946 = vmatpush2.msra.mxu0 0.0
    %1947 = vmatprep.subr.mxu0 0.0
    %1948 = vmatpush2.msra.mxu0 0.0
    %1949 = vmatprep.subr.mxu0 0.0
    %1950 = vmatpush2.msra.mxu0 0.0
    %1951 = vmatprep.subr.mxu0 0.0
    %1952 = vmatpush2.msra.mxu0 0.0
    %1953 = vmatprep.subr.mxu0 0.0
    %1954 = vmatpush2.msra.mxu0 0.0
    %1955 = vmatprep.subr.mxu0 0.0
    %1956 = vmatpush2.msra.mxu0 0.0
    %1957 = vmatprep.subr.mxu0 0.0
    %1958 = vmatpush2.msra.mxu0 0.0
    %1959 = vmatprep.subr.mxu0 0.0
    %1960 = vmatpush2.msra.mxu0 0.0
    %1961 = vmatprep.subr.mxu0 0.0
    %1962 = vmatpush2.msra.mxu0 0.0
    %1963 = vmatprep.subr.mxu0 0.0
    %1964 = vmatpush2.msra.mxu0 0.0
    %1965 = vmatprep.subr.mxu0 0.0
    %1966 = vmatpush2.msra.mxu0 0.0
    %1967 = vmatprep.subr.mxu0 0.0
    %1968 = vmatpush2.msra.mxu0 0.0
    %1969 = vmatprep.mubr.f32.mxu0 0.0
    %1970 = vmatmul.mubr.f32.gmra.mxu0 %v537
    %v1971 = vpop.f32.mrf.mxu0
    %v1972 = vadd.f32 %v1538, %v1971
    %v1973 = vpop.f32.mrf.mxu0
    %1974 = vdwg.mxu0
    %1975 = vmatprep.subr.mxu0 0.0
    %1976 = vmatpush1.msra.mxu0 0.0
    %1977 = vmatprep.subr.mxu0 0.0
    %1978 = vmatpush1.msra.mxu0 0.0
    %1979 = vmatprep.subr.mxu0 0.0
    %1980 = vmatpush1.msra.mxu0 0.0
    %1981 = vmatprep.subr.mxu0 0.0
    %1982 = vmatpush1.msra.mxu0 0.0
    %1983 = vmatprep.subr.mxu0 0.0
    %1984 = vmatpush1.msra.mxu0 0.0
    %1985 = vmatprep.subr.mxu0 0.0
    %1986 = vmatpush1.msra.mxu0 0.0
    %1987 = vmatprep.subr.mxu0 0.0
    %1988 = vmatpush1.msra.mxu0 0.0
    %1989 = vmatprep.subr.mxu0 0.0
    %1990 = vmatpush1.msra.mxu0 0.0
    %1991 = vmatprep.subr.mxu0 0.0
    %1992 = vmatpush1.msra.mxu0 0.0
    %1993 = vmatprep.subr.mxu0 0.0
    %1994 = vmatpush1.msra.mxu0 0.0
    %1995 = vmatprep.subr.mxu0 0.0
    %1996 = vmatpush1.msra.mxu0 0.0
    %1997 = vmatprep.subr.mxu0 0.0
    %1998 = vmatpush1.msra.mxu0 0.0
    %1999 = vmatprep.subr.mxu0 0.0
    %2000 = vmatpush1.msra.mxu0 %v1494
    %2001 = vmatprep.subr.mxu0 0.0
    %2002 = vmatpush1.msra.mxu0 %v1493
    %2003 = vmatprep.subr.mxu0 0.0
    %2004 = vmatpush1.msra.mxu0 %v1492
    %2005 = vmatprep.subr.mxu0 0.0
    %2006 = vmatpush1.msra.mxu0 %v1491
    %2007 = vmatprep.subr.mxu0 0.0
    %2008 = vmatpush2.msra.mxu0 0.0
    %2009 = vmatprep.subr.mxu0 0.0
    %2010 = vmatpush2.msra.mxu0 0.0
    %2011 = vmatprep.subr.mxu0 0.0
    %2012 = vmatpush2.msra.mxu0 0.0
    %2013 = vmatprep.subr.mxu0 0.0
    %2014 = vmatpush2.msra.mxu0 0.0
    %2015 = vmatprep.subr.mxu0 0.0
    %2016 = vmatpush2.msra.mxu0 0.0
    %2017 = vmatprep.subr.mxu0 0.0
    %2018 = vmatpush2.msra.mxu0 0.0
    %2019 = vmatprep.subr.mxu0 0.0
    %2020 = vmatpush2.msra.mxu0 0.0
    %2021 = vmatprep.subr.mxu0 0.0
    %2022 = vmatpush2.msra.mxu0 0.0
    %2023 = vmatprep.subr.mxu0 0.0
    %2024 = vmatpush2.msra.mxu0 0.0
    %2025 = vmatprep.subr.mxu0 0.0
    %2026 = vmatpush2.msra.mxu0 0.0
    %2027 = vmatprep.subr.mxu0 0.0
    %2028 = vmatpush2.msra.mxu0 0.0
    %2029 = vmatprep.subr.mxu0 0.0
    %2030 = vmatpush2.msra.mxu0 0.0
    %2031 = vmatprep.subr.mxu0 0.0
    %2032 = vmatpush2.msra.mxu0 0.0
    %2033 = vmatprep.subr.mxu0 0.0
    %2034 = vmatpush2.msra.mxu0 0.0
    %2035 = vmatprep.subr.mxu0 0.0
    %2036 = vmatpush2.msra.mxu0 0.0
    %2037 = vmatprep.subr.mxu0 0.0
    %2038 = vmatpush2.msra.mxu0 0.0
    %2039 = vmatprep.mubr.f32.mxu0 0.0
    %2040 = vmatmul.mubr.f32.gmra.mxu0 %v537
    %v2041 = vpop.f32.mrf.mxu0
    %v2042 = vadd.f32 %v1542, %v2041
    %v2043 = vpop.f32.mrf.mxu0
    %2044 = vdwg.mxu0
    %2045 = vmatprep.subr.mxu0 0.0
    %2046 = vmatpush1.msra.mxu0 0.0
    %2047 = vmatprep.subr.mxu0 0.0
    %2048 = vmatpush1.msra.mxu0 0.0
    %2049 = vmatprep.subr.mxu0 0.0
    %2050 = vmatpush1.msra.mxu0 0.0
    %2051 = vmatprep.subr.mxu0 0.0
    %2052 = vmatpush1.msra.mxu0 0.0
    %2053 = vmatprep.subr.mxu0 0.0
    %2054 = vmatpush1.msra.mxu0 0.0
    %2055 = vmatprep.subr.mxu0 0.0
    %2056 = vmatpush1.msra.mxu0 0.0
    %2057 = vmatprep.subr.mxu0 0.0
    %2058 = vmatpush1.msra.mxu0 0.0
    %2059 = vmatprep.subr.mxu0 0.0
    %2060 = vmatpush1.msra.mxu0 0.0
    %2061 = vmatprep.subr.mxu0 0.0
    %2062 = vmatpush1.msra.mxu0 0.0
    %2063 = vmatprep.subr.mxu0 0.0
    %2064 = vmatpush1.msra.mxu0 0.0
    %2065 = vmatprep.subr.mxu0 0.0
    %2066 = vmatpush1.msra.mxu0 0.0
    %2067 = vmatprep.subr.mxu0 0.0
    %2068 = vmatpush1.msra.mxu0 0.0
    %2069 = vmatprep.subr.mxu0 0.0
    %2070 = vmatpush1.msra.mxu0 %v1498
    %2071 = vmatprep.subr.mxu0 0.0
    %2072 = vmatpush1.msra.mxu0 %v1497
    %2073 = vmatprep.subr.mxu0 0.0
    %2074 = vmatpush1.msra.mxu0 %v1496
    %2075 = vmatprep.subr.mxu0 0.0
    %2076 = vmatpush1.msra.mxu0 %v1495
    %2077 = vmatprep.subr.mxu0 0.0
    %2078 = vmatpush2.msra.mxu0 0.0
    %2079 = vmatprep.subr.mxu0 0.0
    %2080 = vmatpush2.msra.mxu0 0.0
    %2081 = vmatprep.subr.mxu0 0.0
    %2082 = vmatpush2.msra.mxu0 0.0
    %2083 = vmatprep.subr.mxu0 0.0
    %2084 = vmatpush2.msra.mxu0 0.0
    %2085 = vmatprep.subr.mxu0 0.0
    %2086 = vmatpush2.msra.mxu0 0.0
    %2087 = vmatprep.subr.mxu0 0.0
    %2088 = vmatpush2.msra.mxu0 0.0
    %2089 = vmatprep.subr.mxu0 0.0
    %2090 = vmatpush2.msra.mxu0 0.0
    %2091 = vmatprep.subr.mxu0 0.0
    %2092 = vmatpush2.msra.mxu0 0.0
    %2093 = vmatprep.subr.mxu0 0.0
    %2094 = vmatpush2.msra.mxu0 0.0
    %2095 = vmatprep.subr.mxu0 0.0
    %2096 = vmatpush2.msra.mxu0 0.0
    %2097 = vmatprep.subr.mxu0 0.0
    %2098 = vmatpush2.msra.mxu0 0.0
    %2099 = vmatprep.subr.mxu0 0.0
    %2100 = vmatpush2.msra.mxu0 0.0
    %2101 = vmatprep.subr.mxu0 0.0
    %2102 = vmatpush2.msra.mxu0 0.0
    %2103 = vmatprep.subr.mxu0 0.0
    %2104 = vmatpush2.msra.mxu0 0.0
    %2105 = vmatprep.subr.mxu0 0.0
    %2106 = vmatpush2.msra.mxu0 0.0
    %2107 = vmatprep.subr.mxu0 0.0
    %2108 = vmatpush2.msra.mxu0 0.0
    %2109 = vmatprep.mubr.f32.mxu0 0.0
    %2110 = vmatmul.mubr.f32.gmra.mxu0 %v537
    %v2111 = vpop.f32.mrf.mxu0
    %v2112 = vadd.f32 %v1546, %v2111
    %v2113 = vpop.f32.mrf.mxu0
    %2114 = vdwg.mxu0
    %v2115 = vmul.f32 %v323, 0.25
    %v2116 = vmul.f32 %v393, 0.25
    %v2117 = vmul.f32 %v463, 0.25
    %v2118 = vmul.f32 %v533, 0.25
    %v2119 = vmul.f32 %v606, 0.25
    %v2120 = vmul.f32 %v676, 0.25
    %v2121 = vmul.f32 %v746, 0.25
    %v2122 = vmul.f32 %v816, 0.25
    %vm2123 = vcmask 130048
    %v2125 = vsel %vm2123, %v2115, 0
    %v2128 = vsel %vm2123, %v974, 0
    %2130 = vmatprep.subr.mxu0 0.0
    %2131 = vmatpush1.xpose.msra.mxu0 0.0
    %2132 = vmatprep.subr.mxu0 0.0
    %2133 = vmatpush1.xpose.msra.mxu0 0.0
    %2134 = vmatprep.subr.mxu0 0.0
    %2135 = vmatpush1.xpose.msra.mxu0 0.0
    %2136 = vmatprep.subr.mxu0 0.0
    %2137 = vmatpush1.xpose.msra.mxu0 0.0
    %2138 = vmatprep.subr.mxu0 0.0
    %2139 = vmatpush1.xpose.msra.mxu0 0.0
    %2140 = vmatprep.subr.mxu0 0.0
    %2141 = vmatpush1.xpose.msra.mxu0 0.0
    %2142 = vmatprep.subr.mxu0 0.0
    %2143 = vmatpush1.xpose.msra.mxu0 0.0
    %2144 = vmatprep.subr.mxu0 0.0
    %2145 = vmatpush1.xpose.msra.mxu0 0.0
    %2146 = vmatprep.subr.mxu0 0.0
    %2147 = vmatpush1.xpose.msra.mxu0 0.0
    %2148 = vmatprep.subr.mxu0 0.0
    %2149 = vmatpush1.xpose.msra.mxu0 0.0
    %2150 = vmatprep.subr.mxu0 0.0
    %2151 = vmatpush1.xpose.msra.mxu0 0.0
    %2152 = vmatprep.subr.mxu0 0.0
    %2153 = vmatpush1.xpose.msra.mxu0 0.0
    %2154 = vmatprep.subr.mxu0 0.0
    %2155 = vmatpush1.xpose.msra.mxu0 0.0
    %2156 = vmatprep.subr.mxu0 0.0
    %2157 = vmatpush1.xpose.msra.mxu0 0.0
    %2158 = vmatprep.subr.mxu0 0.0
    %2159 = vmatpush1.xpose.msra.mxu0 0.0
    %2160 = vmatprep.subr.mxu0 0.0
    %2161 = vmatpush1.xpose.msra.mxu0 %v2128
    %2162 = vmatprep.subr.mxu0 0.0
    %2163 = vmatpush2.xpose.msra.mxu0 0.0
    %2164 = vmatprep.subr.mxu0 0.0
    %2165 = vmatpush2.xpose.msra.mxu0 0.0
    %2166 = vmatprep.subr.mxu0 0.0
    %2167 = vmatpush2.xpose.msra.mxu0 0.0
    %2168 = vmatprep.subr.mxu0 0.0
    %2169 = vmatpush2.xpose.msra.mxu0 0.0
    %2170 = vmatprep.subr.mxu0 0.0
    %2171 = vmatpush2.xpose.msra.mxu0 0.0
    %2172 = vmatprep.subr.mxu0 0.0
    %2173 = vmatpush2.xpose.msra.mxu0 0.0
    %2174 = vmatprep.subr.mxu0 0.0
    %2175 = vmatpush2.xpose.msra.mxu0 0.0
    %2176 = vmatprep.subr.mxu0 0.0
    %2177 = vmatpush2.xpose.msra.mxu0 0.0
    %2178 = vmatprep.subr.mxu0 0.0
    %2179 = vmatpush2.xpose.msra.mxu0 0.0
    %2180 = vmatprep.subr.mxu0 0.0
    %2181 = vmatpush2.xpose.msra.mxu0 0.0
    %2182 = vmatprep.subr.mxu0 0.0
    %2183 = vmatpush2.xpose.msra.mxu0 0.0
    %2184 = vmatprep.subr.mxu0 0.0
    %2185 = vmatpush2.xpose.msra.mxu0 0.0
    %2186 = vmatprep.subr.mxu0 0.0
    %2187 = vmatpush2.xpose.msra.mxu0 0.0
    %2188 = vmatprep.subr.mxu0 0.0
    %2189 = vmatpush2.xpose.msra.mxu0 0.0
    %2190 = vmatprep.subr.mxu0 0.0
    %2191 = vmatpush2.xpose.msra.mxu0 0.0
    %2192 = vmatprep.subr.mxu0 0.0
    %2193 = vmatpush2.xpose.msra.mxu0 0.0
    %2194 = vmatprep.mubr.f32.mxu0 0.0
    %2195 = vmatmul.mubr.f32.gmra.mxu0 %v2125
    %v2196 = vpop.f32.mrf.mxu0
    %v2197 = vadd.f32 0.0, %v2196
    %v2198 = vpop.f32.mrf.mxu0
    %2199 = vdwg.mxu0
    %v2201 = vsel %vm2123, %v2116, 0
    %v2204 = vsel %vm2123, %v1044, 0
    %2206 = vmatprep.subr.mxu0 0.0
    %2207 = vmatpush1.xpose.msra.mxu0 0.0
    %2208 = vmatprep.subr.mxu0 0.0
    %2209 = vmatpush1.xpose.msra.mxu0 0.0
    %2210 = vmatprep.subr.mxu0 0.0
    %2211 = vmatpush1.xpose.msra.mxu0 0.0
    %2212 = vmatprep.subr.mxu0 0.0
    %2213 = vmatpush1.xpose.msra.mxu0 0.0
    %2214 = vmatprep.subr.mxu0 0.0
    %2215 = vmatpush1.xpose.msra.mxu0 0.0
    %2216 = vmatprep.subr.mxu0 0.0
    %2217 = vmatpush1.xpose.msra.mxu0 0.0
    %2218 = vmatprep.subr.mxu0 0.0
    %2219 = vmatpush1.xpose.msra.mxu0 0.0
    %2220 = vmatprep.subr.mxu0 0.0
    %2221 = vmatpush1.xpose.msra.mxu0 0.0
    %2222 = vmatprep.subr.mxu0 0.0
    %2223 = vmatpush1.xpose.msra.mxu0 0.0
    %2224 = vmatprep.subr.mxu0 0.0
    %2225 = vmatpush1.xpose.msra.mxu0 0.0
    %2226 = vmatprep.subr.mxu0 0.0
    %2227 = vmatpush1.xpose.msra.mxu0 0.0
    %2228 = vmatprep.subr.mxu0 0.0
    %2229 = vmatpush1.xpose.msra.mxu0 0.0
    %2230 = vmatprep.subr.mxu0 0.0
    %2231 = vmatpush1.xpose.msra.mxu0 0.0
    %2232 = vmatprep.subr.mxu0 0.0
    %2233 = vmatpush1.xpose.msra.mxu0 0.0
    %2234 = vmatprep.subr.mxu0 0.0
    %2235 = vmatpush1.xpose.msra.mxu0 0.0
    %2236 = vmatprep.subr.mxu0 0.0
    %2237 = vmatpush1.xpose.msra.mxu0 %v2204
    %2238 = vmatprep.subr.mxu0 0.0
    %2239 = vmatpush2.xpose.msra.mxu0 0.0
    %2240 = vmatprep.subr.mxu0 0.0
    %2241 = vmatpush2.xpose.msra.mxu0 0.0
    %2242 = vmatprep.subr.mxu0 0.0
    %2243 = vmatpush2.xpose.msra.mxu0 0.0
    %2244 = vmatprep.subr.mxu0 0.0
    %2245 = vmatpush2.xpose.msra.mxu0 0.0
    %2246 = vmatprep.subr.mxu0 0.0
    %2247 = vmatpush2.xpose.msra.mxu0 0.0
    %2248 = vmatprep.subr.mxu0 0.0
    %2249 = vmatpush2.xpose.msra.mxu0 0.0
    %2250 = vmatprep.subr.mxu0 0.0
    %2251 = vmatpush2.xpose.msra.mxu0 0.0
    %2252 = vmatprep.subr.mxu0 0.0
    %2253 = vmatpush2.xpose.msra.mxu0 0.0
    %2254 = vmatprep.subr.mxu0 0.0
    %2255 = vmatpush2.xpose.msra.mxu0 0.0
    %2256 = vmatprep.subr.mxu0 0.0
    %2257 = vmatpush2.xpose.msra.mxu0 0.0
    %2258 = vmatprep.subr.mxu0 0.0
    %2259 = vmatpush2.xpose.msra.mxu0 0.0
    %2260 = vmatprep.subr.mxu0 0.0
    %2261 = vmatpush2.xpose.msra.mxu0 0.0
    %2262 = vmatprep.subr.mxu0 0.0
    %2263 = vmatpush2.xpose.msra.mxu0 0.0
    %2264 = vmatprep.subr.mxu0 0.0
    %2265 = vmatpush2.xpose.msra.mxu0 0.0
    %2266 = vmatprep.subr.mxu0 0.0
    %2267 = vmatpush2.xpose.msra.mxu0 0.0
    %2268 = vmatprep.subr.mxu0 0.0
    %2269 = vmatpush2.xpose.msra.mxu0 0.0
    %2270 = vmatprep.mubr.f32.mxu0 0.0
    %2271 = vmatmul.mubr.f32.gmra.mxu0 %v2201
    %v2272 = vpop.f32.mrf.mxu0
    %v2273 = vadd.f32 0.0, %v2272
    %v2274 = vpop.f32.mrf.mxu0
    %2275 = vdwg.mxu0
    %v2277 = vsel %vm2123, %v2117, 0
    %v2280 = vsel %vm2123, %v1114, 0
    %2282 = vmatprep.subr.mxu0 0.0
    %2283 = vmatpush1.xpose.msra.mxu0 0.0
    %2284 = vmatprep.subr.mxu0 0.0
    %2285 = vmatpush1.xpose.msra.mxu0 0.0
    %2286 = vmatprep.subr.mxu0 0.0
    %2287 = vmatpush1.xpose.msra.mxu0 0.0
    %2288 = vmatprep.subr.mxu0 0.0
    %2289 = vmatpush1.xpose.msra.mxu0 0.0
    %2290 = vmatprep.subr.mxu0 0.0
    %2291 = vmatpush1.xpose.msra.mxu0 0.0
    %2292 = vmatprep.subr.mxu0 0.0
    %2293 = vmatpush1.xpose.msra.mxu0 0.0
    %2294 = vmatprep.subr.mxu0 0.0
    %2295 = vmatpush1.xpose.msra.mxu0 0.0
    %2296 = vmatprep.subr.mxu0 0.0
    %2297 = vmatpush1.xpose.msra.mxu0 0.0
    %2298 = vmatprep.subr.mxu0 0.0
    %2299 = vmatpush1.xpose.msra.mxu0 0.0
    %2300 = vmatprep.subr.mxu0 0.0
    %2301 = vmatpush1.xpose.msra.mxu0 0.0
    %2302 = vmatprep.subr.mxu0 0.0
    %2303 = vmatpush1.xpose.msra.mxu0 0.0
    %2304 = vmatprep.subr.mxu0 0.0
    %2305 = vmatpush1.xpose.msra.mxu0 0.0
    %2306 = vmatprep.subr.mxu0 0.0
    %2307 = vmatpush1.xpose.msra.mxu0 0.0
    %2308 = vmatprep.subr.mxu0 0.0
    %2309 = vmatpush1.xpose.msra.mxu0 0.0
    %2310 = vmatprep.subr.mxu0 0.0
    %2311 = vmatpush1.xpose.msra.mxu0 0.0
    %2312 = vmatprep.subr.mxu0 0.0
    %2313 = vmatpush1.xpose.msra.mxu0 %v2280
    %2314 = vmatprep.subr.mxu0 0.0
    %2315 = vmatpush2.xpose.msra.mxu0 0.0
    %2316 = vmatprep.subr.mxu0 0.0
    %2317 = vmatpush2.xpose.msra.mxu0 0.0
    %2318 = vmatprep.subr.mxu0 0.0
    %2319 = vmatpush2.xpose.msra.mxu0 0.0
    %2320 = vmatprep.subr.mxu0 0.0
    %2321 = vmatpush2.xpose.msra.mxu0 0.0
    %2322 = vmatprep.subr.mxu0 0.0
    %2323 = vmatpush2.xpose.msra.mxu0 0.0
    %2324 = vmatprep.subr.mxu0 0.0
    %2325 = vmatpush2.xpose.msra.mxu0 0.0
    %2326 = vmatprep.subr.mxu0 0.0
    %2327 = vmatpush2.xpose.msra.mxu0 0.0
    %2328 = vmatprep.subr.mxu0 0.0
    %2329 = vmatpush2.xpose.msra.mxu0 0.0
    %2330 = vmatprep.subr.mxu0 0.0
    %2331 = vmatpush2.xpose.msra.mxu0 0.0
    %2332 = vmatprep.subr.mxu0 0.0
    %2333 = vmatpush2.xpose.msra.mxu0 0.0
    %2334 = vmatprep.subr.mxu0 0.0
    %2335 = vmatpush2.xpose.msra.mxu0 0.0
    %2336 = vmatprep.subr.mxu0 0.0
    %2337 = vmatpush2.xpose.msra.mxu0 0.0
    %2338 = vmatprep.subr.mxu0 0.0
    %2339 = vmatpush2.xpose.msra.mxu0 0.0
    %2340 = vmatprep.subr.mxu0 0.0
    %2341 = vmatpush2.xpose.msra.mxu0 0.0
    %2342 = vmatprep.subr.mxu0 0.0
    %2343 = vmatpush2.xpose.msra.mxu0 0.0
    %2344 = vmatprep.subr.mxu0 0.0
    %2345 = vmatpush2.xpose.msra.mxu0 0.0
    %2346 = vmatprep.mubr.f32.mxu0 0.0
    %2347 = vmatmul.mubr.f32.gmra.mxu0 %v2277
    %v2348 = vpop.f32.mrf.mxu0
    %v2349 = vadd.f32 0.0, %v2348
    %v2350 = vpop.f32.mrf.mxu0
    %2351 = vdwg.mxu0
    %v2353 = vsel %vm2123, %v2118, 0
    %v2356 = vsel %vm2123, %v1184, 0
    %2358 = vmatprep.subr.mxu0 0.0
    %2359 = vmatpush1.xpose.msra.mxu0 0.0
    %2360 = vmatprep.subr.mxu0 0.0
    %2361 = vmatpush1.xpose.msra.mxu0 0.0
    %2362 = vmatprep.subr.mxu0 0.0
    %2363 = vmatpush1.xpose.msra.mxu0 0.0
    %2364 = vmatprep.subr.mxu0 0.0
    %2365 = vmatpush1.xpose.msra.mxu0 0.0
    %2366 = vmatprep.subr.mxu0 0.0
    %2367 = vmatpush1.xpose.msra.mxu0 0.0
    %2368 = vmatprep.subr.mxu0 0.0
    %2369 = vmatpush1.xpose.msra.mxu0 0.0
    %2370 = vmatprep.subr.mxu0 0.0
    %2371 = vmatpush1.xpose.msra.mxu0 0.0
    %2372 = vmatprep.subr.mxu0 0.0
    %2373 = vmatpush1.xpose.msra.mxu0 0.0
    %2374 = vmatprep.subr.mxu0 0.0
    %2375 = vmatpush1.xpose.msra.mxu0 0.0
    %2376 = vmatprep.subr.mxu0 0.0
    %2377 = vmatpush1.xpose.msra.mxu0 0.0
    %2378 = vmatprep.subr.mxu0 0.0
    %2379 = vmatpush1.xpose.msra.mxu0 0.0
    %2380 = vmatprep.subr.mxu0 0.0
    %2381 = vmatpush1.xpose.msra.mxu0 0.0
    %2382 = vmatprep.subr.mxu0 0.0
    %2383 = vmatpush1.xpose.msra.mxu0 0.0
    %2384 = vmatprep.subr.mxu0 0.0
    %2385 = vmatpush1.xpose.msra.mxu0 0.0
    %2386 = vmatprep.subr.mxu0 0.0
    %2387 = vmatpush1.xpose.msra.mxu0 0.0
    %2388 = vmatprep.subr.mxu0 0.0
    %2389 = vmatpush1.xpose.msra.mxu0 %v2356
    %2390 = vmatprep.subr.mxu0 0.0
    %2391 = vmatpush2.xpose.msra.mxu0 0.0
    %2392 = vmatprep.subr.mxu0 0.0
    %2393 = vmatpush2.xpose.msra.mxu0 0.0
    %2394 = vmatprep.subr.mxu0 0.0
    %2395 = vmatpush2.xpose.msra.mxu0 0.0
    %2396 = vmatprep.subr.mxu0 0.0
    %2397 = vmatpush2.xpose.msra.mxu0 0.0
    %2398 = vmatprep.subr.mxu0 0.0
    %2399 = vmatpush2.xpose.msra.mxu0 0.0
    %2400 = vmatprep.subr.mxu0 0.0
    %2401 = vmatpush2.xpose.msra.mxu0 0.0
    %2402 = vmatprep.subr.mxu0 0.0
    %2403 = vmatpush2.xpose.msra.mxu0 0.0
    %2404 = vmatprep.subr.mxu0 0.0
    %2405 = vmatpush2.xpose.msra.mxu0 0.0
    %2406 = vmatprep.subr.mxu0 0.0
    %2407 = vmatpush2.xpose.msra.mxu0 0.0
    %2408 = vmatprep.subr.mxu0 0.0
    %2409 = vmatpush2.xpose.msra.mxu0 0.0
    %2410 = vmatprep.subr.mxu0 0.0
    %2411 = vmatpush2.xpose.msra.mxu0 0.0
    %2412 = vmatprep.subr.mxu0 0.0
    %2413 = vmatpush2.xpose.msra.mxu0 0.0
    %2414 = vmatprep.subr.mxu0 0.0
    %2415 = vmatpush2.xpose.msra.mxu0 0.0
    %2416 = vmatprep.subr.mxu0 0.0
    %2417 = vmatpush2.xpose.msra.mxu0 0.0
    %2418 = vmatprep.subr.mxu0 0.0
    %2419 = vmatpush2.xpose.msra.mxu0 0.0
    %2420 = vmatprep.subr.mxu0 0.0
    %2421 = vmatpush2.xpose.msra.mxu0 0.0
    %2422 = vmatprep.mubr.f32.mxu0 0.0
    %2423 = vmatmul.mubr.f32.gmra.mxu0 %v2353
    %v2424 = vpop.f32.mrf.mxu0
    %v2425 = vadd.f32 0.0, %v2424
    %v2426 = vpop.f32.mrf.mxu0
    %2427 = vdwg.mxu0
    %v2429 = vsel %vm2123, %v2119, 0
    %v2432 = vsel %vm2123, %v1254, 0
    %2434 = vmatprep.subr.mxu0 0.0
    %2435 = vmatpush1.xpose.msra.mxu0 0.0
    %2436 = vmatprep.subr.mxu0 0.0
    %2437 = vmatpush1.xpose.msra.mxu0 0.0
    %2438 = vmatprep.subr.mxu0 0.0
    %2439 = vmatpush1.xpose.msra.mxu0 0.0
    %2440 = vmatprep.subr.mxu0 0.0
    %2441 = vmatpush1.xpose.msra.mxu0 0.0
    %2442 = vmatprep.subr.mxu0 0.0
    %2443 = vmatpush1.xpose.msra.mxu0 0.0
    %2444 = vmatprep.subr.mxu0 0.0
    %2445 = vmatpush1.xpose.msra.mxu0 0.0
    %2446 = vmatprep.subr.mxu0 0.0
    %2447 = vmatpush1.xpose.msra.mxu0 0.0
    %2448 = vmatprep.subr.mxu0 0.0
    %2449 = vmatpush1.xpose.msra.mxu0 0.0
    %2450 = vmatprep.subr.mxu0 0.0
    %2451 = vmatpush1.xpose.msra.mxu0 0.0
    %2452 = vmatprep.subr.mxu0 0.0
    %2453 = vmatpush1.xpose.msra.mxu0 0.0
    %2454 = vmatprep.subr.mxu0 0.0
    %2455 = vmatpush1.xpose.msra.mxu0 0.0
    %2456 = vmatprep.subr.mxu0 0.0
    %2457 = vmatpush1.xpose.msra.mxu0 0.0
    %2458 = vmatprep.subr.mxu0 0.0
    %2459 = vmatpush1.xpose.msra.mxu0 0.0
    %2460 = vmatprep.subr.mxu0 0.0
    %2461 = vmatpush1.xpose.msra.mxu0 0.0
    %2462 = vmatprep.subr.mxu0 0.0
    %2463 = vmatpush1.xpose.msra.mxu0 0.0
    %2464 = vmatprep.subr.mxu0 0.0
    %2465 = vmatpush1.xpose.msra.mxu0 %v2432
    %2466 = vmatprep.subr.mxu0 0.0
    %2467 = vmatpush2.xpose.msra.mxu0 0.0
    %2468 = vmatprep.subr.mxu0 0.0
    %2469 = vmatpush2.xpose.msra.mxu0 0.0
    %2470 = vmatprep.subr.mxu0 0.0
    %2471 = vmatpush2.xpose.msra.mxu0 0.0
    %2472 = vmatprep.subr.mxu0 0.0
    %2473 = vmatpush2.xpose.msra.mxu0 0.0
    %2474 = vmatprep.subr.mxu0 0.0
    %2475 = vmatpush2.xpose.msra.mxu0 0.0
    %2476 = vmatprep.subr.mxu0 0.0
    %2477 = vmatpush2.xpose.msra.mxu0 0.0
    %2478 = vmatprep.subr.mxu0 0.0
    %2479 = vmatpush2.xpose.msra.mxu0 0.0
    %2480 = vmatprep.subr.mxu0 0.0
    %2481 = vmatpush2.xpose.msra.mxu0 0.0
    %2482 = vmatprep.subr.mxu0 0.0
    %2483 = vmatpush2.xpose.msra.mxu0 0.0
    %2484 = vmatprep.subr.mxu0 0.0
    %2485 = vmatpush2.xpose.msra.mxu0 0.0
    %2486 = vmatprep.subr.mxu0 0.0
    %2487 = vmatpush2.xpose.msra.mxu0 0.0
    %2488 = vmatprep.subr.mxu0 0.0
    %2489 = vmatpush2.xpose.msra.mxu0 0.0
    %2490 = vmatprep.subr.mxu0 0.0
    %2491 = vmatpush2.xpose.msra.mxu0 0.0
    %2492 = vmatprep.subr.mxu0 0.0
    %2493 = vmatpush2.xpose.msra.mxu0 0.0
    %2494 = vmatprep.subr.mxu0 0.0
    %2495 = vmatpush2.xpose.msra.mxu0 0.0
    %2496 = vmatprep.subr.mxu0 0.0
    %2497 = vmatpush2.xpose.msra.mxu0 0.0
    %2498 = vmatprep.mubr.f32.mxu0 0.0
    %2499 = vmatmul.mubr.f32.gmra.mxu0 %v2429
    %v2500 = vpop.f32.mrf.mxu0
    %v2501 = vadd.f32 0.0, %v2500
    %v2502 = vpop.f32.mrf.mxu0
    %2503 = vdwg.mxu0
    %v2505 = vsel %vm2123, %v2120, 0
    %v2508 = vsel %vm2123, %v1324, 0
    %2510 = vmatprep.subr.mxu0 0.0
    %2511 = vmatpush1.xpose.msra.mxu0 0.0
    %2512 = vmatprep.subr.mxu0 0.0
    %2513 = vmatpush1.xpose.msra.mxu0 0.0
    %2514 = vmatprep.subr.mxu0 0.0
    %2515 = vmatpush1.xpose.msra.mxu0 0.0
    %2516 = vmatprep.subr.mxu0 0.0
    %2517 = vmatpush1.xpose.msra.mxu0 0.0
    %2518 = vmatprep.subr.mxu0 0.0
    %2519 = vmatpush1.xpose.msra.mxu0 0.0
    %2520 = vmatprep.subr.mxu0 0.0
    %2521 = vmatpush1.xpose.msra.mxu0 0.0
    %2522 = vmatprep.subr.mxu0 0.0
    %2523 = vmatpush1.xpose.msra.mxu0 0.0
    %2524 = vmatprep.subr.mxu0 0.0
    %2525 = vmatpush1.xpose.msra.mxu0 0.0
    %2526 = vmatprep.subr.mxu0 0.0
    %2527 = vmatpush1.xpose.msra.mxu0 0.0
    %2528 = vmatprep.subr.mxu0 0.0
    %2529 = vmatpush1.xpose.msra.mxu0 0.0
    %2530 = vmatprep.subr.mxu0 0.0
    %2531 = vmatpush1.xpose.msra.mxu0 0.0
    %2532 = vmatprep.subr.mxu0 0.0
    %2533 = vmatpush1.xpose.msra.mxu0 0.0
    %2534 = vmatprep.subr.mxu0 0.0
    %2535 = vmatpush1.xpose.msra.mxu0 0.0
    %2536 = vmatprep.subr.mxu0 0.0
    %2537 = vmatpush1.xpose.msra.mxu0 0.0
    %2538 = vmatprep.subr.mxu0 0.0
    %2539 = vmatpush1.xpose.msra.mxu0 0.0
    %2540 = vmatprep.subr.mxu0 0.0
    %2541 = vmatpush1.xpose.msra.mxu0 %v2508
    %2542 = vmatprep.subr.mxu0 0.0
    %2543 = vmatpush2.xpose.msra.mxu0 0.0
    %2544 = vmatprep.subr.mxu0 0.0
    %2545 = vmatpush2.xpose.msra.mxu0 0.0
    %2546 = vmatprep.subr.mxu0 0.0
    %2547 = vmatpush2.xpose.msra.mxu0 0.0
    %2548 = vmatprep.subr.mxu0 0.0
    %2549 = vmatpush2.xpose.msra.mxu0 0.0
    %2550 = vmatprep.subr.mxu0 0.0
    %2551 = vmatpush2.xpose.msra.mxu0 0.0
    %2552 = vmatprep.subr.mxu0 0.0
    %2553 = vmatpush2.xpose.msra.mxu0 0.0
    %2554 = vmatprep.subr.mxu0 0.0
    %2555 = vmatpush2.xpose.msra.mxu0 0.0
    %2556 = vmatprep.subr.mxu0 0.0
    %2557 = vmatpush2.xpose.msra.mxu0 0.0
    %2558 = vmatprep.subr.mxu0 0.0
    %2559 = vmatpush2.xpose.msra.mxu0 0.0
    %2560 = vmatprep.subr.mxu0 0.0
    %2561 = vmatpush2.xpose.msra.mxu0 0.0
    %2562 = vmatprep.subr.mxu0 0.0
    %2563 = vmatpush2.xpose.msra.mxu0 0.0
    %2564 = vmatprep.subr.mxu0 0.0
    %2565 = vmatpush2.xpose.msra.mxu0 0.0
    %2566 = vmatprep.subr.mxu0 0.0
    %2567 = vmatpush2.xpose.msra.mxu0 0.0
    %2568 = vmatprep.subr.mxu0 0.0
    %2569 = vmatpush2.xpose.msra.mxu0 0.0
    %2570 = vmatprep.subr.mxu0 0.0
    %2571 = vmatpush2.xpose.msra.mxu0 0.0
    %2572 = vmatprep.subr.mxu0 0.0
    %2573 = vmatpush2.xpose.msra.mxu0 0.0
    %2574 = vmatprep.mubr.f32.mxu0 0.0
    %2575 = vmatmul.mubr.f32.gmra.mxu0 %v2505
    %v2576 = vpop.f32.mrf.mxu0
    %v2577 = vadd.f32 0.0, %v2576
    %v2578 = vpop.f32.mrf.mxu0
    %2579 = vdwg.mxu0
    %v2581 = vsel %vm2123, %v2121, 0
    %v2584 = vsel %vm2123, %v1394, 0
    %2586 = vmatprep.subr.mxu0 0.0
    %2587 = vmatpush1.xpose.msra.mxu0 0.0
    %2588 = vmatprep.subr.mxu0 0.0
    %2589 = vmatpush1.xpose.msra.mxu0 0.0
    %2590 = vmatprep.subr.mxu0 0.0
    %2591 = vmatpush1.xpose.msra.mxu0 0.0
    %2592 = vmatprep.subr.mxu0 0.0
    %2593 = vmatpush1.xpose.msra.mxu0 0.0
    %2594 = vmatprep.subr.mxu0 0.0
    %2595 = vmatpush1.xpose.msra.mxu0 0.0
    %2596 = vmatprep.subr.mxu0 0.0
    %2597 = vmatpush1.xpose.msra.mxu0 0.0
    %2598 = vmatprep.subr.mxu0 0.0
    %2599 = vmatpush1.xpose.msra.mxu0 0.0
    %2600 = vmatprep.subr.mxu0 0.0
    %2601 = vmatpush1.xpose.msra.mxu0 0.0
    %2602 = vmatprep.subr.mxu0 0.0
    %2603 = vmatpush1.xpose.msra.mxu0 0.0
    %2604 = vmatprep.subr.mxu0 0.0
    %2605 = vmatpush1.xpose.msra.mxu0 0.0
    %2606 = vmatprep.subr.mxu0 0.0
    %2607 = vmatpush1.xpose.msra.mxu0 0.0
    %2608 = vmatprep.subr.mxu0 0.0
    %2609 = vmatpush1.xpose.msra.mxu0 0.0
    %2610 = vmatprep.subr.mxu0 0.0
    %2611 = vmatpush1.xpose.msra.mxu0 0.0
    %2612 = vmatprep.subr.mxu0 0.0
    %2613 = vmatpush1.xpose.msra.mxu0 0.0
    %2614 = vmatprep.subr.mxu0 0.0
    %2615 = vmatpush1.xpose.msra.mxu0 0.0
    %2616 = vmatprep.subr.mxu0 0.0
    %2617 = vmatpush1.xpose.msra.mxu0 %v2584
    %2618 = vmatprep.subr.mxu0 0.0
    %2619 = vmatpush2.xpose.msra.mxu0 0.0
    %2620 = vmatprep.subr.mxu0 0.0
    %2621 = vmatpush2.xpose.msra.mxu0 0.0
    %2622 = vmatprep.subr.mxu0 0.0
    %2623 = vmatpush2.xpose.msra.mxu0 0.0
    %2624 = vmatprep.subr.mxu0 0.0
    %2625 = vmatpush2.xpose.msra.mxu0 0.0
    %2626 = vmatprep.subr.mxu0 0.0
    %2627 = vmatpush2.xpose.msra.mxu0 0.0
    %2628 = vmatprep.subr.mxu0 0.0
    %2629 = vmatpush2.xpose.msra.mxu0 0.0
    %2630 = vmatprep.subr.mxu0 0.0
    %2631 = vmatpush2.xpose.msra.mxu0 0.0
    %2632 = vmatprep.subr.mxu0 0.0
    %2633 = vmatpush2.xpose.msra.mxu0 0.0
    %2634 = vmatprep.subr.mxu0 0.0
    %2635 = vmatpush2.xpose.msra.mxu0 0.0
    %2636 = vmatprep.subr.mxu0 0.0
    %2637 = vmatpush2.xpose.msra.mxu0 0.0
    %2638 = vmatprep.subr.mxu0 0.0
    %2639 = vmatpush2.xpose.msra.mxu0 0.0
    %2640 = vmatprep.subr.mxu0 0.0
    %2641 = vmatpush2.xpose.msra.mxu0 0.0
    %2642 = vmatprep.subr.mxu0 0.0
    %2643 = vmatpush2.xpose.msra.mxu0 0.0
    %2644 = vmatprep.subr.mxu0 0.0
    %2645 = vmatpush2.xpose.msra.mxu0 0.0
    %2646 = vmatprep.subr.mxu0 0.0
    %2647 = vmatpush2.xpose.msra.mxu0 0.0
    %2648 = vmatprep.subr.mxu0 0.0
    %2649 = vmatpush2.xpose.msra.mxu0 0.0
    %2650 = vmatprep.mubr.f32.mxu0 0.0
    %2651 = vmatmul.mubr.f32.gmra.mxu0 %v2581
    %v2652 = vpop.f32.mrf.mxu0
    %v2653 = vadd.f32 0.0, %v2652
    %v2654 = vpop.f32.mrf.mxu0
    %2655 = vdwg.mxu0
    %v2657 = vsel %vm2123, %v2122, 0
    %v2660 = vsel %vm2123, %v1464, 0
    %2662 = vmatprep.subr.mxu0 0.0
    %2663 = vmatpush1.xpose.msra.mxu0 0.0
    %2664 = vmatprep.subr.mxu0 0.0
    %2665 = vmatpush1.xpose.msra.mxu0 0.0
    %2666 = vmatprep.subr.mxu0 0.0
    %2667 = vmatpush1.xpose.msra.mxu0 0.0
    %2668 = vmatprep.subr.mxu0 0.0
    %2669 = vmatpush1.xpose.msra.mxu0 0.0
    %2670 = vmatprep.subr.mxu0 0.0
    %2671 = vmatpush1.xpose.msra.mxu0 0.0
    %2672 = vmatprep.subr.mxu0 0.0
    %2673 = vmatpush1.xpose.msra.mxu0 0.0
    %2674 = vmatprep.subr.mxu0 0.0
    %2675 = vmatpush1.xpose.msra.mxu0 0.0
    %2676 = vmatprep.subr.mxu0 0.0
    %2677 = vmatpush1.xpose.msra.mxu0 0.0
    %2678 = vmatprep.subr.mxu0 0.0
    %2679 = vmatpush1.xpose.msra.mxu0 0.0
    %2680 = vmatprep.subr.mxu0 0.0
    %2681 = vmatpush1.xpose.msra.mxu0 0.0
    %2682 = vmatprep.subr.mxu0 0.0
    %2683 = vmatpush1.xpose.msra.mxu0 0.0
    %2684 = vmatprep.subr.mxu0 0.0
    %2685 = vmatpush1.xpose.msra.mxu0 0.0
    %2686 = vmatprep.subr.mxu0 0.0
    %2687 = vmatpush1.xpose.msra.mxu0 0.0
    %2688 = vmatprep.subr.mxu0 0.0
    %2689 = vmatpush1.xpose.msra.mxu0 0.0
    %2690 = vmatprep.subr.mxu0 0.0
    %2691 = vmatpush1.xpose.msra.mxu0 0.0
    %2692 = vmatprep.subr.mxu0 0.0
    %2693 = vmatpush1.xpose.msra.mxu0 %v2660
    %2694 = vmatprep.subr.mxu0 0.0
    %2695 = vmatpush2.xpose.msra.mxu0 0.0
    %2696 = vmatprep.subr.mxu0 0.0
    %2697 = vmatpush2.xpose.msra.mxu0 0.0
    %2698 = vmatprep.subr.mxu0 0.0
    %2699 = vmatpush2.xpose.msra.mxu0 0.0
    %2700 = vmatprep.subr.mxu0 0.0
    %2701 = vmatpush2.xpose.msra.mxu0 0.0
    %2702 = vmatprep.subr.mxu0 0.0
    %2703 = vmatpush2.xpose.msra.mxu0 0.0
    %2704 = vmatprep.subr.mxu0 0.0
    %2705 = vmatpush2.xpose.msra.mxu0 0.0
    %2706 = vmatprep.subr.mxu0 0.0
    %2707 = vmatpush2.xpose.msra.mxu0 0.0
    %2708 = vmatprep.subr.mxu0 0.0
    %2709 = vmatpush2.xpose.msra.mxu0 0.0
    %2710 = vmatprep.subr.mxu0 0.0
    %2711 = vmatpush2.xpose.msra.mxu0 0.0
    %2712 = vmatprep.subr.mxu0 0.0
    %2713 = vmatpush2.xpose.msra.mxu0 0.0
    %2714 = vmatprep.subr.mxu0 0.0
    %2715 = vmatpush2.xpose.msra.mxu0 0.0
    %2716 = vmatprep.subr.mxu0 0.0
    %2717 = vmatpush2.xpose.msra.mxu0 0.0
    %2718 = vmatprep.subr.mxu0 0.0
    %2719 = vmatpush2.xpose.msra.mxu0 0.0
    %2720 = vmatprep.subr.mxu0 0.0
    %2721 = vmatpush2.xpose.msra.mxu0 0.0
    %2722 = vmatprep.subr.mxu0 0.0
    %2723 = vmatpush2.xpose.msra.mxu0 0.0
    %2724 = vmatprep.subr.mxu0 0.0
    %2725 = vmatpush2.xpose.msra.mxu0 0.0
    %2726 = vmatprep.mubr.f32.mxu0 0.0
    %2727 = vmatmul.mubr.f32.gmra.mxu0 %v2657
    %v2728 = vpop.f32.mrf.mxu0
    %v2729 = vadd.f32 0.0, %v2728
    %v2730 = vpop.f32.mrf.mxu0
    %2731 = vdwg.mxu0
    %vm2732 = vcmask 64512
    %v2733 = vsel %vm2732, %v2197, -inf
    %2734 = vmax.xlane.f32.xlu0 %v2733
    %v2735 = vpop.xlane.xlu0 %2734
    %v2736 = vsel %vm2732, %v2273, -inf
    %2737 = vmax.xlane.f32.xlu0 %v2736
    %v2738 = vpop.xlane.xlu0 %2737
    %v2739 = vsel %vm2732, %v2349, -inf
    %2740 = vmax.xlane.f32.xlu0 %v2739
    %v2741 = vpop.xlane.xlu0 %2740
    %v2742 = vsel %vm2732, %v2425, -inf
    %2743 = vmax.xlane.f32.xlu0 %v2742
    %v2744 = vpop.xlane.xlu0 %2743
    %v2745 = vsel %vm2732, %v2501, -inf
    %2746 = vmax.xlane.f32.xlu0 %v2745
    %v2747 = vpop.xlane.xlu0 %2746
    %v2748 = vsel %vm2732, %v2577, -inf
    %2749 = vmax.xlane.f32.xlu0 %v2748
    %v2750 = vpop.xlane.xlu0 %2749
    %v2751 = vsel %vm2732, %v2653, -inf
    %2752 = vmax.xlane.f32.xlu0 %v2751
    %v2753 = vpop.xlane.xlu0 %2752
    %v2754 = vsel %vm2732, %v2729, -inf
    %2755 = vmax.xlane.f32.xlu0 %v2754
    %v2756 = vpop.xlane.xlu0 %2755
    %v2757 = vsub.f32 %v2197, %v2735
    %v2758 = vsub.f32 %v2273, %v2738
    %v2759 = vsub.f32 %v2349, %v2741
    %v2760 = vsub.f32 %v2425, %v2744
    %v2761 = vsub.f32 %v2501, %v2747
    %v2762 = vsub.f32 %v2577, %v2750
    %v2763 = vsub.f32 %v2653, %v2753
    %v2764 = vsub.f32 %v2729, %v2756
    %v2765 = vmul.f32 %v2757, 1.442695
    %v2766 = vpow.pop %v2765
    %v2767 = vmul.f32 %v2758, 1.442695
    %v2768 = vpow.pop %v2767
    %v2769 = vmul.f32 %v2759, 1.442695
    %v2770 = vpow.pop %v2769
    %v2771 = vmul.f32 %v2760, 1.442695
    %v2772 = vpow.pop %v2771
    %v2773 = vmul.f32 %v2761, 1.442695
    %v2774 = vpow.pop %v2773
    %v2775 = vmul.f32 %v2762, 1.442695
    %v2776 = vpow.pop %v2775
    %v2777 = vmul.f32 %v2763, 1.442695
    %v2778 = vpow.pop %v2777
    %v2779 = vmul.f32 %v2764, 1.442695
    %v2780 = vpow.pop %v2779
    %v2781 = vsel %vm2732, %v2766, 0.0
    %2782 = vadd.xlane.f32.xlu0 %v2781
    %v2783 = vpop.xlane.xlu0 %2782
    %v2784 = vsel %vm2732, %v2768, 0.0
    %2785 = vadd.xlane.f32.xlu0 %v2784
    %v2786 = vpop.xlane.xlu0 %2785
    %v2787 = vsel %vm2732, %v2770, 0.0
    %2788 = vadd.xlane.f32.xlu0 %v2787
    %v2789 = vpop.xlane.xlu0 %2788
    %v2790 = vsel %vm2732, %v2772, 0.0
    %2791 = vadd.xlane.f32.xlu0 %v2790
    %v2792 = vpop.xlane.xlu0 %2791
    %v2793 = vsel %vm2732, %v2774, 0.0
    %2794 = vadd.xlane.f32.xlu0 %v2793
    %v2795 = vpop.xlane.xlu0 %2794
    %v2796 = vsel %vm2732, %v2776, 0.0
    %2797 = vadd.xlane.f32.xlu0 %v2796
    %v2798 = vpop.xlane.xlu0 %2797
    %v2799 = vsel %vm2732, %v2778, 0.0
    %2800 = vadd.xlane.f32.xlu0 %v2799
    %v2801 = vpop.xlane.xlu0 %2800
    %v2802 = vsel %vm2732, %v2780, 0.0
    %2803 = vadd.xlane.f32.xlu0 %v2802
    %v2804 = vpop.xlane.xlu0 %2803
    %v2805 = vrcp.pop %v2783
    %v2806 = vrcp.pop %v2786
    %v2807 = vrcp.pop %v2789
    %v2808 = vrcp.pop %v2792
    %v2809 = vrcp.pop %v2795
    %v2810 = vrcp.pop %v2798
    %v2811 = vrcp.pop %v2801
    %v2812 = vrcp.pop %v2804
    %v2813 = vmul.f32 %v2766, %v2805
    %v2814 = vmul.f32 %v2768, %v2806
    %v2815 = vmul.f32 %v2770, %v2807
    %v2816 = vmul.f32 %v2772, %v2808
    %v2817 = vmul.f32 %v2774, %v2809
    %v2818 = vmul.f32 %v2776, %v2810
    %v2819 = vmul.f32 %v2778, %v2811
    %v2820 = vmul.f32 %v2780, %v2812
    %v2822 = vsel %vm2732, %v2813, 0
    %2824 = vmatprep.subr.mxu0 0.0
    %2825 = vmatpush1.msra.mxu0 0.0
    %2826 = vmatprep.subr.mxu0 0.0
    %2827 = vmatpush1.msra.mxu0 0.0
    %2828 = vmatprep.subr.mxu0 0.0
    %2829 = vmatpush1.msra.mxu0 0.0
    %2830 = vmatprep.subr.mxu0 0.0
    %2831 = vmatpush1.msra.mxu0 0.0
    %2832 = vmatprep.subr.mxu0 0.0
    %2833 = vmatpush1.msra.mxu0 0.0
    %2834 = vmatprep.subr.mxu0 0.0
    %2835 = vmatpush1.msra.mxu0 0.0
    %2836 = vmatprep.subr.mxu0 0.0
    %2837 = vmatpush1.msra.mxu0 0.0
    %2838 = vmatprep.subr.mxu0 0.0
    %2839 = vmatpush1.msra.mxu0 0.0
    %2840 = vmatprep.subr.mxu0 0.0
    %2841 = vmatpush1.msra.mxu0 0.0
    %2842 = vmatprep.subr.mxu0 0.0
    %2843 = vmatpush1.msra.mxu0 0.0
    %2844 = vmatprep.subr.mxu0 0.0
    %2845 = vmatpush1.msra.mxu0 0.0
    %2846 = vmatprep.subr.mxu0 0.0
    %2847 = vmatpush1.msra.mxu0 0.0
    %2848 = vmatprep.subr.mxu0 0.0
    %2849 = vmatpush1.msra.mxu0 0.0
    %2850 = vmatprep.subr.mxu0 0.0
    %2851 = vmatpush1.msra.mxu0 0.0
    %2852 = vmatprep.subr.mxu0 0.0
    %2853 = vmatpush1.msra.mxu0 0.0
    %2854 = vmatprep.subr.mxu0 0.0
    %2855 = vmatpush1.msra.mxu0 %v1622
    %2856 = vmatprep.subr.mxu0 0.0
    %2857 = vmatpush2.msra.mxu0 0.0
    %2858 = vmatprep.subr.mxu0 0.0
    %2859 = vmatpush2.msra.mxu0 0.0
    %2860 = vmatprep.subr.mxu0 0.0
    %2861 = vmatpush2.msra.mxu0 0.0
    %2862 = vmatprep.subr.mxu0 0.0
    %2863 = vmatpush2.msra.mxu0 0.0
    %2864 = vmatprep.subr.mxu0 0.0
    %2865 = vmatpush2.msra.mxu0 0.0
    %2866 = vmatprep.subr.mxu0 0.0
    %2867 = vmatpush2.msra.mxu0 0.0
    %2868 = vmatprep.subr.mxu0 0.0
    %2869 = vmatpush2.msra.mxu0 0.0
    %2870 = vmatprep.subr.mxu0 0.0
    %2871 = vmatpush2.msra.mxu0 0.0
    %2872 = vmatprep.subr.mxu0 0.0
    %2873 = vmatpush2.msra.mxu0 0.0
    %2874 = vmatprep.subr.mxu0 0.0
    %2875 = vmatpush2.msra.mxu0 0.0
    %2876 = vmatprep.subr.mxu0 0.0
    %2877 = vmatpush2.msra.mxu0 0.0
    %2878 = vmatprep.subr.mxu0 0.0
    %2879 = vmatpush2.msra.mxu0 0.0
    %2880 = vmatprep.subr.mxu0 0.0
    %2881 = vmatpush2.msra.mxu0 0.0
    %2882 = vmatprep.subr.mxu0 0.0
    %2883 = vmatpush2.msra.mxu0 0.0
    %2884 = vmatprep.subr.mxu0 0.0
    %2885 = vmatpush2.msra.mxu0 0.0
    %2886 = vmatprep.subr.mxu0 0.0
    %2887 = vmatpush2.msra.mxu0 0.0
    %2888 = vmatprep.mubr.f32.mxu0 0.0
    %2889 = vmatmul.mubr.f32.gmra.mxu0 %v2822
    %v2890 = vpop.f32.mrf.mxu0
    %v2891 = vadd.f32 0.0, %v2890
    %v2892 = vpop.f32.mrf.mxu0
    %2893 = vdwg.mxu0
    %v2895 = vsel %vm2732, %v2814, 0
    %2897 = vmatprep.subr.mxu0 0.0
    %2898 = vmatpush1.msra.mxu0 0.0
    %2899 = vmatprep.subr.mxu0 0.0
    %2900 = vmatpush1.msra.mxu0 0.0
    %2901 = vmatprep.subr.mxu0 0.0
    %2902 = vmatpush1.msra.mxu0 0.0
    %2903 = vmatprep.subr.mxu0 0.0
    %2904 = vmatpush1.msra.mxu0 0.0
    %2905 = vmatprep.subr.mxu0 0.0
    %2906 = vmatpush1.msra.mxu0 0.0
    %2907 = vmatprep.subr.mxu0 0.0
    %2908 = vmatpush1.msra.mxu0 0.0
    %2909 = vmatprep.subr.mxu0 0.0
    %2910 = vmatpush1.msra.mxu0 0.0
    %2911 = vmatprep.subr.mxu0 0.0
    %2912 = vmatpush1.msra.mxu0 0.0
    %2913 = vmatprep.subr.mxu0 0.0
    %2914 = vmatpush1.msra.mxu0 0.0
    %2915 = vmatprep.subr.mxu0 0.0
    %2916 = vmatpush1.msra.mxu0 0.0
    %2917 = vmatprep.subr.mxu0 0.0
    %2918 = vmatpush1.msra.mxu0 0.0
    %2919 = vmatprep.subr.mxu0 0.0
    %2920 = vmatpush1.msra.mxu0 0.0
    %2921 = vmatprep.subr.mxu0 0.0
    %2922 = vmatpush1.msra.mxu0 0.0
    %2923 = vmatprep.subr.mxu0 0.0
    %2924 = vmatpush1.msra.mxu0 0.0
    %2925 = vmatprep.subr.mxu0 0.0
    %2926 = vmatpush1.msra.mxu0 0.0
    %2927 = vmatprep.subr.mxu0 0.0
    %2928 = vmatpush1.msra.mxu0 %v1692
    %2929 = vmatprep.subr.mxu0 0.0
    %2930 = vmatpush2.msra.mxu0 0.0
    %2931 = vmatprep.subr.mxu0 0.0
    %2932 = vmatpush2.msra.mxu0 0.0
    %2933 = vmatprep.subr.mxu0 0.0
    %2934 = vmatpush2.msra.mxu0 0.0
    %2935 = vmatprep.subr.mxu0 0.0
    %2936 = vmatpush2.msra.mxu0 0.0
    %2937 = vmatprep.subr.mxu0 0.0
    %2938 = vmatpush2.msra.mxu0 0.0
    %2939 = vmatprep.subr.mxu0 0.0
    %2940 = vmatpush2.msra.mxu0 0.0
    %2941 = vmatprep.subr.mxu0 0.0
    %2942 = vmatpush2.msra.mxu0 0.0
    %2943 = vmatprep.subr.mxu0 0.0
    %2944 = vmatpush2.msra.mxu0 0.0
    %2945 = vmatprep.subr.mxu0 0.0
    %2946 = vmatpush2.msra.mxu0 0.0
    %2947 = vmatprep.subr.mxu0 0.0
    %2948 = vmatpush2.msra.mxu0 0.0
    %2949 = vmatprep.subr.mxu0 0.0
    %2950 = vmatpush2.msra.mxu0 0.0
    %2951 = vmatprep.subr.mxu0 0.0
    %2952 = vmatpush2.msra.mxu0 0.0
    %2953 = vmatprep.subr.mxu0 0.0
    %2954 = vmatpush2.msra.mxu0 0.0
    %2955 = vmatprep.subr.mxu0 0.0
    %2956 = vmatpush2.msra.mxu0 0.0
    %2957 = vmatprep.subr.mxu0 0.0
    %2958 = vmatpush2.msra.mxu0 0.0
    %2959 = vmatprep.subr.mxu0 0.0
    %2960 = vmatpush2.msra.mxu0 0.0
    %2961 = vmatprep.mubr.f32.mxu0 0.0
    %2962 = vmatmul.mubr.f32.gmra.mxu0 %v2895
    %v2963 = vpop.f32.mrf.mxu0
    %v2964 = vadd.f32 0.0, %v2963
    %v2965 = vpop.f32.mrf.mxu0
    %2966 = vdwg.mxu0
    %v2968 = vsel %vm2732, %v2815, 0
    %2970 = vmatprep.subr.mxu0 0.0
    %2971 = vmatpush1.msra.mxu0 0.0
    %2972 = vmatprep.subr.mxu0 0.0
    %2973 = vmatpush1.msra.mxu0 0.0
    %2974 = vmatprep.subr.mxu0 0.0
    %2975 = vmatpush1.msra.mxu0 0.0
    %2976 = vmatprep.subr.mxu0 0.0
    %2977 = vmatpush1.msra.mxu0 0.0
    %2978 = vmatprep.subr.mxu0 0.0
    %2979 = vmatpush1.msra.mxu0 0.0
    %2980 = vmatprep.subr.mxu0 0.0
    %2981 = vmatpush1.msra.mxu0 0.0
    %2982 = vmatprep.subr.mxu0 0.0
    %2983 = vmatpush1.msra.mxu0 0.0
    %2984 = vmatprep.subr.mxu0 0.0
    %2985 = vmatpush1.msra.mxu0 0.0
    %2986 = vmatprep.subr.mxu0 0.0
    %2987 = vmatpush1.msra.mxu0 0.0
    %2988 = vmatprep.subr.mxu0 0.0
    %2989 = vmatpush1.msra.mxu0 0.0
    %2990 = vmatprep.subr.mxu0 0.0
    %2991 = vmatpush1.msra.mxu0 0.0
    %2992 = vmatprep.subr.mxu0 0.0
    %2993 = vmatpush1.msra.mxu0 0.0
    %2994 = vmatprep.subr.mxu0 0.0
    %2995 = vmatpush1.msra.mxu0 0.0
    %2996 = vmatprep.subr.mxu0 0.0
    %2997 = vmatpush1.msra.mxu0 0.0
    %2998 = vmatprep.subr.mxu0 0.0
    %2999 = vmatpush1.msra.mxu0 0.0
    %3000 = vmatprep.subr.mxu0 0.0
    %3001 = vmatpush1.msra.mxu0 %v1762
    %3002 = vmatprep.subr.mxu0 0.0
    %3003 = vmatpush2.msra.mxu0 0.0
    %3004 = vmatprep.subr.mxu0 0.0
    %3005 = vmatpush2.msra.mxu0 0.0
    %3006 = vmatprep.subr.mxu0 0.0
    %3007 = vmatpush2.msra.mxu0 0.0
    %3008 = vmatprep.subr.mxu0 0.0
    %3009 = vmatpush2.msra.mxu0 0.0
    %3010 = vmatprep.subr.mxu0 0.0
    %3011 = vmatpush2.msra.mxu0 0.0
    %3012 = vmatprep.subr.mxu0 0.0
    %3013 = vmatpush2.msra.mxu0 0.0
    %3014 = vmatprep.subr.mxu0 0.0
    %3015 = vmatpush2.msra.mxu0 0.0
    %3016 = vmatprep.subr.mxu0 0.0
    %3017 = vmatpush2.msra.mxu0 0.0
    %3018 = vmatprep.subr.mxu0 0.0
    %3019 = vmatpush2.msra.mxu0 0.0
    %3020 = vmatprep.subr.mxu0 0.0
    %3021 = vmatpush2.msra.mxu0 0.0
    %3022 = vmatprep.subr.mxu0 0.0
    %3023 = vmatpush2.msra.mxu0 0.0
    %3024 = vmatprep.subr.mxu0 0.0
    %3025 = vmatpush2.msra.mxu0 0.0
    %3026 = vmatprep.subr.mxu0 0.0
    %3027 = vmatpush2.msra.mxu0 0.0
    %3028 = vmatprep.subr.mxu0 0.0
    %3029 = vmatpush2.msra.mxu0 0.0
    %3030 = vmatprep.subr.mxu0 0.0
    %3031 = vmatpush2.msra.mxu0 0.0
    %3032 = vmatprep.subr.mxu0 0.0
    %3033 = vmatpush2.msra.mxu0 0.0
    %3034 = vmatprep.mubr.f32.mxu0 0.0
    %3035 = vmatmul.mubr.f32.gmra.mxu0 %v2968
    %v3036 = vpop.f32.mrf.mxu0
    %v3037 = vadd.f32 0.0, %v3036
    %v3038 = vpop.f32.mrf.mxu0
    %3039 = vdwg.mxu0
    %v3041 = vsel %vm2732, %v2816, 0
    %3043 = vmatprep.subr.mxu0 0.0
    %3044 = vmatpush1.msra.mxu0 0.0
    %3045 = vmatprep.subr.mxu0 0.0
    %3046 = vmatpush1.msra.mxu0 0.0
    %3047 = vmatprep.subr.mxu0 0.0
    %3048 = vmatpush1.msra.mxu0 0.0
    %3049 = vmatprep.subr.mxu0 0.0
    %3050 = vmatpush1.msra.mxu0 0.0
    %3051 = vmatprep.subr.mxu0 0.0
    %3052 = vmatpush1.msra.mxu0 0.0
    %3053 = vmatprep.subr.mxu0 0.0
    %3054 = vmatpush1.msra.mxu0 0.0
    %3055 = vmatprep.subr.mxu0 0.0
    %3056 = vmatpush1.msra.mxu0 0.0
    %3057 = vmatprep.subr.mxu0 0.0
    %3058 = vmatpush1.msra.mxu0 0.0
    %3059 = vmatprep.subr.mxu0 0.0
    %3060 = vmatpush1.msra.mxu0 0.0
    %3061 = vmatprep.subr.mxu0 0.0
    %3062 = vmatpush1.msra.mxu0 0.0
    %3063 = vmatprep.subr.mxu0 0.0
    %3064 = vmatpush1.msra.mxu0 0.0
    %3065 = vmatprep.subr.mxu0 0.0
    %3066 = vmatpush1.msra.mxu0 0.0
    %3067 = vmatprep.subr.mxu0 0.0
    %3068 = vmatpush1.msra.mxu0 0.0
    %3069 = vmatprep.subr.mxu0 0.0
    %3070 = vmatpush1.msra.mxu0 0.0
    %3071 = vmatprep.subr.mxu0 0.0
    %3072 = vmatpush1.msra.mxu0 0.0
    %3073 = vmatprep.subr.mxu0 0.0
    %3074 = vmatpush1.msra.mxu0 %v1832
    %3075 = vmatprep.subr.mxu0 0.0
    %3076 = vmatpush2.msra.mxu0 0.0
    %3077 = vmatprep.subr.mxu0 0.0
    %3078 = vmatpush2.msra.mxu0 0.0
    %3079 = vmatprep.subr.mxu0 0.0
    %3080 = vmatpush2.msra.mxu0 0.0
    %3081 = vmatprep.subr.mxu0 0.0
    %3082 = vmatpush2.msra.mxu0 0.0
    %3083 = vmatprep.subr.mxu0 0.0
    %3084 = vmatpush2.msra.mxu0 0.0
    %3085 = vmatprep.subr.mxu0 0.0
    %3086 = vmatpush2.msra.mxu0 0.0
    %3087 = vmatprep.subr.mxu0 0.0
    %3088 = vmatpush2.msra.mxu0 0.0
    %3089 = vmatprep.subr.mxu0 0.0
    %3090 = vmatpush2.msra.mxu0 0.0
    %3091 = vmatprep.subr.mxu0 0.0
    %3092 = vmatpush2.msra.mxu0 0.0
    %3093 = vmatprep.subr.mxu0 0.0
    %3094 = vmatpush2.msra.mxu0 0.0
    %3095 = vmatprep.subr.mxu0 0.0
    %3096 = vmatpush2.msra.mxu0 0.0
    %3097 = vmatprep.subr.mxu0 0.0
    %3098 = vmatpush2.msra.mxu0 0.0
    %3099 = vmatprep.subr.mxu0 0.0
    %3100 = vmatpush2.msra.mxu0 0.0
    %3101 = vmatprep.subr.mxu0 0.0
    %3102 = vmatpush2.msra.mxu0 0.0
    %3103 = vmatprep.subr.mxu0 0.0
    %3104 = vmatpush2.msra.mxu0 0.0
    %3105 = vmatprep.subr.mxu0 0.0
    %3106 = vmatpush2.msra.mxu0 0.0
    %3107 = vmatprep.mubr.f32.mxu0 0.0
    %3108 = vmatmul.mubr.f32.gmra.mxu0 %v3041
    %v3109 = vpop.f32.mrf.mxu0
    %v3110 = vadd.f32 0.0, %v3109
    %v3111 = vpop.f32.mrf.mxu0
    %3112 = vdwg.mxu0
    %v3114 = vsel %vm2732, %v2817, 0
    %3116 = vmatprep.subr.mxu0 0.0
    %3117 = vmatpush1.msra.mxu0 0.0
    %3118 = vmatprep.subr.mxu0 0.0
    %3119 = vmatpush1.msra.mxu0 0.0
    %3120 = vmatprep.subr.mxu0 0.0
    %3121 = vmatpush1.msra.mxu0 0.0
    %3122 = vmatprep.subr.mxu0 0.0
    %3123 = vmatpush1.msra.mxu0 0.0
    %3124 = vmatprep.subr.mxu0 0.0
    %3125 = vmatpush1.msra.mxu0 0.0
    %3126 = vmatprep.subr.mxu0 0.0
    %3127 = vmatpush1.msra.mxu0 0.0
    %3128 = vmatprep.subr.mxu0 0.0
    %3129 = vmatpush1.msra.mxu0 0.0
    %3130 = vmatprep.subr.mxu0 0.0
    %3131 = vmatpush1.msra.mxu0 0.0
    %3132 = vmatprep.subr.mxu0 0.0
    %3133 = vmatpush1.msra.mxu0 0.0
    %3134 = vmatprep.subr.mxu0 0.0
    %3135 = vmatpush1.msra.mxu0 0.0
    %3136 = vmatprep.subr.mxu0 0.0
    %3137 = vmatpush1.msra.mxu0 0.0
    %3138 = vmatprep.subr.mxu0 0.0
    %3139 = vmatpush1.msra.mxu0 0.0
    %3140 = vmatprep.subr.mxu0 0.0
    %3141 = vmatpush1.msra.mxu0 0.0
    %3142 = vmatprep.subr.mxu0 0.0
    %3143 = vmatpush1.msra.mxu0 0.0
    %3144 = vmatprep.subr.mxu0 0.0
    %3145 = vmatpush1.msra.mxu0 0.0
    %3146 = vmatprep.subr.mxu0 0.0
    %3147 = vmatpush1.msra.mxu0 %v1902
    %3148 = vmatprep.subr.mxu0 0.0
    %3149 = vmatpush2.msra.mxu0 0.0
    %3150 = vmatprep.subr.mxu0 0.0
    %3151 = vmatpush2.msra.mxu0 0.0
    %3152 = vmatprep.subr.mxu0 0.0
    %3153 = vmatpush2.msra.mxu0 0.0
    %3154 = vmatprep.subr.mxu0 0.0
    %3155 = vmatpush2.msra.mxu0 0.0
    %3156 = vmatprep.subr.mxu0 0.0
    %3157 = vmatpush2.msra.mxu0 0.0
    %3158 = vmatprep.subr.mxu0 0.0
    %3159 = vmatpush2.msra.mxu0 0.0
    %3160 = vmatprep.subr.mxu0 0.0
    %3161 = vmatpush2.msra.mxu0 0.0
    %3162 = vmatprep.subr.mxu0 0.0
    %3163 = vmatpush2.msra.mxu0 0.0
    %3164 = vmatprep.subr.mxu0 0.0
    %3165 = vmatpush2.msra.mxu0 0.0
    %3166 = vmatprep.subr.mxu0 0.0
    %3167 = vmatpush2.msra.mxu0 0.0
    %3168 = vmatprep.subr.mxu0 0.0
    %3169 = vmatpush2.msra.mxu0 0.0
    %3170 = vmatprep.subr.mxu0 0.0
    %3171 = vmatpush2.msra.mxu0 0.0
    %3172 = vmatprep.subr.mxu0 0.0
    %3173 = vmatpush2.msra.mxu0 0.0
    %3174 = vmatprep.subr.mxu0 0.0
    %3175 = vmatpush2.msra.mxu0 0.0
    %3176 = vmatprep.subr.mxu0 0.0
    %3177 = vmatpush2.msra.mxu0 0.0
    %3178 = vmatprep.subr.mxu0 0.0
    %3179 = vmatpush2.msra.mxu0 0.0
    %3180 = vmatprep.mubr.f32.mxu0 0.0
    %3181 = vmatmul.mubr.f32.gmra.mxu0 %v3114
    %v3182 = vpop.f32.mrf.mxu0
    %v3183 = vadd.f32 0.0, %v3182
    %v3184 = vpop.f32.mrf.mxu0
    %3185 = vdwg.mxu0
    %v3187 = vsel %vm2732, %v2818, 0
    %3189 = vmatprep.subr.mxu0 0.0
    %3190 = vmatpush1.msra.mxu0 0.0
    %3191 = vmatprep.subr.mxu0 0.0
    %3192 = vmatpush1.msra.mxu0 0.0
    %3193 = vmatprep.subr.mxu0 0.0
    %3194 = vmatpush1.msra.mxu0 0.0
    %3195 = vmatprep.subr.mxu0 0.0
    %3196 = vmatpush1.msra.mxu0 0.0
    %3197 = vmatprep.subr.mxu0 0.0
    %3198 = vmatpush1.msra.mxu0 0.0
    %3199 = vmatprep.subr.mxu0 0.0
    %3200 = vmatpush1.msra.mxu0 0.0
    %3201 = vmatprep.subr.mxu0 0.0
    %3202 = vmatpush1.msra.mxu0 0.0
    %3203 = vmatprep.subr.mxu0 0.0
    %3204 = vmatpush1.msra.mxu0 0.0
    %3205 = vmatprep.subr.mxu0 0.0
    %3206 = vmatpush1.msra.mxu0 0.0
    %3207 = vmatprep.subr.mxu0 0.0
    %3208 = vmatpush1.msra.mxu0 0.0
    %3209 = vmatprep.subr.mxu0 0.0
    %3210 = vmatpush1.msra.mxu0 0.0
    %3211 = vmatprep.subr.mxu0 0.0
    %3212 = vmatpush1.msra.mxu0 0.0
    %3213 = vmatprep.subr.mxu0 0.0
    %3214 = vmatpush1.msra.mxu0 0.0
    %3215 = vmatprep.subr.mxu0 0.0
    %3216 = vmatpush1.msra.mxu0 0.0
    %3217 = vmatprep.subr.mxu0 0.0
    %3218 = vmatpush1.msra.mxu0 0.0
    %3219 = vmatprep.subr.mxu0 0.0
    %3220 = vmatpush1.msra.mxu0 %v1972
    %3221 = vmatprep.subr.mxu0 0.0
    %3222 = vmatpush2.msra.mxu0 0.0
    %3223 = vmatprep.subr.mxu0 0.0
    %3224 = vmatpush2.msra.mxu0 0.0
    %3225 = vmatprep.subr.mxu0 0.0
    %3226 = vmatpush2.msra.mxu0 0.0
    %3227 = vmatprep.subr.mxu0 0.0
    %3228 = vmatpush2.msra.mxu0 0.0
    %3229 = vmatprep.subr.mxu0 0.0
    %3230 = vmatpush2.msra.mxu0 0.0
    %3231 = vmatprep.subr.mxu0 0.0
    %3232 = vmatpush2.msra.mxu0 0.0
    %3233 = vmatprep.subr.mxu0 0.0
    %3234 = vmatpush2.msra.mxu0 0.0
    %3235 = vmatprep.subr.mxu0 0.0
    %3236 = vmatpush2.msra.mxu0 0.0
    %3237 = vmatprep.subr.mxu0 0.0
    %3238 = vmatpush2.msra.mxu0 0.0
    %3239 = vmatprep.subr.mxu0 0.0
    %3240 = vmatpush2.msra.mxu0 0.0
    %3241 = vmatprep.subr.mxu0 0.0
    %3242 = vmatpush2.msra.mxu0 0.0
    %3243 = vmatprep.subr.mxu0 0.0
    %3244 = vmatpush2.msra.mxu0 0.0
    %3245 = vmatprep.subr.mxu0 0.0
    %3246 = vmatpush2.msra.mxu0 0.0
    %3247 = vmatprep.subr.mxu0 0.0
    %3248 = vmatpush2.msra.mxu0 0.0
    %3249 = vmatprep.subr.mxu0 0.0
    %3250 = vmatpush2.msra.mxu0 0.0
    %3251 = vmatprep.subr.mxu0 0.0
    %3252 = vmatpush2.msra.mxu0 0.0
    %3253 = vmatprep.mubr.f32.mxu0 0.0
    %3254 = vmatmul.mubr.f32.gmra.mxu0 %v3187
    %v3255 = vpop.f32.mrf.mxu0
    %v3256 = vadd.f32 0.0, %v3255
    %v3257 = vpop.f32.mrf.mxu0
    %3258 = vdwg.mxu0
    %v3260 = vsel %vm2732, %v2819, 0
    %3262 = vmatprep.subr.mxu0 0.0
    %3263 = vmatpush1.msra.mxu0 0.0
    %3264 = vmatprep.subr.mxu0 0.0
    %3265 = vmatpush1.msra.mxu0 0.0
    %3266 = vmatprep.subr.mxu0 0.0
    %3267 = vmatpush1.msra.mxu0 0.0
    %3268 = vmatprep.subr.mxu0 0.0
    %3269 = vmatpush1.msra.mxu0 0.0
    %3270 = vmatprep.subr.mxu0 0.0
    %3271 = vmatpush1.msra.mxu0 0.0
    %3272 = vmatprep.subr.mxu0 0.0
    %3273 = vmatpush1.msra.mxu0 0.0
    %3274 = vmatprep.subr.mxu0 0.0
    %3275 = vmatpush1.msra.mxu0 0.0
    %3276 = vmatprep.subr.mxu0 0.0
    %3277 = vmatpush1.msra.mxu0 0.0
    %3278 = vmatprep.subr.mxu0 0.0
    %3279 = vmatpush1.msra.mxu0 0.0
    %3280 = vmatprep.subr.mxu0 0.0
    %3281 = vmatpush1.msra.mxu0 0.0
    %3282 = vmatprep.subr.mxu0 0.0
    %3283 = vmatpush1.msra.mxu0 0.0
    %3284 = vmatprep.subr.mxu0 0.0
    %3285 = vmatpush1.msra.mxu0 0.0
    %3286 = vmatprep.subr.mxu0 0.0
    %3287 = vmatpush1.msra.mxu0 0.0
    %3288 = vmatprep.subr.mxu0 0.0
    %3289 = vmatpush1.msra.mxu0 0.0
    %3290 = vmatprep.subr.mxu0 0.0
    %3291 = vmatpush1.msra.mxu0 0.0
    %3292 = vmatprep.subr.mxu0 0.0
    %3293 = vmatpush1.msra.mxu0 %v2042
    %3294 = vmatprep.subr.mxu0 0.0
    %3295 = vmatpush2.msra.mxu0 0.0
    %3296 = vmatprep.subr.mxu0 0.0
    %3297 = vmatpush2.msra.mxu0 0.0
    %3298 = vmatprep.subr.mxu0 0.0
    %3299 = vmatpush2.msra.mxu0 0.0
    %3300 = vmatprep.subr.mxu0 0.0
    %3301 = vmatpush2.msra.mxu0 0.0
    %3302 = vmatprep.subr.mxu0 0.0
    %3303 = vmatpush2.msra.mxu0 0.0
    %3304 = vmatprep.subr.mxu0 0.0
    %3305 = vmatpush2.msra.mxu0 0.0
    %3306 = vmatprep.subr.mxu0 0.0
    %3307 = vmatpush2.msra.mxu0 0.0
    %3308 = vmatprep.subr.mxu0 0.0
    %3309 = vmatpush2.msra.mxu0 0.0
    %3310 = vmatprep.subr.mxu0 0.0
    %3311 = vmatpush2.msra.mxu0 0.0
    %3312 = vmatprep.subr.mxu0 0.0
    %3313 = vmatpush2.msra.mxu0 0.0
    %3314 = vmatprep.subr.mxu0 0.0
    %3315 = vmatpush2.msra.mxu0 0.0
    %3316 = vmatprep.subr.mxu0 0.0
    %3317 = vmatpush2.msra.mxu0 0.0
    %3318 = vmatprep.subr.mxu0 0.0
    %3319 = vmatpush2.msra.mxu0 0.0
    %3320 = vmatprep.subr.mxu0 0.0
    %3321 = vmatpush2.msra.mxu0 0.0
    %3322 = vmatprep.subr.mxu0 0.0
    %3323 = vmatpush2.msra.mxu0 0.0
    %3324 = vmatprep.subr.mxu0 0.0
    %3325 = vmatpush2.msra.mxu0 0.0
    %3326 = vmatprep.mubr.f32.mxu0 0.0
    %3327 = vmatmul.mubr.f32.gmra.mxu0 %v3260
    %v3328 = vpop.f32.mrf.mxu0
    %v3329 = vadd.f32 0.0, %v3328
    %v3330 = vpop.f32.mrf.mxu0
    %3331 = vdwg.mxu0
    %v3333 = vsel %vm2732, %v2820, 0
    %3335 = vmatprep.subr.mxu0 0.0
    %3336 = vmatpush1.msra.mxu0 0.0
    %3337 = vmatprep.subr.mxu0 0.0
    %3338 = vmatpush1.msra.mxu0 0.0
    %3339 = vmatprep.subr.mxu0 0.0
    %3340 = vmatpush1.msra.mxu0 0.0
    %3341 = vmatprep.subr.mxu0 0.0
    %3342 = vmatpush1.msra.mxu0 0.0
    %3343 = vmatprep.subr.mxu0 0.0
    %3344 = vmatpush1.msra.mxu0 0.0
    %3345 = vmatprep.subr.mxu0 0.0
    %3346 = vmatpush1.msra.mxu0 0.0
    %3347 = vmatprep.subr.mxu0 0.0
    %3348 = vmatpush1.msra.mxu0 0.0
    %3349 = vmatprep.subr.mxu0 0.0
    %3350 = vmatpush1.msra.mxu0 0.0
    %3351 = vmatprep.subr.mxu0 0.0
    %3352 = vmatpush1.msra.mxu0 0.0
    %3353 = vmatprep.subr.mxu0 0.0
    %3354 = vmatpush1.msra.mxu0 0.0
    %3355 = vmatprep.subr.mxu0 0.0
    %3356 = vmatpush1.msra.mxu0 0.0
    %3357 = vmatprep.subr.mxu0 0.0
    %3358 = vmatpush1.msra.mxu0 0.0
    %3359 = vmatprep.subr.mxu0 0.0
    %3360 = vmatpush1.msra.mxu0 0.0
    %3361 = vmatprep.subr.mxu0 0.0
    %3362 = vmatpush1.msra.mxu0 0.0
    %3363 = vmatprep.subr.mxu0 0.0
    %3364 = vmatpush1.msra.mxu0 0.0
    %3365 = vmatprep.subr.mxu0 0.0
    %3366 = vmatpush1.msra.mxu0 %v2112
    %3367 = vmatprep.subr.mxu0 0.0
    %3368 = vmatpush2.msra.mxu0 0.0
    %3369 = vmatprep.subr.mxu0 0.0
    %3370 = vmatpush2.msra.mxu0 0.0
    %3371 = vmatprep.subr.mxu0 0.0
    %3372 = vmatpush2.msra.mxu0 0.0
    %3373 = vmatprep.subr.mxu0 0.0
    %3374 = vmatpush2.msra.mxu0 0.0
    %3375 = vmatprep.subr.mxu0 0.0
    %3376 = vmatpush2.msra.mxu0 0.0
    %3377 = vmatprep.subr.mxu0 0.0
    %3378 = vmatpush2.msra.mxu0 0.0
    %3379 = vmatprep.subr.mxu0 0.0
    %3380 = vmatpush2.msra.mxu0 0.0
    %3381 = vmatprep.subr.mxu0 0.0
    %3382 = vmatpush2.msra.mxu0 0.0
    %3383 = vmatprep.subr.mxu0 0.0
    %3384 = vmatpush2.msra.mxu0 0.0
    %3385 = vmatprep.subr.mxu0 0.0
    %3386 = vmatpush2.msra.mxu0 0.0
    %3387 = vmatprep.subr.mxu0 0.0
    %3388 = vmatpush2.msra.mxu0 0.0
    %3389 = vmatprep.subr.mxu0 0.0
    %3390 = vmatpush2.msra.mxu0 0.0
    %3391 = vmatprep.subr.mxu0 0.0
    %3392 = vmatpush2.msra.mxu0 0.0
    %3393 = vmatprep.subr.mxu0 0.0
    %3394 = vmatpush2.msra.mxu0 0.0
    %3395 = vmatprep.subr.mxu0 0.0
    %3396 = vmatpush2.msra.mxu0 0.0
    %3397 = vmatprep.subr.mxu0 0.0
    %3398 = vmatpush2.msra.mxu0 0.0
    %3399 = vmatprep.mubr.f32.mxu0 0.0
    %3400 = vmatmul.mubr.f32.gmra.mxu0 %v3333
    %v3401 = vpop.f32.mrf.mxu0
    %v3402 = vadd.f32 0.0, %v3401
    %v3403 = vpop.f32.mrf.mxu0
    %3404 = vdwg.mxu0
    %v3405 = vld [vmem:[%s10] sm:$0xff]
    %v3406 = vld [vmem:[%s10 + $0x8] sm:$0xff]
    %v3407 = vld [vmem:[%s10 + $0x10] sm:$0xff]
    %v3408 = vld [vmem:[%s10 + $0x18] sm:$0xff]
    %v3409 = vld [vmem:[%s10 + $0x20] sm:$0xff]
    %v3410 = vld [vmem:[%s10 + $0x28] sm:$0xff]
    %v3411 = vld [vmem:[%s10 + $0x30] sm:$0xff]
    %v3412 = vld [vmem:[%s10 + $0x38] sm:$0xff]
    %v3413 = vld [vmem:[%s10 + $0x40] sm:$0xff]
    %v3414 = vld [vmem:[%s10 + $0x48] sm:$0xff]
    %v3415 = vld [vmem:[%s10 + $0x50] sm:$0xff]
    %v3416 = vld [vmem:[%s10 + $0x58] sm:$0xff]
    %v3417 = vld [vmem:[%s10 + $0x60] sm:$0xff]
    %v3418 = vld [vmem:[%s10 + $0x68] sm:$0xff]
    %v3419 = vld [vmem:[%s10 + $0x70] sm:$0xff]
    %v3420 = vld [vmem:[%s10 + $0x78] sm:$0xff]
    %v3422 = vsel %vm2123, %v2891, 0
    %3424 = vmatprep.subr.mxu0 0.0
    %3425 = vmatpush1.msra.mxu0 0.0
    %3426 = vmatprep.subr.mxu0 0.0
    %3427 = vmatpush1.msra.mxu0 0.0
    %3428 = vmatprep.subr.mxu0 0.0
    %3429 = vmatpush1.msra.mxu0 0.0
    %3430 = vmatprep.subr.mxu0 0.0
    %3431 = vmatpush1.msra.mxu0 0.0
    %3432 = vmatprep.subr.mxu0 0.0
    %3433 = vmatpush1.msra.mxu0 0.0
    %3434 = vmatprep.subr.mxu0 0.0
    %3435 = vmatpush1.msra.mxu0 0.0
    %3436 = vmatprep.subr.mxu0 0.0
    %3437 = vmatpush1.msra.mxu0 0.0
    %3438 = vmatprep.subr.mxu0 0.0
    %3439 = vmatpush1.msra.mxu0 0.0
    %3440 = vmatprep.subr.mxu0 0.0
    %3441 = vmatpush1.msra.mxu0 0.0
    %3442 = vmatprep.subr.mxu0 0.0
    %3443 = vmatpush1.msra.mxu0 0.0
    %3444 = vmatprep.subr.mxu0 0.0
    %3445 = vmatpush1.msra.mxu0 0.0
    %3446 = vmatprep.subr.mxu0 0.0
    %3447 = vmatpush1.msra.mxu0 0.0
    %3448 = vmatprep.subr.mxu0 0.0
    %3449 = vmatpush1.msra.mxu0 0.0
    %3450 = vmatprep.subr.mxu0 0.0
    %3451 = vmatpush1.msra.mxu0 0.0
    %3452 = vmatprep.subr.mxu0 0.0
    %3453 = vmatpush1.msra.mxu0 %v3406
    %3454 = vmatprep.subr.mxu0 0.0
    %3455 = vmatpush1.msra.mxu0 %v3405
    %3456 = vmatprep.subr.mxu0 0.0
    %3457 = vmatpush2.msra.mxu0 0.0
    %3458 = vmatprep.subr.mxu0 0.0
    %3459 = vmatpush2.msra.mxu0 0.0
    %3460 = vmatprep.subr.mxu0 0.0
    %3461 = vmatpush2.msra.mxu0 0.0
    %3462 = vmatprep.subr.mxu0 0.0
    %3463 = vmatpush2.msra.mxu0 0.0
    %3464 = vmatprep.subr.mxu0 0.0
    %3465 = vmatpush2.msra.mxu0 0.0
    %3466 = vmatprep.subr.mxu0 0.0
    %3467 = vmatpush2.msra.mxu0 0.0
    %3468 = vmatprep.subr.mxu0 0.0
    %3469 = vmatpush2.msra.mxu0 0.0
    %3470 = vmatprep.subr.mxu0 0.0
    %3471 = vmatpush2.msra.mxu0 0.0
    %3472 = vmatprep.subr.mxu0 0.0
    %3473 = vmatpush2.msra.mxu0 0.0
    %3474 = vmatprep.subr.mxu0 0.0
    %3475 = vmatpush2.msra.mxu0 0.0
    %3476 = vmatprep.subr.mxu0 0.0
    %3477 = vmatpush2.msra.mxu0 0.0
    %3478 = vmatprep.subr.mxu0 0.0
    %3479 = vmatpush2.msra.mxu0 0.0
    %3480 = vmatprep.subr.mxu0 0.0
    %3481 = vmatpush2.msra.mxu0 0.0
    %3482 = vmatprep.subr.mxu0 0.0
    %3483 = vmatpush2.msra.mxu0 0.0
    %3484 = vmatprep.subr.mxu0 0.0
    %3485 = vmatpush2.msra.mxu0 0.0
    %3486 = vmatprep.subr.mxu0 0.0
    %3487 = vmatpush2.msra.mxu0 0.0
    %3488 = vmatprep.mubr.f32.mxu0 0.0
    %3489 = vmatmul.mubr.f32.gmra.mxu0 %v3422
    %v3490 = vpop.f32.mrf.mxu0
    %v3491 = vadd.f32 0.0, %v3490
    %v3492 = vpop.f32.mrf.mxu0
    %3493 = vdwg.mxu0
    %v3495 = vsel %vm2123, %v2964, 0
    %3497 = vmatprep.subr.mxu0 0.0
    %3498 = vmatpush1.msra.mxu0 0.0
    %3499 = vmatprep.subr.mxu0 0.0
    %3500 = vmatpush1.msra.mxu0 0.0
    %3501 = vmatprep.subr.mxu0 0.0
    %3502 = vmatpush1.msra.mxu0 0.0
    %3503 = vmatprep.subr.mxu0 0.0
    %3504 = vmatpush1.msra.mxu0 0.0
    %3505 = vmatprep.subr.mxu0 0.0
    %3506 = vmatpush1.msra.mxu0 0.0
    %3507 = vmatprep.subr.mxu0 0.0
    %3508 = vmatpush1.msra.mxu0 0.0
    %3509 = vmatprep.subr.mxu0 0.0
    %3510 = vmatpush1.msra.mxu0 0.0
    %3511 = vmatprep.subr.mxu0 0.0
    %3512 = vmatpush1.msra.mxu0 0.0
    %3513 = vmatprep.subr.mxu0 0.0
    %3514 = vmatpush1.msra.mxu0 0.0
    %3515 = vmatprep.subr.mxu0 0.0
    %3516 = vmatpush1.msra.mxu0 0.0
    %3517 = vmatprep.subr.mxu0 0.0
    %3518 = vmatpush1.msra.mxu0 0.0
    %3519 = vmatprep.subr.mxu0 0.0
    %3520 = vmatpush1.msra.mxu0 0.0
    %3521 = vmatprep.subr.mxu0 0.0
    %3522 = vmatpush1.msra.mxu0 0.0
    %3523 = vmatprep.subr.mxu0 0.0
    %3524 = vmatpush1.msra.mxu0 0.0
    %3525 = vmatprep.subr.mxu0 0.0
    %3526 = vmatpush1.msra.mxu0 %v3408
    %3527 = vmatprep.subr.mxu0 0.0
    %3528 = vmatpush1.msra.mxu0 %v3407
    %3529 = vmatprep.subr.mxu0 0.0
    %3530 = vmatpush2.msra.mxu0 0.0
    %3531 = vmatprep.subr.mxu0 0.0
    %3532 = vmatpush2.msra.mxu0 0.0
    %3533 = vmatprep.subr.mxu0 0.0
    %3534 = vmatpush2.msra.mxu0 0.0
    %3535 = vmatprep.subr.mxu0 0.0
    %3536 = vmatpush2.msra.mxu0 0.0
    %3537 = vmatprep.subr.mxu0 0.0
    %3538 = vmatpush2.msra.mxu0 0.0
    %3539 = vmatprep.subr.mxu0 0.0
    %3540 = vmatpush2.msra.mxu0 0.0
    %3541 = vmatprep.subr.mxu0 0.0
    %3542 = vmatpush2.msra.mxu0 0.0
    %3543 = vmatprep.subr.mxu0 0.0
    %3544 = vmatpush2.msra.mxu0 0.0
    %3545 = vmatprep.subr.mxu0 0.0
    %3546 = vmatpush2.msra.mxu0 0.0
    %3547 = vmatprep.subr.mxu0 0.0
    %3548 = vmatpush2.msra.mxu0 0.0
    %3549 = vmatprep.subr.mxu0 0.0
    %3550 = vmatpush2.msra.mxu0 0.0
    %3551 = vmatprep.subr.mxu0 0.0
    %3552 = vmatpush2.msra.mxu0 0.0
    %3553 = vmatprep.subr.mxu0 0.0
    %3554 = vmatpush2.msra.mxu0 0.0
    %3555 = vmatprep.subr.mxu0 0.0
    %3556 = vmatpush2.msra.mxu0 0.0
    %3557 = vmatprep.subr.mxu0 0.0
    %3558 = vmatpush2.msra.mxu0 0.0
    %3559 = vmatprep.subr.mxu0 0.0
    %3560 = vmatpush2.msra.mxu0 0.0
    %3561 = vmatprep.mubr.f32.mxu0 0.0
    %3562 = vmatmul.mubr.f32.gmra.mxu0 %v3495
    %v3563 = vpop.f32.mrf.mxu0
    %v3564 = vadd.f32 0.0, %v3563
    %v3565 = vpop.f32.mrf.mxu0
    %3566 = vdwg.mxu0
    %v3568 = vsel %vm2123, %v3037, 0
    %3570 = vmatprep.subr.mxu0 0.0
    %3571 = vmatpush1.msra.mxu0 0.0
    %3572 = vmatprep.subr.mxu0 0.0
    %3573 = vmatpush1.msra.mxu0 0.0
    %3574 = vmatprep.subr.mxu0 0.0
    %3575 = vmatpush1.msra.mxu0 0.0
    %3576 = vmatprep.subr.mxu0 0.0
    %3577 = vmatpush1.msra.mxu0 0.0
    %3578 = vmatprep.subr.mxu0 0.0
    %3579 = vmatpush1.msra.mxu0 0.0
    %3580 = vmatprep.subr.mxu0 0.0
    %3581 = vmatpush1.msra.mxu0 0.0
    %3582 = vmatprep.subr.mxu0 0.0
    %3583 = vmatpush1.msra.mxu0 0.0
    %3584 = vmatprep.subr.mxu0 0.0
    %3585 = vmatpush1.msra.mxu0 0.0
    %3586 = vmatprep.subr.mxu0 0.0
    %3587 = vmatpush1.msra.mxu0 0.0
    %3588 = vmatprep.subr.mxu0 0.0
    %3589 = vmatpush1.msra.mxu0 0.0
    %3590 = vmatprep.subr.mxu0 0.0
    %3591 = vmatpush1.msra.mxu0 0.0
    %3592 = vmatprep.subr.mxu0 0.0
    %3593 = vmatpush1.msra.mxu0 0.0
    %3594 = vmatprep.subr.mxu0 0.0
    %3595 = vmatpush1.msra.mxu0 0.0
    %3596 = vmatprep.subr.mxu0 0.0
    %3597 = vmatpush1.msra.mxu0 0.0
    %3598 = vmatprep.subr.mxu0 0.0
    %3599 = vmatpush1.msra.mxu0 %v3410
    %3600 = vmatprep.subr.mxu0 0.0
    %3601 = vmatpush1.msra.mxu0 %v3409
    %3602 = vmatprep.subr.mxu0 0.0
    %3603 = vmatpush2.msra.mxu0 0.0
    %3604 = vmatprep.subr.mxu0 0.0
    %3605 = vmatpush2.msra.mxu0 0.0
    %3606 = vmatprep.subr.mxu0 0.0
    %3607 = vmatpush2.msra.mxu0 0.0
    %3608 = vmatprep.subr.mxu0 0.0
    %3609 = vmatpush2.msra.mxu0 0.0
    %3610 = vmatprep.subr.mxu0 0.0
    %3611 = vmatpush2.msra.mxu0 0.0
    %3612 = vmatprep.subr.mxu0 0.0
    %3613 = vmatpush2.msra.mxu0 0.0
    %3614 = vmatprep.subr.mxu0 0.0
    %3615 = vmatpush2.msra.mxu0 0.0
    %3616 = vmatprep.subr.mxu0 0.0
    %3617 = vmatpush2.msra.mxu0 0.0
    %3618 = vmatprep.subr.mxu0 0.0
    %3619 = vmatpush2.msra.mxu0 0.0
    %3620 = vmatprep.subr.mxu0 0.0
    %3621 = vmatpush2.msra.mxu0 0.0
    %3622 = vmatprep.subr.mxu0 0.0
    %3623 = vmatpush2.msra.mxu0 0.0
    %3624 = vmatprep.subr.mxu0 0.0
    %3625 = vmatpush2.msra.mxu0 0.0
    %3626 = vmatprep.subr.mxu0 0.0
    %3627 = vmatpush2.msra.mxu0 0.0
    %3628 = vmatprep.subr.mxu0 0.0
    %3629 = vmatpush2.msra.mxu0 0.0
    %3630 = vmatprep.subr.mxu0 0.0
    %3631 = vmatpush2.msra.mxu0 0.0
    %3632 = vmatprep.subr.mxu0 0.0
    %3633 = vmatpush2.msra.mxu0 0.0
    %3634 = vmatprep.mubr.f32.mxu0 0.0
    %3635 = vmatmul.mubr.f32.gmra.mxu0 %v3568
    %v3636 = vpop.f32.mrf.mxu0
    %v3637 = vadd.f32 0.0, %v3636
    %v3638 = vpop.f32.mrf.mxu0
    %3639 = vdwg.mxu0
    %v3641 = vsel %vm2123, %v3110, 0
    %3643 = vmatprep.subr.mxu0 0.0
    %3644 = vmatpush1.msra.mxu0 0.0
    %3645 = vmatprep.subr.mxu0 0.0
    %3646 = vmatpush1.msra.mxu0 0.0
    %3647 = vmatprep.subr.mxu0 0.0
    %3648 = vmatpush1.msra.mxu0 0.0
    %3649 = vmatprep.subr.mxu0 0.0
    %3650 = vmatpush1.msra.mxu0 0.0
    %3651 = vmatprep.subr.mxu0 0.0
    %3652 = vmatpush1.msra.mxu0 0.0
    %3653 = vmatprep.subr.mxu0 0.0
    %3654 = vmatpush1.msra.mxu0 0.0
    %3655 = vmatprep.subr.mxu0 0.0
    %3656 = vmatpush1.msra.mxu0 0.0
    %3657 = vmatprep.subr.mxu0 0.0
    %3658 = vmatpush1.msra.mxu0 0.0
    %3659 = vmatprep.subr.mxu0 0.0
    %3660 = vmatpush1.msra.mxu0 0.0
    %3661 = vmatprep.subr.mxu0 0.0
    %3662 = vmatpush1.msra.mxu0 0.0
    %3663 = vmatprep.subr.mxu0 0.0
    %3664 = vmatpush1.msra.mxu0 0.0
    %3665 = vmatprep.subr.mxu0 0.0
    %3666 = vmatpush1.msra.mxu0 0.0
    %3667 = vmatprep.subr.mxu0 0.0
    %3668 = vmatpush1.msra.mxu0 0.0
    %3669 = vmatprep.subr.mxu0 0.0
    %3670 = vmatpush1.msra.mxu0 0.0
    %3671 = vmatprep.subr.mxu0 0.0
    %3672 = vmatpush1.msra.mxu0 %v3412
    %3673 = vmatprep.subr.mxu0 0.0
    %3674 = vmatpush1.msra.mxu0 %v3411
    %3675 = vmatprep.subr.mxu0 0.0
    %3676 = vmatpush2.msra.mxu0 0.0
    %3677 = vmatprep.subr.mxu0 0.0
    %3678 = vmatpush2.msra.mxu0 0.0
    %3679 = vmatprep.subr.mxu0 0.0
    %3680 = vmatpush2.msra.mxu0 0.0
    %3681 = vmatprep.subr.mxu0 0.0
    %3682 = vmatpush2.msra.mxu0 0.0
    %3683 = vmatprep.subr.mxu0 0.0
    %3684 = vmatpush2.msra.mxu0 0.0
    %3685 = vmatprep.subr.mxu0 0.0
    %3686 = vmatpush2.msra.mxu0 0.0
    %3687 = vmatprep.subr.mxu0 0.0
    %3688 = vmatpush2.msra.mxu0 0.0
    %3689 = vmatprep.subr.mxu0 0.0
    %3690 = vmatpush2.msra.mxu0 0.0
    %3691 = vmatprep.subr.mxu0 0.0
    %3692 = vmatpush2.msra.mxu0 0.0
    %3693 = vmatprep.subr.mxu0 0.0
    %3694 = vmatpush2.msra.mxu0 0.0
    %3695 = vmatprep.subr.mxu0 0.0
    %3696 = vmatpush2.msra.mxu0 0.0
    %3697 = vmatprep.subr.mxu0 0.0
    %3698 = vmatpush2.msra.mxu0 0.0
    %3699 = vmatprep.subr.mxu0 0.0
    %3700 = vmatpush2.msra.mxu0 0.0
    %3701 = vmatprep.subr.mxu0 0.0
    %3702 = vmatpush2.msra.mxu0 0.0
    %3703 = vmatprep.subr.mxu0 0.0
    %3704 = vmatpush2.msra.mxu0 0.0
    %3705 = vmatprep.subr.mxu0 0.0
    %3706 = vmatpush2.msra.mxu0 0.0
    %3707 = vmatprep.mubr.f32.mxu0 0.0
    %3708 = vmatmul.mubr.f32.gmra.mxu0 %v3641
    %v3709 = vpop.f32.mrf.mxu0
    %v3710 = vadd.f32 0.0, %v3709
    %v3711 = vpop.f32.mrf.mxu0
    %3712 = vdwg.mxu0
    %v3714 = vsel %vm2123, %v3183, 0
    %3716 = vmatprep.subr.mxu0 0.0
    %3717 = vmatpush1.msra.mxu0 0.0
    %3718 = vmatprep.subr.mxu0 0.0
    %3719 = vmatpush1.msra.mxu0 0.0
    %3720 = vmatprep.subr.mxu0 0.0
    %3721 = vmatpush1.msra.mxu0 0.0
    %3722 = vmatprep.subr.mxu0 0.0
    %3723 = vmatpush1.msra.mxu0 0.0
    %3724 = vmatprep.subr.mxu0 0.0
    %3725 = vmatpush1.msra.mxu0 0.0
    %3726 = vmatprep.subr.mxu0 0.0
    %3727 = vmatpush1.msra.mxu0 0.0
    %3728 = vmatprep.subr.mxu0 0.0
    %3729 = vmatpush1.msra.mxu0 0.0
    %3730 = vmatprep.subr.mxu0 0.0
    %3731 = vmatpush1.msra.mxu0 0.0
    %3732 = vmatprep.subr.mxu0 0.0
    %3733 = vmatpush1.msra.mxu0 0.0
    %3734 = vmatprep.subr.mxu0 0.0
    %3735 = vmatpush1.msra.mxu0 0.0
    %3736 = vmatprep.subr.mxu0 0.0
    %3737 = vmatpush1.msra.mxu0 0.0
    %3738 = vmatprep.subr.mxu0 0.0
    %3739 = vmatpush1.msra.mxu0 0.0
    %3740 = vmatprep.subr.mxu0 0.0
    %3741 = vmatpush1.msra.mxu0 0.0
    %3742 = vmatprep.subr.mxu0 0.0
    %3743 = vmatpush1.msra.mxu0 0.0
    %3744 = vmatprep.subr.mxu0 0.0
    %3745 = vmatpush1.msra.mxu0 %v3414
    %3746 = vmatprep.subr.mxu0 0.0
    %3747 = vmatpush1.msra.mxu0 %v3413
    %3748 = vmatprep.subr.mxu0 0.0
    %3749 = vmatpush2.msra.mxu0 0.0
    %3750 = vmatprep.subr.mxu0 0.0
    %3751 = vmatpush2.msra.mxu0 0.0
    %3752 = vmatprep.subr.mxu0 0.0
    %3753 = vmatpush2.msra.mxu0 0.0
    %3754 = vmatprep.subr.mxu0 0.0
    %3755 = vmatpush2.msra.mxu0 0.0
    %3756 = vmatprep.subr.mxu0 0.0
    %3757 = vmatpush2.msra.mxu0 0.0
    %3758 = vmatprep.subr.mxu0 0.0
    %3759 = vmatpush2.msra.mxu0 0.0
    %3760 = vmatprep.subr.mxu0 0.0
    %3761 = vmatpush2.msra.mxu0 0.0
    %3762 = vmatprep.subr.mxu0 0.0
    %3763 = vmatpush2.msra.mxu0 0.0
    %3764 = vmatprep.subr.mxu0 0.0
    %3765 = vmatpush2.msra.mxu0 0.0
    %3766 = vmatprep.subr.mxu0 0.0
    %3767 = vmatpush2.msra.mxu0 0.0
    %3768 = vmatprep.subr.mxu0 0.0
    %3769 = vmatpush2.msra.mxu0 0.0
    %3770 = vmatprep.subr.mxu0 0.0
    %3771 = vmatpush2.msra.mxu0 0.0
    %3772 = vmatprep.subr.mxu0 0.0
    %3773 = vmatpush2.msra.mxu0 0.0
    %3774 = vmatprep.subr.mxu0 0.0
    %3775 = vmatpush2.msra.mxu0 0.0
    %3776 = vmatprep.subr.mxu0 0.0
    %3777 = vmatpush2.msra.mxu0 0.0
    %3778 = vmatprep.subr.mxu0 0.0
    %3779 = vmatpush2.msra.mxu0 0.0
    %3780 = vmatprep.mubr.f32.mxu0 0.0
    %3781 = vmatmul.mubr.f32.gmra.mxu0 %v3714
    %v3782 = vpop.f32.mrf.mxu0
    %v3783 = vadd.f32 0.0, %v3782
    %v3784 = vpop.f32.mrf.mxu0
    %3785 = vdwg.mxu0
    %v3787 = vsel %vm2123, %v3256, 0
    %3789 = vmatprep.subr.mxu0 0.0
    %3790 = vmatpush1.msra.mxu0 0.0
    %3791 = vmatprep.subr.mxu0 0.0
    %3792 = vmatpush1.msra.mxu0 0.0
    %3793 = vmatprep.subr.mxu0 0.0
    %3794 = vmatpush1.msra.mxu0 0.0
    %3795 = vmatprep.subr.mxu0 0.0
    %3796 = vmatpush1.msra.mxu0 0.0
    %3797 = vmatprep.subr.mxu0 0.0
    %3798 = vmatpush1.msra.mxu0 0.0
    %3799 = vmatprep.subr.mxu0 0.0
    %3800 = vmatpush1.msra.mxu0 0.0
    %3801 = vmatprep.subr.mxu0 0.0
    %3802 = vmatpush1.msra.mxu0 0.0
    %3803 = vmatprep.subr.mxu0 0.0
    %3804 = vmatpush1.msra.mxu0 0.0
    %3805 = vmatprep.subr.mxu0 0.0
    %3806 = vmatpush1.msra.mxu0 0.0
    %3807 = vmatprep.subr.mxu0 0.0
    %3808 = vmatpush1.msra.mxu0 0.0
    %3809 = vmatprep.subr.mxu0 0.0
    %3810 = vmatpush1.msra.mxu0 0.0
    %3811 = vmatprep.subr.mxu0 0.0
    %3812 = vmatpush1.msra.mxu0 0.0
    %3813 = vmatprep.subr.mxu0 0.0
    %3814 = vmatpush1.msra.mxu0 0.0
    %3815 = vmatprep.subr.mxu0 0.0
    %3816 = vmatpush1.msra.mxu0 0.0
    %3817 = vmatprep.subr.mxu0 0.0
    %3818 = vmatpush1.msra.mxu0 %v3416
    %3819 = vmatprep.subr.mxu0 0.0
    %3820 = vmatpush1.msra.mxu0 %v3415
    %3821 = vmatprep.subr.mxu0 0.0
    %3822 = vmatpush2.msra.mxu0 0.0
    %3823 = vmatprep.subr.mxu0 0.0
    %3824 = vmatpush2.msra.mxu0 0.0
    %3825 = vmatprep.subr.mxu0 0.0
    %3826 = vmatpush2.msra.mxu0 0.0
    %3827 = vmatprep.subr.mxu0 0.0
    %3828 = vmatpush2.msra.mxu0 0.0
    %3829 = vmatprep.subr.mxu0 0.0
    %3830 = vmatpush2.msra.mxu0 0.0
    %3831 = vmatprep.subr.mxu0 0.0
    %3832 = vmatpush2.msra.mxu0 0.0
    %3833 = vmatprep.subr.mxu0 0.0
    %3834 = vmatpush2.msra.mxu0 0.0
    %3835 = vmatprep.subr.mxu0 0.0
    %3836 = vmatpush2.msra.mxu0 0.0
    %3837 = vmatprep.subr.mxu0 0.0
    %3838 = vmatpush2.msra.mxu0 0.0
    %3839 = vmatprep.subr.mxu0 0.0
    %3840 = vmatpush2.msra.mxu0 0.0
    %3841 = vmatprep.subr.mxu0 0.0
    %3842 = vmatpush2.msra.mxu0 0.0
    %3843 = vmatprep.subr.mxu0 0.0
    %3844 = vmatpush2.msra.mxu0 0.0
    %3845 = vmatprep.subr.mxu0 0.0
    %3846 = vmatpush2.msra.mxu0 0.0
    %3847 = vmatprep.subr.mxu0 0.0
    %3848 = vmatpush2.msra.mxu0 0.0
    %3849 = vmatprep.subr.mxu0 0.0
    %3850 = vmatpush2.msra.mxu0 0.0
    %3851 = vmatprep.subr.mxu0 0.0
    %3852 = vmatpush2.msra.mxu0 0.0
    %3853 = vmatprep.mubr.f32.mxu0 0.0
    %3854 = vmatmul.mubr.f32.gmra.mxu0 %v3787
    %v3855 = vpop.f32.mrf.mxu0
    %v3856 = vadd.f32 0.0, %v3855
    %v3857 = vpop.f32.mrf.mxu0
    %3858 = vdwg.mxu0
    %v3860 = vsel %vm2123, %v3329, 0
    %3862 = vmatprep.subr.mxu0 0.0
    %3863 = vmatpush1.msra.mxu0 0.0
    %3864 = vmatprep.subr.mxu0 0.0
    %3865 = vmatpush1.msra.mxu0 0.0
    %3866 = vmatprep.subr.mxu0 0.0
    %3867 = vmatpush1.msra.mxu0 0.0
    %3868 = vmatprep.subr.mxu0 0.0
    %3869 = vmatpush1.msra.mxu0 0.0
    %3870 = vmatprep.subr.mxu0 0.0
    %3871 = vmatpush1.msra.mxu0 0.0
    %3872 = vmatprep.subr.mxu0 0.0
    %3873 = vmatpush1.msra.mxu0 0.0
    %3874 = vmatprep.subr.mxu0 0.0
    %3875 = vmatpush1.msra.mxu0 0.0
    %3876 = vmatprep.subr.mxu0 0.0
    %3877 = vmatpush1.msra.mxu0 0.0
    %3878 = vmatprep.subr.mxu0 0.0
    %3879 = vmatpush1.msra.mxu0 0.0
    %3880 = vmatprep.subr.mxu0 0.0
    %3881 = vmatpush1.msra.mxu0 0.0
    %3882 = vmatprep.subr.mxu0 0.0
    %3883 = vmatpush1.msra.mxu0 0.0
    %3884 = vmatprep.subr.mxu0 0.0
    %3885 = vmatpush1.msra.mxu0 0.0
    %3886 = vmatprep.subr.mxu0 0.0
    %3887 = vmatpush1.msra.mxu0 0.0
    %3888 = vmatprep.subr.mxu0 0.0
    %3889 = vmatpush1.msra.mxu0 0.0
    %3890 = vmatprep.subr.mxu0 0.0
    %3891 = vmatpush1.msra.mxu0 %v3418
    %3892 = vmatprep.subr.mxu0 0.0
    %3893 = vmatpush1.msra.mxu0 %v3417
    %3894 = vmatprep.subr.mxu0 0.0
    %3895 = vmatpush2.msra.mxu0 0.0
    %3896 = vmatprep.subr.mxu0 0.0
    %3897 = vmatpush2.msra.mxu0 0.0
    %3898 = vmatprep.subr.mxu0 0.0
    %3899 = vmatpush2.msra.mxu0 0.0
    %3900 = vmatprep.subr.mxu0 0.0
    %3901 = vmatpush2.msra.mxu0 0.0
    %3902 = vmatprep.subr.mxu0 0.0
    %3903 = vmatpush2.msra.mxu0 0.0
    %3904 = vmatprep.subr.mxu0 0.0
    %3905 = vmatpush2.msra.mxu0 0.0
    %3906 = vmatprep.subr.mxu0 0.0
    %3907 = vmatpush2.msra.mxu0 0.0
    %3908 = vmatprep.subr.mxu0 0.0
    %3909 = vmatpush2.msra.mxu0 0.0
    %3910 = vmatprep.subr.mxu0 0.0
    %3911 = vmatpush2.msra.mxu0 0.0
    %3912 = vmatprep.subr.mxu0 0.0
    %3913 = vmatpush2.msra.mxu0 0.0
    %3914 = vmatprep.subr.mxu0 0.0
    %3915 = vmatpush2.msra.mxu0 0.0
    %3916 = vmatprep.subr.mxu0 0.0
    %3917 = vmatpush2.msra.mxu0 0.0
    %3918 = vmatprep.subr.mxu0 0.0
    %3919 = vmatpush2.msra.mxu0 0.0
    %3920 = vmatprep.subr.mxu0 0.0
    %3921 = vmatpush2.msra.mxu0 0.0
    %3922 = vmatprep.subr.mxu0 0.0
    %3923 = vmatpush2.msra.mxu0 0.0
    %3924 = vmatprep.subr.mxu0 0.0
    %3925 = vmatpush2.msra.mxu0 0.0
    %3926 = vmatprep.mubr.f32.mxu0 0.0
    %3927 = vmatmul.mubr.f32.gmra.mxu0 %v3860
    %v3928 = vpop.f32.mrf.mxu0
    %v3929 = vadd.f32 0.0, %v3928
    %v3930 = vpop.f32.mrf.mxu0
    %3931 = vdwg.mxu0
    %v3933 = vsel %vm2123, %v3402, 0
    %3935 = vmatprep.subr.mxu0 0.0
    %3936 = vmatpush1.msra.mxu0 0.0
    %3937 = vmatprep.subr.mxu0 0.0
    %3938 = vmatpush1.msra.mxu0 0.0
    %3939 = vmatprep.subr.mxu0 0.0
    %3940 = vmatpush1.msra.mxu0 0.0
    %3941 = vmatprep.subr.mxu0 0.0
    %3942 = vmatpush1.msra.mxu0 0.0
    %3943 = vmatprep.subr.mxu0 0.0
    %3944 = vmatpush1.msra.mxu0 0.0
    %3945 = vmatprep.subr.mxu0 0.0
    %3946 = vmatpush1.msra.mxu0 0.0
    %3947 = vmatprep.subr.mxu0 0.0
    %3948 = vmatpush1.msra.mxu0 0.0
    %3949 = vmatprep.subr.mxu0 0.0
    %3950 = vmatpush1.msra.mxu0 0.0
    %3951 = vmatprep.subr.mxu0 0.0
    %3952 = vmatpush1.msra.mxu0 0.0
    %3953 = vmatprep.subr.mxu0 0.0
    %3954 = vmatpush1.msra.mxu0 0.0
    %3955 = vmatprep.subr.mxu0 0.0
    %3956 = vmatpush1.msra.mxu0 0.0
    %3957 = vmatprep.subr.mxu0 0.0
    %3958 = vmatpush1.msra.mxu0 0.0
    %3959 = vmatprep.subr.mxu0 0.0
    %3960 = vmatpush1.msra.mxu0 0.0
    %3961 = vmatprep.subr.mxu0 0.0
    %3962 = vmatpush1.msra.mxu0 0.0
    %3963 = vmatprep.subr.mxu0 0.0
    %3964 = vmatpush1.msra.mxu0 %v3420
    %3965 = vmatprep.subr.mxu0 0.0
    %3966 = vmatpush1.msra.mxu0 %v3419
    %3967 = vmatprep.subr.mxu0 0.0
    %3968 = vmatpush2.msra.mxu0 0.0
    %3969 = vmatprep.subr.mxu0 0.0
    %3970 = vmatpush2.msra.mxu0 0.0
    %3971 = vmatprep.subr.mxu0 0.0
    %3972 = vmatpush2.msra.mxu0 0.0
    %3973 = vmatprep.subr.mxu0 0.0
    %3974 = vmatpush2.msra.mxu0 0.0
    %3975 = vmatprep.subr.mxu0 0.0
    %3976 = vmatpush2.msra.mxu0 0.0
    %3977 = vmatprep.subr.mxu0 0.0
    %3978 = vmatpush2.msra.mxu0 0.0
    %3979 = vmatprep.subr.mxu0 0.0
    %3980 = vmatpush2.msra.mxu0 0.0
    %3981 = vmatprep.subr.mxu0 0.0
    %3982 = vmatpush2.msra.mxu0 0.0
    %3983 = vmatprep.subr.mxu0 0.0
    %3984 = vmatpush2.msra.mxu0 0.0
    %3985 = vmatprep.subr.mxu0 0.0
    %3986 = vmatpush2.msra.mxu0 0.0
    %3987 = vmatprep.subr.mxu0 0.0
    %3988 = vmatpush2.msra.mxu0 0.0
    %3989 = vmatprep.subr.mxu0 0.0
    %3990 = vmatpush2.msra.mxu0 0.0
    %3991 = vmatprep.subr.mxu0 0.0
    %3992 = vmatpush2.msra.mxu0 0.0
    %3993 = vmatprep.subr.mxu0 0.0
    %3994 = vmatpush2.msra.mxu0 0.0
    %3995 = vmatprep.subr.mxu0 0.0
    %3996 = vmatpush2.msra.mxu0 0.0
    %3997 = vmatprep.subr.mxu0 0.0
    %3998 = vmatpush2.msra.mxu0 0.0
    %3999 = vmatprep.mubr.f32.mxu0 0.0
    %4000 = vmatmul.mubr.f32.gmra.mxu0 %v3933
    %v4001 = vpop.f32.mrf.mxu0
    %v4002 = vadd.f32 0.0, %v4001
    %v4003 = vpop.f32.mrf.mxu0
    %4004 = vdwg.mxu0
    %v4005 = vadd.f32 %v3491, %v3564
    %v4006 = vadd.f32 %v3783, %v3856
    %v4007 = vadd.f32 %v4005, %v3637
    %v4008 = vadd.f32 %v4006, %v3929
    %v4009 = vadd.f32 %v4007, %v3710
    %v4010 = vadd.f32 %v4008, %v4002
    %v4011 = vld [vmem:[%s11] sm:$0x1]
    %v4013 = vlaneseq
    %v4014 = vshrl.u32 %v4013, 7
    %v4015 = vsub.s32 0, %v4014
    %v4016 = vrot.slane %v4011, %v4015
    %v4018 = vadd.f32 %v4009, %v4016
    %v4019 = vadd.f32 %v4010, %v4016
    %v4020 = vmul.f32 %v4018, 0.5
    %v4021 = vmul.f32 %v4019, 0.5
    %v4022 = vmul.f32 %v4018, 0.70710677
    %v4023 = vmul.f32 %v4019, 0.70710677
    %v4024 = verf.f32.pop %v4022
    %v4025 = verf.f32.pop %v4023
    %v4026 = vadd.f32 %v4024, 1.0
    %v4027 = vadd.f32 %v4025, 1.0
    %v4028 = vmul.f32 %v4020, %v4026
    %v4029 = vmul.f32 %v4021, %v4027
    %v4030 = vadd.f32 %v42, %v4028
    %v4031 = vadd.f32 %v43, %v4029
    %v4032 = vmul.f32 %v4030, 0.70710677
    %v4033 = vmul.f32 %v4031, 0.70710677
    %v4034 = vsel %vm56, %v4032, %v4028
    %v4035 = vsel %vm56, %v4033, %v4029
    %vm4036 = vcmask 523264
    %4037 = vst.msk [vmem:[#allocation2] sm:$0xff] %vm4036, %v4034
    %4038 = vst.msk [vmem:[#allocation2 + $0x8] sm:$0xff] %vm4036, %v4035
    // Predicated region
    $region50: #{tpu_custom_call.1} parent=1 // pred_check
      _
    $region51: #{tpu_custom_call.1} parent=1 // pred_check_branch
      %4040 = sbr.rel (0) target = $region53
    $region52: #{tpu_custom_call.1} parent=1 // pred_region
      %s4042 = ssub.s32 256, 256
      %4043 = vsyncadd [#allocation3], %s4042
      %s4044 = sshll.u32 [#allocation2], 4
      %s4045 = int_to_ptr.vmem [resolvable:$true] %s4044
      %4050 = dma.vmem_to_hbm [thread:$0]  %s4045, 256, %s12, [#allocation3], 128, 128, 8
    $region53: #{tpu_custom_call.1} parent=1 // pred_fallthru
      _
    // Predicated region
    $region54: #{tpu_custom_call.1} parent=1 // pred_check
      _
    $region55: #{tpu_custom_call.1} parent=1 // pred_check_branch
      %4052 = sbr.rel (0) target = $region57
    $region56: #{tpu_custom_call.1} parent=1 // pred_region
      %4053 = dma.done [#allocation3], 256
    $region57: #{tpu_custom_call.1} parent=1 // pred_fallthru
      _
    %4054 = vsyncpa [#allocation3], 1

</llo_original>
